<compile_context>
chip_gen: v7x
topology: tpu7x:2x2x1
jax: 0.10.0
libtpu: 0.0.40
codegen_flags: <defaults>
</compile_context>

<pallas_src>
import numpy as np
import jax
import jax.numpy as jnp
from jax.experimental import pallas as pl
from jax.experimental.pallas import tpu as pltpu

# ----------------------------------------------------------------------------
# Static layer geometry
# ----------------------------------------------------------------------------
SIZE = (16, 16)                      # size[0], size[1]
D_IN = SIZE[0] * SIZE[1]             # 256
LAYER_DIMS = [D_IN, 512, 256, 128, 64, 32, 16,   # encoder
              32, 64, 128, 256, 512, D_IN]        # decoder
NUM_LAYERS = len(LAYER_DIMS) - 1                  # 12
LEAKY_SLOPE = 0.01

# Lane-friendly padded widths (every layer width rounded up to >= 128 lanes).
PAD_DIMS = [max(d, 128) for d in LAYER_DIMS]

# Packed-weight layout: layer i occupies rows [ROW_OFF[i], ROW_OFF[i]+PAD_DIMS[i])
# of a (ROWS_TOTAL, W_COLS) buffer; true weights sit in the top-left corner of
# each slot, the rest is zero (exact w.r.t. the unpadded math).
W_COLS = max(PAD_DIMS)               # 512
ROW_OFF = []
_off = 0
for _i in range(NUM_LAYERS):
    ROW_OFF.append(_off)
    _off += PAD_DIMS[_i]
ROWS_TOTAL = _off                    # 2688 (all offsets are multiples of 128)

TILE_B = 128                         # batch tile (MXU M dimension)


# ----------------------------------------------------------------------------
# Kernel: one (TILE_B, 256) activation tile through all 12 layers.
# Weights/biases are fully VMEM-resident (constant index_map).
# ----------------------------------------------------------------------------
def _autoencoder_kernel(x_ref, w_ref, b_ref, out_ref):
    h = x_ref[...]  # (TILE_B, 256) f32
    for i in range(NUM_LAYERS):
        in_pad = PAD_DIMS[i]
        out_pad = PAD_DIMS[i + 1]
        w = w_ref[pl.ds(ROW_OFF[i], in_pad), pl.ds(0, out_pad)]   # bf16 (in_pad, out_pad)
        b = b_ref[pl.ds(i, 1), pl.ds(0, out_pad)]                 # f32  (1, out_pad)
        h = jnp.dot(h.astype(jnp.bfloat16), w,
                    preferred_element_type=jnp.float32) + b
        if i < NUM_LAYERS - 1:                                    # last layer is linear
            h = jnp.maximum(h, LEAKY_SLOPE * h)
    out_ref[...] = h.astype(out_ref.dtype)


# ----------------------------------------------------------------------------
# Parameter construction / packing
# ----------------------------------------------------------------------------
def make_params(key):
    """PyTorch-Linear-style init; weights stored as (in_features, out_features)."""
    params = []
    for i in range(NUM_LAYERS):
        fan_in, fan_out = LAYER_DIMS[i], LAYER_DIMS[i + 1]
        key, kw, kb = jax.random.split(key, 3)
        bound = 1.0 / np.sqrt(fan_in)
        w = jax.random.uniform(kw, (fan_in, fan_out), jnp.float32, -bound, bound)
        b = jax.random.uniform(kb, (fan_out,), jnp.float32, -bound, bound)
        params.append((w, b))
    return params


def pack_params(params):
    """Pack all weights into one bf16 buffer and all biases into one f32 buffer."""
    w_packed = jnp.zeros((ROWS_TOTAL, W_COLS), jnp.bfloat16)
    b_packed = jnp.zeros((NUM_LAYERS, W_COLS), jnp.float32)
    for i, (w, b) in enumerate(params):
        fi, fo = LAYER_DIMS[i], LAYER_DIMS[i + 1]
        w_packed = w_packed.at[ROW_OFF[i]:ROW_OFF[i] + fi, :fo].set(
            w.astype(jnp.bfloat16))
        b_packed = b_packed.at[i, :fo].set(b.reshape(-1).astype(jnp.float32))
    return w_packed, b_packed


# ----------------------------------------------------------------------------
# Wrapper
# ----------------------------------------------------------------------------
def autoencoder_forward(x, packed_params):
    """x: (H, W) single sample or (B, H, W) batch.

    Returns (1, H, W) for a single sample (matching the PyTorch module) or
    (B, 1, H, W) for a batch (the module applied independently per sample).
    """
    w_packed, b_packed = packed_params
    single = (x.ndim == 2)
    if single:
        x = x[None]
    B = x.shape[0]
    assert x.shape[1:] == SIZE, f"expected (*, {SIZE[0]}, {SIZE[1]}), got {x.shape}"

    x_flat = x.astype(jnp.float32).reshape(B, D_IN)
    b_pad = int(pl.cdiv(B, TILE_B)) * TILE_B
    if b_pad != B:
        x_flat = jnp.concatenate(
            [x_flat, jnp.zeros((b_pad - B, D_IN), jnp.float32)], axis=0)

    grid = (b_pad // TILE_B,)
    out = pl.pallas_call(
        _autoencoder_kernel,
        out_shape=jax.ShapeDtypeStruct((b_pad, D_IN), jnp.float32),
        grid=grid,
        in_specs=[
            pl.BlockSpec((TILE_B, D_IN), lambda i: (i, 0)),        # activations
            pl.BlockSpec((ROWS_TOTAL, W_COLS), lambda i: (0, 0)),  # packed weights (resident)
            pl.BlockSpec((NUM_LAYERS, W_COLS), lambda i: (0, 0)),  # packed biases (resident)
        ],
        out_specs=pl.BlockSpec((TILE_B, D_IN), lambda i: (i, 0)),
        compiler_params=pltpu.CompilerParams(
            dimension_semantics=("parallel",)),
    )(x_flat, w_packed, b_packed)

    out = out[:B].reshape(B, 1, SIZE[0], SIZE[1])  # decoder's view(-1, 16, 16) per sample
    if single:
        return out[0]
    return out


# ----------------------------------------------------------------------------
# Pure-JAX reference (same bf16 weight/activation rounding, f32 accumulation)
# ----------------------------------------------------------------------------
def _reference_forward(x_flat, params):
    h = x_flat.astype(jnp.float32)
    for i, (w, b) in enumerate(params):
        w32 = w.astype(jnp.bfloat16).astype(jnp.float32)
        h32 = h.astype(jnp.bfloat16).astype(jnp.float32)
        h = jnp.dot(h32, w32) + b.reshape(1, -1)
        if i < NUM_LAYERS - 1:
            h = jnp.maximum(h, LEAKY_SLOPE * h)
    return h


if __name__ == "__main__":
    key = jax.random.PRNGKey(0)
    key, kx = jax.random.split(key)

    B = 256                                   # 2 grid steps of TILE_B=128
    x = jax.random.normal(kx, (B,) + SIZE, jnp.float32)

    params = make_params(key)
    packed = pack_params(params)

    # Batched path
    y = autoencoder_forward(x, packed)
    y = jax.block_until_ready(y)
    assert y.shape == (B, 1, SIZE[0], SIZE[1]), y.shape

    y_ref = _reference_forward(x.reshape(B, D_IN), params).reshape(
        B, 1, SIZE[0], SIZE[1])
    assert jnp.allclose(y, y_ref, atol=1e-3, rtol=1e-3), "batched mismatch vs reference"

    # Single-sample path (exact PyTorch-module calling convention / output shape)
    y1 = autoencoder_forward(x[0], packed)
    y1 = jax.block_until_ready(y1)
    assert y1.shape == (1, SIZE[0], SIZE[1]), y1.shape
    assert jnp.allclose(y1, y_ref[0], atol=1e-3, rtol=1e-3), "single-sample mismatch"

    print("KERNEL_OK")
</pallas_src>

<mosaic_0001>
module attributes {stable_mosaic.version = 11 : i64} {
  func.func @_autoencoder_kernel(%arg0: i32, %arg1: memref<128x256xf32, #tpu.memory_space<vmem>>, %arg2: memref<2688x512xbf16, #tpu.memory_space<vmem>>, %arg3: memref<12x512xf32, #tpu.memory_space<vmem>>, %arg4: memref<128x256xf32, #tpu.memory_space<vmem>>) attributes {dimension_semantics = [#tpu.dimension_semantics<parallel>], iteration_bounds = array<i64: 2>, scalar_prefetch = 0 : i64, scratch_operands = 0 : i64, tpu.core_type = #tpu.core_type<tc>, window_params = [{transform_indices = @transform_0, window_bounds = array<i64: 128, 256>}, {pipeline_mode = #tpu.pipeline_mode<synchronous>, transform_indices = @transform_1, window_bounds = array<i64: 2688, 512>}, {pipeline_mode = #tpu.pipeline_mode<synchronous>, transform_indices = @transform_2, window_bounds = array<i64: 12, 512>}, {transform_indices = @transform_3, window_bounds = array<i64: 128, 256>}]} {
    %c0 = arith.constant 0 : index
    %c0_0 = arith.constant 0 : index
    %0 = vector.load %arg1[%c0, %c0_0] : memref<128x256xf32, #tpu.memory_space<vmem>>, vector<128x256xf32>
    %c0_1 = arith.constant 0 : index
    %c0_2 = arith.constant 0 : index
    %1 = vector.load %arg2[%c0_1, %c0_2] : memref<2688x512xbf16, #tpu.memory_space<vmem>>, vector<256x512xbf16>
    %c0_3 = arith.constant 0 : index
    %c0_4 = arith.constant 0 : index
    %2 = vector.load %arg3[%c0_3, %c0_4] : memref<12x512xf32, #tpu.memory_space<vmem>>, vector<1x512xf32>
    %3 = arith.truncf %0 : vector<128x256xf32> to vector<128x256xbf16>
    %cst = arith.constant dense<0.000000e+00> : vector<128x512xf32>
    %4 = tpu.matmul %3, %1, %cst {dimension_numbers = #tpu.dot_dimension_numbers<[1], [0], [0], [1], [0, 0, 1, 1], [], []>} : vector<128x256xbf16>, vector<256x512xbf16>, vector<128x512xf32> -> vector<128x512xf32>
    %5 = vector.broadcast %2 : vector<1x512xf32> to vector<128x512xf32>
    %6 = arith.addf %4, %5 : vector<128x512xf32>
    %cst_5 = arith.constant 0.00999999977 : f32
    %7 = vector.broadcast %cst_5 : f32 to vector<128x512xf32>
    %8 = arith.mulf %7, %6 : vector<128x512xf32>
    %9 = arith.maximumf %6, %8 : vector<128x512xf32>
    %c256 = arith.constant 256 : index
    %c0_6 = arith.constant 0 : index
    %10 = vector.load %arg2[%c256, %c0_6] : memref<2688x512xbf16, #tpu.memory_space<vmem>>, vector<512x256xbf16>
    %c1 = arith.constant 1 : index
    %c0_7 = arith.constant 0 : index
    %11 = vector.load %arg3[%c1, %c0_7] : memref<12x512xf32, #tpu.memory_space<vmem>>, vector<1x256xf32>
    %12 = arith.truncf %9 : vector<128x512xf32> to vector<128x512xbf16>
    %cst_8 = arith.constant dense<0.000000e+00> : vector<128x256xf32>
    %13 = tpu.matmul %12, %10, %cst_8 {dimension_numbers = #tpu.dot_dimension_numbers<[1], [0], [0], [1], [0, 0, 1, 1], [], []>} : vector<128x512xbf16>, vector<512x256xbf16>, vector<128x256xf32> -> vector<128x256xf32>
    %14 = vector.broadcast %11 : vector<1x256xf32> to vector<128x256xf32>
    %15 = arith.addf %13, %14 : vector<128x256xf32>
    %cst_9 = arith.constant 0.00999999977 : f32
    %16 = vector.broadcast %cst_9 : f32 to vector<128x256xf32>
    %17 = arith.mulf %16, %15 : vector<128x256xf32>
    %18 = arith.maximumf %15, %17 : vector<128x256xf32>
    %c768 = arith.constant 768 : index
    %c0_10 = arith.constant 0 : index
    %19 = vector.load %arg2[%c768, %c0_10] : memref<2688x512xbf16, #tpu.memory_space<vmem>>, vector<256x128xbf16>
    %c2 = arith.constant 2 : index
    %c0_11 = arith.constant 0 : index
    %20 = vector.load %arg3[%c2, %c0_11] : memref<12x512xf32, #tpu.memory_space<vmem>>, vector<1x128xf32>
    %21 = arith.truncf %18 : vector<128x256xf32> to vector<128x256xbf16>
    %cst_12 = arith.constant dense<0.000000e+00> : vector<128x128xf32>
    %22 = tpu.matmul %21, %19, %cst_12 {dimension_numbers = #tpu.dot_dimension_numbers<[1], [0], [0], [1], [0, 0, 1, 1], [], []>} : vector<128x256xbf16>, vector<256x128xbf16>, vector<128x128xf32> -> vector<128x128xf32>
    %23 = vector.broadcast %20 : vector<1x128xf32> to vector<128x128xf32>
    %24 = arith.addf %22, %23 : vector<128x128xf32>
    %cst_13 = arith.constant 0.00999999977 : f32
    %25 = vector.broadcast %cst_13 : f32 to vector<128x128xf32>
    %26 = arith.mulf %25, %24 : vector<128x128xf32>
    %27 = arith.maximumf %24, %26 : vector<128x128xf32>
    %c1024 = arith.constant 1024 : index
    %c0_14 = arith.constant 0 : index
    %28 = vector.load %arg2[%c1024, %c0_14] : memref<2688x512xbf16, #tpu.memory_space<vmem>>, vector<128x128xbf16>
    %c3 = arith.constant 3 : index
    %c0_15 = arith.constant 0 : index
    %29 = vector.load %arg3[%c3, %c0_15] : memref<12x512xf32, #tpu.memory_space<vmem>>, vector<1x128xf32>
    %30 = arith.truncf %27 : vector<128x128xf32> to vector<128x128xbf16>
    %cst_16 = arith.constant dense<0.000000e+00> : vector<128x128xf32>
    %31 = tpu.matmul %30, %28, %cst_16 {dimension_numbers = #tpu.dot_dimension_numbers<[1], [0], [0], [1], [0, 0, 1, 1], [], []>} : vector<128x128xbf16>, vector<128x128xbf16>, vector<128x128xf32> -> vector<128x128xf32>
    %32 = vector.broadcast %29 : vector<1x128xf32> to vector<128x128xf32>
    %33 = arith.addf %31, %32 : vector<128x128xf32>
    %cst_17 = arith.constant 0.00999999977 : f32
    %34 = vector.broadcast %cst_17 : f32 to vector<128x128xf32>
    %35 = arith.mulf %34, %33 : vector<128x128xf32>
    %36 = arith.maximumf %33, %35 : vector<128x128xf32>
    %c1152 = arith.constant 1152 : index
    %c0_18 = arith.constant 0 : index
    %37 = vector.load %arg2[%c1152, %c0_18] : memref<2688x512xbf16, #tpu.memory_space<vmem>>, vector<128x128xbf16>
    %c4 = arith.constant 4 : index
    %c0_19 = arith.constant 0 : index
    %38 = vector.load %arg3[%c4, %c0_19] : memref<12x512xf32, #tpu.memory_space<vmem>>, vector<1x128xf32>
    %39 = arith.truncf %36 : vector<128x128xf32> to vector<128x128xbf16>
    %cst_20 = arith.constant dense<0.000000e+00> : vector<128x128xf32>
    %40 = tpu.matmul %39, %37, %cst_20 {dimension_numbers = #tpu.dot_dimension_numbers<[1], [0], [0], [1], [0, 0, 1, 1], [], []>} : vector<128x128xbf16>, vector<128x128xbf16>, vector<128x128xf32> -> vector<128x128xf32>
    %41 = vector.broadcast %38 : vector<1x128xf32> to vector<128x128xf32>
    %42 = arith.addf %40, %41 : vector<128x128xf32>
    %cst_21 = arith.constant 0.00999999977 : f32
    %43 = vector.broadcast %cst_21 : f32 to vector<128x128xf32>
    %44 = arith.mulf %43, %42 : vector<128x128xf32>
    %45 = arith.maximumf %42, %44 : vector<128x128xf32>
    %c1280 = arith.constant 1280 : index
    %c0_22 = arith.constant 0 : index
    %46 = vector.load %arg2[%c1280, %c0_22] : memref<2688x512xbf16, #tpu.memory_space<vmem>>, vector<128x128xbf16>
    %c5 = arith.constant 5 : index
    %c0_23 = arith.constant 0 : index
    %47 = vector.load %arg3[%c5, %c0_23] : memref<12x512xf32, #tpu.memory_space<vmem>>, vector<1x128xf32>
    %48 = arith.truncf %45 : vector<128x128xf32> to vector<128x128xbf16>
    %cst_24 = arith.constant dense<0.000000e+00> : vector<128x128xf32>
    %49 = tpu.matmul %48, %46, %cst_24 {dimension_numbers = #tpu.dot_dimension_numbers<[1], [0], [0], [1], [0, 0, 1, 1], [], []>} : vector<128x128xbf16>, vector<128x128xbf16>, vector<128x128xf32> -> vector<128x128xf32>
    %50 = vector.broadcast %47 : vector<1x128xf32> to vector<128x128xf32>
    %51 = arith.addf %49, %50 : vector<128x128xf32>
    %cst_25 = arith.constant 0.00999999977 : f32
    %52 = vector.broadcast %cst_25 : f32 to vector<128x128xf32>
    %53 = arith.mulf %52, %51 : vector<128x128xf32>
    %54 = arith.maximumf %51, %53 : vector<128x128xf32>
    %c1408 = arith.constant 1408 : index
    %c0_26 = arith.constant 0 : index
    %55 = vector.load %arg2[%c1408, %c0_26] : memref<2688x512xbf16, #tpu.memory_space<vmem>>, vector<128x128xbf16>
    %c6 = arith.constant 6 : index
    %c0_27 = arith.constant 0 : index
    %56 = vector.load %arg3[%c6, %c0_27] : memref<12x512xf32, #tpu.memory_space<vmem>>, vector<1x128xf32>
    %57 = arith.truncf %54 : vector<128x128xf32> to vector<128x128xbf16>
    %cst_28 = arith.constant dense<0.000000e+00> : vector<128x128xf32>
    %58 = tpu.matmul %57, %55, %cst_28 {dimension_numbers = #tpu.dot_dimension_numbers<[1], [0], [0], [1], [0, 0, 1, 1], [], []>} : vector<128x128xbf16>, vector<128x128xbf16>, vector<128x128xf32> -> vector<128x128xf32>
    %59 = vector.broadcast %56 : vector<1x128xf32> to vector<128x128xf32>
    %60 = arith.addf %58, %59 : vector<128x128xf32>
    %cst_29 = arith.constant 0.00999999977 : f32
    %61 = vector.broadcast %cst_29 : f32 to vector<128x128xf32>
    %62 = arith.mulf %61, %60 : vector<128x128xf32>
    %63 = arith.maximumf %60, %62 : vector<128x128xf32>
    %c1536 = arith.constant 1536 : index
    %c0_30 = arith.constant 0 : index
    %64 = vector.load %arg2[%c1536, %c0_30] : memref<2688x512xbf16, #tpu.memory_space<vmem>>, vector<128x128xbf16>
    %c7 = arith.constant 7 : index
    %c0_31 = arith.constant 0 : index
    %65 = vector.load %arg3[%c7, %c0_31] : memref<12x512xf32, #tpu.memory_space<vmem>>, vector<1x128xf32>
    %66 = arith.truncf %63 : vector<128x128xf32> to vector<128x128xbf16>
    %cst_32 = arith.constant dense<0.000000e+00> : vector<128x128xf32>
    %67 = tpu.matmul %66, %64, %cst_32 {dimension_numbers = #tpu.dot_dimension_numbers<[1], [0], [0], [1], [0, 0, 1, 1], [], []>} : vector<128x128xbf16>, vector<128x128xbf16>, vector<128x128xf32> -> vector<128x128xf32>
    %68 = vector.broadcast %65 : vector<1x128xf32> to vector<128x128xf32>
    %69 = arith.addf %67, %68 : vector<128x128xf32>
    %cst_33 = arith.constant 0.00999999977 : f32
    %70 = vector.broadcast %cst_33 : f32 to vector<128x128xf32>
    %71 = arith.mulf %70, %69 : vector<128x128xf32>
    %72 = arith.maximumf %69, %71 : vector<128x128xf32>
    %c1664 = arith.constant 1664 : index
    %c0_34 = arith.constant 0 : index
    %73 = vector.load %arg2[%c1664, %c0_34] : memref<2688x512xbf16, #tpu.memory_space<vmem>>, vector<128x128xbf16>
    %c8 = arith.constant 8 : index
    %c0_35 = arith.constant 0 : index
    %74 = vector.load %arg3[%c8, %c0_35] : memref<12x512xf32, #tpu.memory_space<vmem>>, vector<1x128xf32>
    %75 = arith.truncf %72 : vector<128x128xf32> to vector<128x128xbf16>
    %cst_36 = arith.constant dense<0.000000e+00> : vector<128x128xf32>
    %76 = tpu.matmul %75, %73, %cst_36 {dimension_numbers = #tpu.dot_dimension_numbers<[1], [0], [0], [1], [0, 0, 1, 1], [], []>} : vector<128x128xbf16>, vector<128x128xbf16>, vector<128x128xf32> -> vector<128x128xf32>
    %77 = vector.broadcast %74 : vector<1x128xf32> to vector<128x128xf32>
    %78 = arith.addf %76, %77 : vector<128x128xf32>
    %cst_37 = arith.constant 0.00999999977 : f32
    %79 = vector.broadcast %cst_37 : f32 to vector<128x128xf32>
    %80 = arith.mulf %79, %78 : vector<128x128xf32>
    %81 = arith.maximumf %78, %80 : vector<128x128xf32>
    %c1792 = arith.constant 1792 : index
    %c0_38 = arith.constant 0 : index
    %82 = vector.load %arg2[%c1792, %c0_38] : memref<2688x512xbf16, #tpu.memory_space<vmem>>, vector<128x256xbf16>
    %c9 = arith.constant 9 : index
    %c0_39 = arith.constant 0 : index
    %83 = vector.load %arg3[%c9, %c0_39] : memref<12x512xf32, #tpu.memory_space<vmem>>, vector<1x256xf32>
    %84 = arith.truncf %81 : vector<128x128xf32> to vector<128x128xbf16>
    %cst_40 = arith.constant dense<0.000000e+00> : vector<128x256xf32>
    %85 = tpu.matmul %84, %82, %cst_40 {dimension_numbers = #tpu.dot_dimension_numbers<[1], [0], [0], [1], [0, 0, 1, 1], [], []>} : vector<128x128xbf16>, vector<128x256xbf16>, vector<128x256xf32> -> vector<128x256xf32>
    %86 = vector.broadcast %83 : vector<1x256xf32> to vector<128x256xf32>
    %87 = arith.addf %85, %86 : vector<128x256xf32>
    %cst_41 = arith.constant 0.00999999977 : f32
    %88 = vector.broadcast %cst_41 : f32 to vector<128x256xf32>
    %89 = arith.mulf %88, %87 : vector<128x256xf32>
    %90 = arith.maximumf %87, %89 : vector<128x256xf32>
    %c1920 = arith.constant 1920 : index
    %c0_42 = arith.constant 0 : index
    %91 = vector.load %arg2[%c1920, %c0_42] : memref<2688x512xbf16, #tpu.memory_space<vmem>>, vector<256x512xbf16>
    %c10 = arith.constant 10 : index
    %c0_43 = arith.constant 0 : index
    %92 = vector.load %arg3[%c10, %c0_43] : memref<12x512xf32, #tpu.memory_space<vmem>>, vector<1x512xf32>
    %93 = arith.truncf %90 : vector<128x256xf32> to vector<128x256xbf16>
    %cst_44 = arith.constant dense<0.000000e+00> : vector<128x512xf32>
    %94 = tpu.matmul %93, %91, %cst_44 {dimension_numbers = #tpu.dot_dimension_numbers<[1], [0], [0], [1], [0, 0, 1, 1], [], []>} : vector<128x256xbf16>, vector<256x512xbf16>, vector<128x512xf32> -> vector<128x512xf32>
    %95 = vector.broadcast %92 : vector<1x512xf32> to vector<128x512xf32>
    %96 = arith.addf %94, %95 : vector<128x512xf32>
    %cst_45 = arith.constant 0.00999999977 : f32
    %97 = vector.broadcast %cst_45 : f32 to vector<128x512xf32>
    %98 = arith.mulf %97, %96 : vector<128x512xf32>
    %99 = arith.maximumf %96, %98 : vector<128x512xf32>
    %c2176 = arith.constant 2176 : index
    %c0_46 = arith.constant 0 : index
    %100 = vector.load %arg2[%c2176, %c0_46] : memref<2688x512xbf16, #tpu.memory_space<vmem>>, vector<512x256xbf16>
    %c11 = arith.constant 11 : index
    %c0_47 = arith.constant 0 : index
    %101 = vector.load %arg3[%c11, %c0_47] : memref<12x512xf32, #tpu.memory_space<vmem>>, vector<1x256xf32>
    %102 = arith.truncf %99 : vector<128x512xf32> to vector<128x512xbf16>
    %cst_48 = arith.constant dense<0.000000e+00> : vector<128x256xf32>
    %103 = tpu.matmul %102, %100, %cst_48 {dimension_numbers = #tpu.dot_dimension_numbers<[1], [0], [0], [1], [0, 0, 1, 1], [], []>} : vector<128x512xbf16>, vector<512x256xbf16>, vector<128x256xf32> -> vector<128x256xf32>
    %104 = vector.broadcast %101 : vector<1x256xf32> to vector<128x256xf32>
    %105 = arith.addf %103, %104 : vector<128x256xf32>
    %c0_49 = arith.constant 0 : index
    %c0_50 = arith.constant 0 : index
    %106 = vector.load %arg4[%c0_49, %c0_50] : memref<128x256xf32, #tpu.memory_space<vmem>>, vector<128x256xf32>
    tpu.vector_store %arg4[%c0_49, %c0_50], %105 {strides = array<i32>} : memref<128x256xf32, #tpu.memory_space<vmem>>, vector<128x256xf32>,
    return
  }
  func.func @transform_0(%arg0: i32) -> (i32, i32) {
    %c0_i32 = arith.constant 0 : i32
    %c0_i32_0 = arith.constant 0 : i32
    return %arg0, %c0_i32 : i32, i32
  }
  func.func @transform_1(%arg0: i32) -> (i32, i32) {
    %c0_i32 = arith.constant 0 : i32
    %c0_i32_0 = arith.constant 0 : i32
    %c0_i32_1 = arith.constant 0 : i32
    return %c0_i32, %c0_i32_0 : i32, i32
  }
  func.func @transform_2(%arg0: i32) -> (i32, i32) {
    %c0_i32 = arith.constant 0 : i32
    %c0_i32_0 = arith.constant 0 : i32
    %c0_i32_1 = arith.constant 0 : i32
    return %c0_i32, %c0_i32_0 : i32, i32
  }
  func.func @transform_3(%arg0: i32) -> (i32, i32) {
    %c0_i32 = arith.constant 0 : i32
    %c0_i32_0 = arith.constant 0 : i32
    return %arg0, %c0_i32 : i32, i32
  }
}

</mosaic_0001>

<llo_original>
// kernel: tpu_custom_call.1
$region0: #{tpu_custom_call.1}
  #allocation0 [shape = 'u32[]', space=smem, size = 0x4, offset = 0x4, fixed_abs, tag = 'smem constant byte address 0x4 - core index']
  #allocation1 [shape = 'u32[144,128]{1,0:T(1,128)}', space=vmem, size = 0x12000, scoped, tag = 'internal scratch']
  %s0 = inlined_call_operand.hbm [shape: f32[256,256], index: 0, kind: input, shape index: {}]
  %s1 = inlined_call_operand.hbm [shape: bf16[2688,512], index: 1, kind: input, shape index: {}]
  %s2 = inlined_call_operand.hbm [shape: f32[12,512], index: 2, kind: input, shape index: {}]
  %s3 = inlined_call_operand.hbm [shape: f32[256,256], index: 3, kind: output, shape index: {}]
  %s4 = sld [smem:[#allocation0]]
  $region57: #{tpu_custom_call.1} parent=0
    _
  %s6 = ssub.s32 1, %s4
  %s7 = scalar_select 0, %s6, %s4
  $region1: #{tpu_custom_call.1} parent=0
    #allocation2 [shape = 'u8[262144]{0}', space=vmem, size = 0x40000, scoped, tag = 'input window, operand 0']
    #allocation3 [shape = 's32[2]{0}', space=sflag, size = 0x8, scoped, tag = 'scoped memory for tpu_custom_call.1']
    #allocation4 [shape = 's32[2]{0}', space=sflag, size = 0x8, scoped, tag = 'scoped memory for tpu_custom_call.1']
    #allocation5 [shape = 'u8[2752512]{0}', space=vmem, size = 0x2a0000, scoped, tag = 'input window, operand 1, single buffered']
    #allocation6 [shape = 's32[1]{0}', space=sflag, size = 0x4, scoped, tag = 'scoped memory for tpu_custom_call.1']
    #allocation7 [shape = 'u8[32768]{0}', space=vmem, size = 0x8000, scoped, tag = 'input window, operand 2, single buffered']
    #allocation8 [shape = 'u8[262144]{0}', space=vmem, size = 0x40000, scoped, tag = 'output window, operand 0']
    %8 = vsyncpa [#allocation3], 0
    %s9 = scalar_lea.sflag [#allocation3], 1
    %10 = vsyncpa %s9, 0
    %11 = vsyncpa [#allocation6], 0
    %12 = vsyncpa [#allocation4], 0
    %s13 = scalar_lea.sflag [#allocation4], 1
    %14 = vsyncpa %s13, 0
    loop: start=0, step=1, limit=4
    $region2: #{tpu_custom_call.1} parent=1 // loop_pre_header
      _
    $region3: #{tpu_custom_call.1} parent=1 // loop_header
      %s16 = sphi 0, %s20
      %p17 = scmp.ge.s32.totalorder %s16, 4
      %s26 = sphi 0, %s28
      %s29 = sphi 0, %s26
      %s30 = sphi 0, %s29
      %s46 = sphi 0, %s30
      %s50 = sphi 0, %s50
      %s52 = sphi 0, %s50
      %s53 = sphi 0, %s52
      %s67 = sphi 0, %s53
      %s71 = sphi 0, %s71
      %s73 = sphi 0, %s71
      %s74 = sphi 0, %s73
      %s88 = sphi 0, %s74
      %s94 = sphi 0, %s96
      %s97 = sphi 0, %s94
      %s98 = sphi 0, %s97
      %s114 = sphi 0, %s98
    $region4: #{tpu_custom_call.1} parent=1 // loop_header_branch
      %19 = sbr.rel (%p17) target = $region8
    $region5: #{tpu_custom_call.1} parent=1 // loop_body
      %s21 = ssub.s32 %s16, 1
      %s22 = ssub.s32 %s16, 2
      %s23 = sadd.s32 %s16, 1
      %s24 = ssub.s32 %s16, %s23
      %p25 = scmp.eq.s32.totalorder %s24, 0
      %s27 = sadd.s32 %s26, 1
      %s28 = scalar_select %p25, %s26, %s27
      %p31 = pneg %p25
      %p32 = scmp.eq.s32.totalorder %s16, 1
      %p33 = por %p31, %p32
      %p34 = scmp.ne.s32.totalorder %s26, %s29
      %p35 = scmp.eq.s32.totalorder %s16, 0
      %p36 = por %p34, %p35
      %p37 = scmp.ne.s32.totalorder %s26, %s29
      %p38 = scmp.eq.s32.totalorder %s21, 1
      %p39 = por %p37, %p38
      %p40 = scmp.ne.s32.totalorder %s29, %s30
      %p41 = scmp.eq.s32.totalorder %s21, 0
      %p42 = por %p40, %p41
      %p43 = scmp.ne.s32.totalorder %s29, %s30
      %p44 = scmp.eq.s32.totalorder %s22, 1
      %p45 = por %p43, %p44
      %p47 = scmp.ne.s32.totalorder %s30, %s46
      %p48 = scmp.eq.s32.totalorder %s22, 0
      %p49 = por %p47, %p48
      %s51 = sadd.s32 %s50, 1
      %p54 = scmp.eq.s32.totalorder %s16, 1
      %p55 = scmp.ne.s32.totalorder %s50, %s52
      %p56 = scmp.eq.s32.totalorder %s16, 0
      %p57 = por %p55, %p56
      %p58 = scmp.ne.s32.totalorder %s50, %s52
      %p59 = scmp.eq.s32.totalorder %s21, 1
      %p60 = por %p58, %p59
      %p61 = scmp.ne.s32.totalorder %s52, %s53
      %p62 = scmp.eq.s32.totalorder %s21, 0
      %p63 = por %p61, %p62
      %p64 = scmp.ne.s32.totalorder %s52, %s53
      %p65 = scmp.eq.s32.totalorder %s22, 1
      %p66 = por %p64, %p65
      %p68 = scmp.ne.s32.totalorder %s53, %s67
      %p69 = scmp.eq.s32.totalorder %s22, 0
      %p70 = por %p68, %p69
      %s72 = sadd.s32 %s71, 1
      %p75 = scmp.eq.s32.totalorder %s16, 1
      %p76 = scmp.ne.s32.totalorder %s71, %s73
      %p77 = scmp.eq.s32.totalorder %s16, 0
      %p78 = por %p76, %p77
      %p79 = scmp.ne.s32.totalorder %s71, %s73
      %p80 = scmp.eq.s32.totalorder %s21, 1
      %p81 = por %p79, %p80
      %p82 = scmp.ne.s32.totalorder %s73, %s74
      %p83 = scmp.eq.s32.totalorder %s21, 0
      %p84 = por %p82, %p83
      %p85 = scmp.ne.s32.totalorder %s73, %s74
      %p86 = scmp.eq.s32.totalorder %s22, 1
      %p87 = por %p85, %p86
      %p89 = scmp.ne.s32.totalorder %s74, %s88
      %p90 = scmp.eq.s32.totalorder %s22, 0
      %p91 = por %p89, %p90
      %s92 = ssub.s32 %s16, %s23
      %p93 = scmp.eq.s32.totalorder %s92, 0
      %s95 = sadd.s32 %s94, 1
      %s96 = scalar_select %p93, %s94, %s95
      %p99 = pneg %p93
      %p100 = scmp.eq.s32.totalorder %s16, 1
      %p101 = por %p99, %p100
      %p102 = scmp.ne.s32.totalorder %s94, %s97
      %p103 = scmp.eq.s32.totalorder %s16, 0
      %p104 = por %p102, %p103
      %p105 = scmp.ne.s32.totalorder %s94, %s97
      %p106 = scmp.eq.s32.totalorder %s21, 1
      %p107 = por %p105, %p106
      %p108 = scmp.ne.s32.totalorder %s97, %s98
      %p109 = scmp.eq.s32.totalorder %s21, 0
      %p110 = por %p108, %p109
      %p111 = scmp.ne.s32.totalorder %s97, %s98
      %p112 = scmp.eq.s32.totalorder %s22, 1
      %p113 = por %p111, %p112
      %p115 = scmp.ne.s32.totalorder %s98, %s114
      %p116 = scmp.eq.s32.totalorder %s22, 0
      %p117 = por %p115, %p116
      %p118 = scmp.le.s32.totalorder 1, %s16
      %p119 = scmp.lt.s32.totalorder %s16, 3
      %p120 = pnand %p118, %p119
      %p121 = pneg %p120
      // Predicated region
      $region9: #{tpu_custom_call.1} parent=5 // pred_check
        _
      $region10: #{tpu_custom_call.1} parent=5 // pred_check_branch
        %123 = sbr.rel (%p120) target = $region12
      $region11: #{tpu_custom_call.1} parent=5 // pred_region
        %s124 = ssub.s32 %s16, 1
        // Predicated region
        $region13: #{tpu_custom_call.1} parent=11 // pred_check
          %p125 = pneg %p63
        $region14: #{tpu_custom_call.1} parent=11 // pred_check_branch
          %127 = sbr.rel (%p125) target = $region16
        $region15: #{tpu_custom_call.1} parent=11 // pred_region
          %s129 = ssub.s32 86016, 86016
          %130 = vsyncadd [#allocation6], %s129
          %s131 = sshll.u32 [#allocation5], 4
          %s132 = int_to_ptr.vmem [resolvable:$true] %s131
          %137 = dma.hbm_to_vmem [thread:$0]  %s1, 86016, %s132, [#allocation6], 256, 256, 16
        $region16: #{tpu_custom_call.1} parent=11 // pred_fallthru
          _
        // Predicated region
        $region17: #{tpu_custom_call.1} parent=11 // pred_check
          %p138 = pneg %p84
        $region18: #{tpu_custom_call.1} parent=11 // pred_check_branch
          %140 = sbr.rel (%p138) target = $region20
        $region19: #{tpu_custom_call.1} parent=11 // pred_region
          %s142 = ssub.s32 1024, 1024
          %143 = vsyncadd [#allocation6], %s142
          %s144 = sshll.u32 [#allocation7], 4
          %s145 = int_to_ptr.vmem [resolvable:$true] %s144
          %150 = dma.hbm_to_vmem [thread:$0]  %s2, 1024, %s145, [#allocation6], 512, 512, 32
        $region20: #{tpu_custom_call.1} parent=11 // pred_fallthru
          _
      $region12: #{tpu_custom_call.1} parent=5 // pred_fallthru
        _
      %p151 = scmp.lt.s32.totalorder %s16, 2
      // Predicated region
      $region21: #{tpu_custom_call.1} parent=5 // pred_check
        %p152 = pneg %p151
      $region22: #{tpu_custom_call.1} parent=5 // pred_check_branch
        %154 = sbr.rel (%p152) target = $region24
      $region23: #{tpu_custom_call.1} parent=5 // pred_region
        // Predicated region
        $region25: #{tpu_custom_call.1} parent=23 // pred_check
          %p155 = pneg %p36
        $region26: #{tpu_custom_call.1} parent=23 // pred_check_branch
          %157 = sbr.rel (%p155) target = $region28
        $region27: #{tpu_custom_call.1} parent=23 // pred_region
          %s158 = sand.u32 %s26, 1
          %s159 = scalar_lea.sflag [#allocation3], %s158
          %s160 = sand.u32 %s26, 1
          %s161 = smul.addr %s160, 256
          %s162 = scalar_lea.vmem [#allocation2], %s161
          %s163 = smul.u32 16, %s16
          %s165 = ssub.s32 4096, 4096
          %166 = vsyncadd %s159, %s165
          %s167 = smul.addr %s163, 2
          %s168 = smul.addr %s167, 128
          %s169 = scalar_lea.hbm %s0, %s168
          %s170 = sshll.u32 %s162, 4
          %s171 = int_to_ptr.vmem [resolvable:$true] %s170
          %176 = dma.hbm_to_vmem [thread:$0]  %s169, 4096, %s171, %s159, 256, 256, 16
        $region28: #{tpu_custom_call.1} parent=23 // pred_fallthru
          _
      $region24: #{tpu_custom_call.1} parent=5 // pred_fallthru
        _
      %p177 = scmp.le.s32.totalorder 1, %s16
      %p178 = scmp.lt.s32.totalorder %s16, 3
      %p179 = pnand %p177, %p178
      %p180 = pneg %p179
      // Predicated region
      $region29: #{tpu_custom_call.1} parent=5 // pred_check
        _
      $region30: #{tpu_custom_call.1} parent=5 // pred_check_branch
        %182 = sbr.rel (%p179) target = $region32
      $region31: #{tpu_custom_call.1} parent=5 // pred_region
        %s183 = ssub.s32 %s16, 1
        %s184 = sand.u32 %s29, 1
        %s185 = scalar_lea.sflag [#allocation3], %s184
        %s186 = sand.u32 %s29, 1
        %s187 = smul.addr %s186, 256
        %s188 = scalar_lea.vmem [#allocation2], %s187
        // Predicated region
        $region33: #{tpu_custom_call.1} parent=31 // pred_check
          %p189 = pneg %p42
        $region34: #{tpu_custom_call.1} parent=31 // pred_check_branch
          %191 = sbr.rel (%p189) target = $region36
        $region35: #{tpu_custom_call.1} parent=31 // pred_region
          %192 = dma.done %s185, 4096
        $region36: #{tpu_custom_call.1} parent=31 // pred_fallthru
          _
        // Predicated region
        $region37: #{tpu_custom_call.1} parent=31 // pred_check
          %p193 = pneg %p63
        $region38: #{tpu_custom_call.1} parent=31 // pred_check_branch
          %195 = sbr.rel (%p193) target = $region40
        $region39: #{tpu_custom_call.1} parent=31 // pred_region
          %196 = dma.done [#allocation6], 86016
        $region40: #{tpu_custom_call.1} parent=31 // pred_fallthru
          _
        // Predicated region
        $region41: #{tpu_custom_call.1} parent=31 // pred_check
          %p197 = pneg %p84
        $region42: #{tpu_custom_call.1} parent=31 // pred_check_branch
          %199 = sbr.rel (%p197) target = $region44
        $region43: #{tpu_custom_call.1} parent=31 // pred_region
          %200 = dma.done [#allocation6], 1024
        $region44: #{tpu_custom_call.1} parent=31 // pred_fallthru
          _
        %s201 = sand.u32 %s29, 1
        %s202 = scalar_lea.sflag [#allocation3], %s201
        %s203 = sand.u32 %s29, 1
        %s204 = smul.addr %s203, 256
        %s205 = scalar_lea.vmem [#allocation2], %s204
        %p206 = pneg %p42
        %p207 = pneg %p39
        %p208 = pneg %p63
        %p209 = pneg %p60
        %p210 = pneg %p84
        %p211 = pneg %p81
        %p212 = pneg %p110
        %p213 = pneg %p107
        %s214 = sand.u32 %s97, 1
        %s215 = scalar_lea.sflag [#allocation4], %s214
        %s216 = sand.u32 %s97, 1
        %s217 = smul.addr %s216, 256
        %s218 = scalar_lea.vmem [#allocation8], %s217
        %s219 = smul.u32 16, %s21
        %s220 = smul.u32 16, %s21
        %v222 = vld [vmem:[%s188] sm:$0xff]
        %v223 = vld [vmem:[%s188 + $0x8] sm:$0xff]
        %v224 = vld [vmem:[%s188 + $0x10] sm:$0xff]
        %v225 = vld [vmem:[%s188 + $0x18] sm:$0xff]
        %v226 = vld [vmem:[%s188 + $0x20] sm:$0xff]
        %v227 = vld [vmem:[%s188 + $0x28] sm:$0xff]
        %v228 = vld [vmem:[%s188 + $0x30] sm:$0xff]
        %v229 = vld [vmem:[%s188 + $0x38] sm:$0xff]
        %v230 = vld [vmem:[%s188 + $0x40] sm:$0xff]
        %v231 = vld [vmem:[%s188 + $0x48] sm:$0xff]
        %v232 = vld [vmem:[%s188 + $0x50] sm:$0xff]
        %v233 = vld [vmem:[%s188 + $0x58] sm:$0xff]
        %v234 = vld [vmem:[%s188 + $0x60] sm:$0xff]
        %v235 = vld [vmem:[%s188 + $0x68] sm:$0xff]
        %v236 = vld [vmem:[%s188 + $0x70] sm:$0xff]
        %v237 = vld [vmem:[%s188 + $0x78] sm:$0xff]
        %v238 = vld [vmem:[%s188 + $0x80] sm:$0xff]
        %v239 = vld [vmem:[%s188 + $0x88] sm:$0xff]
        %v240 = vld [vmem:[%s188 + $0x90] sm:$0xff]
        %v241 = vld [vmem:[%s188 + $0x98] sm:$0xff]
        %v242 = vld [vmem:[%s188 + $0xa0] sm:$0xff]
        %v243 = vld [vmem:[%s188 + $0xa8] sm:$0xff]
        %v244 = vld [vmem:[%s188 + $0xb0] sm:$0xff]
        %v245 = vld [vmem:[%s188 + $0xb8] sm:$0xff]
        %v246 = vld [vmem:[%s188 + $0xc0] sm:$0xff]
        %v247 = vld [vmem:[%s188 + $0xc8] sm:$0xff]
        %v248 = vld [vmem:[%s188 + $0xd0] sm:$0xff]
        %v249 = vld [vmem:[%s188 + $0xd8] sm:$0xff]
        %v250 = vld [vmem:[%s188 + $0xe0] sm:$0xff]
        %v251 = vld [vmem:[%s188 + $0xe8] sm:$0xff]
        %v252 = vld [vmem:[%s188 + $0xf0] sm:$0xff]
        %v253 = vld [vmem:[%s188 + $0xf8] sm:$0xff]
        %v254 = vld [vmem:[#allocation5] sm:$0xff]
        %v255 = vld [vmem:[#allocation5 + $0x8] sm:$0xff]
        %v256 = vld [vmem:[#allocation5 + $0x10] sm:$0xff]
        %v257 = vld [vmem:[#allocation5 + $0x18] sm:$0xff]
        %v258 = vld [vmem:[#allocation5 + $0x20] sm:$0xff]
        %v259 = vld [vmem:[#allocation5 + $0x28] sm:$0xff]
        %v260 = vld [vmem:[#allocation5 + $0x30] sm:$0xff]
        %v261 = vld [vmem:[#allocation5 + $0x38] sm:$0xff]
        %v262 = vld [vmem:[#allocation5 + $0x40] sm:$0xff]
        %v263 = vld [vmem:[#allocation5 + $0x48] sm:$0xff]
        %v264 = vld [vmem:[#allocation5 + $0x50] sm:$0xff]
        %v265 = vld [vmem:[#allocation5 + $0x58] sm:$0xff]
        %v266 = vld [vmem:[#allocation5 + $0x60] sm:$0xff]
        %v267 = vld [vmem:[#allocation5 + $0x68] sm:$0xff]
        %v268 = vld [vmem:[#allocation5 + $0x70] sm:$0xff]
        %v269 = vld [vmem:[#allocation5 + $0x78] sm:$0xff]
        %v270 = vld [vmem:[#allocation5 + $0x80] sm:$0xff]
        %v271 = vld [vmem:[#allocation5 + $0x88] sm:$0xff]
        %v272 = vld [vmem:[#allocation5 + $0x90] sm:$0xff]
        %v273 = vld [vmem:[#allocation5 + $0x98] sm:$0xff]
        %v274 = vld [vmem:[#allocation5 + $0xa0] sm:$0xff]
        %v275 = vld [vmem:[#allocation5 + $0xa8] sm:$0xff]
        %v276 = vld [vmem:[#allocation5 + $0xb0] sm:$0xff]
        %v277 = vld [vmem:[#allocation5 + $0xb8] sm:$0xff]
        %v278 = vld [vmem:[#allocation5 + $0xc0] sm:$0xff]
        %v279 = vld [vmem:[#allocation5 + $0xc8] sm:$0xff]
        %v280 = vld [vmem:[#allocation5 + $0xd0] sm:$0xff]
        %v281 = vld [vmem:[#allocation5 + $0xd8] sm:$0xff]
        %v282 = vld [vmem:[#allocation5 + $0xe0] sm:$0xff]
        %v283 = vld [vmem:[#allocation5 + $0xe8] sm:$0xff]
        %v284 = vld [vmem:[#allocation5 + $0xf0] sm:$0xff]
        %v285 = vld [vmem:[#allocation5 + $0xf8] sm:$0xff]
        %v286 = vld [vmem:[#allocation5 + $0x100] sm:$0xff]
        %v287 = vld [vmem:[#allocation5 + $0x108] sm:$0xff]
        %v288 = vld [vmem:[#allocation5 + $0x110] sm:$0xff]
        %v289 = vld [vmem:[#allocation5 + $0x118] sm:$0xff]
        %v290 = vld [vmem:[#allocation5 + $0x120] sm:$0xff]
        %v291 = vld [vmem:[#allocation5 + $0x128] sm:$0xff]
        %v292 = vld [vmem:[#allocation5 + $0x130] sm:$0xff]
        %v293 = vld [vmem:[#allocation5 + $0x138] sm:$0xff]
        %v294 = vld [vmem:[#allocation5 + $0x140] sm:$0xff]
        %v295 = vld [vmem:[#allocation5 + $0x148] sm:$0xff]
        %v296 = vld [vmem:[#allocation5 + $0x150] sm:$0xff]
        %v297 = vld [vmem:[#allocation5 + $0x158] sm:$0xff]
        %v298 = vld [vmem:[#allocation5 + $0x160] sm:$0xff]
        %v299 = vld [vmem:[#allocation5 + $0x168] sm:$0xff]
        %v300 = vld [vmem:[#allocation5 + $0x170] sm:$0xff]
        %v301 = vld [vmem:[#allocation5 + $0x178] sm:$0xff]
        %v302 = vld [vmem:[#allocation5 + $0x180] sm:$0xff]
        %v303 = vld [vmem:[#allocation5 + $0x188] sm:$0xff]
        %v304 = vld [vmem:[#allocation5 + $0x190] sm:$0xff]
        %v305 = vld [vmem:[#allocation5 + $0x198] sm:$0xff]
        %v306 = vld [vmem:[#allocation5 + $0x1a0] sm:$0xff]
        %v307 = vld [vmem:[#allocation5 + $0x1a8] sm:$0xff]
        %v308 = vld [vmem:[#allocation5 + $0x1b0] sm:$0xff]
        %v309 = vld [vmem:[#allocation5 + $0x1b8] sm:$0xff]
        %v310 = vld [vmem:[#allocation5 + $0x1c0] sm:$0xff]
        %v311 = vld [vmem:[#allocation5 + $0x1c8] sm:$0xff]
        %v312 = vld [vmem:[#allocation5 + $0x1d0] sm:$0xff]
        %v313 = vld [vmem:[#allocation5 + $0x1d8] sm:$0xff]
        %v314 = vld [vmem:[#allocation5 + $0x1e0] sm:$0xff]
        %v315 = vld [vmem:[#allocation5 + $0x1e8] sm:$0xff]
        %v316 = vld [vmem:[#allocation5 + $0x1f0] sm:$0xff]
        %v317 = vld [vmem:[#allocation5 + $0x1f8] sm:$0xff]
        %v318 = vld [vmem:[#allocation7] ss:$8 sm:$0xf]
        %v319 = vpack.c.bf16 %v224, %v222
        %v320 = vpack.c.bf16 %v225, %v223
        %v321 = vpack.c.bf16 %v228, %v226
        %v322 = vpack.c.bf16 %v229, %v227
        %v323 = vpack.c.bf16 %v232, %v230
        %v324 = vpack.c.bf16 %v233, %v231
        %v325 = vpack.c.bf16 %v236, %v234
        %v326 = vpack.c.bf16 %v237, %v235
        %v327 = vpack.c.bf16 %v240, %v238
        %v328 = vpack.c.bf16 %v241, %v239
        %v329 = vpack.c.bf16 %v244, %v242
        %v330 = vpack.c.bf16 %v245, %v243
        %v331 = vpack.c.bf16 %v248, %v246
        %v332 = vpack.c.bf16 %v249, %v247
        %v333 = vpack.c.bf16 %v252, %v250
        %v334 = vpack.c.bf16 %v253, %v251
        %v336 = vlaneseq
        %v337 = vshrl.u32 %v336, 7
        %v338 = vsub.s32 0, %v337
        %v339 = vrot.slane %v318, %v338
        %v340 = vlaneseq
        %v341 = vshrl.u32 %v340, 7
        %v342 = vsub.s32 1, %v341
        %v343 = vrot.slane %v318, %v342
        %v344 = vlaneseq
        %v345 = vshrl.u32 %v344, 7
        %v346 = vsub.s32 2, %v345
        %v347 = vrot.slane %v318, %v346
        %v348 = vlaneseq
        %v349 = vshrl.u32 %v348, 7
        %v350 = vsub.s32 3, %v349
        %v351 = vrot.slane %v318, %v350
        %v420 = vunpack.c.l.b16 %v254
        %v421 = vunpack.c.h.b16 %v254
        %v422 = vunpack.c.l.b16 %v255
        %v423 = vunpack.c.h.b16 %v255
        %v424 = vunpack.c.l.b16 %v256
        %v425 = vunpack.c.h.b16 %v256
        %v426 = vunpack.c.l.b16 %v257
        %v427 = vunpack.c.h.b16 %v257
        %v428 = vunpack.c.l.b16 %v258
        %v429 = vunpack.c.h.b16 %v258
        %v430 = vunpack.c.l.b16 %v259
        %v431 = vunpack.c.h.b16 %v259
        %v432 = vunpack.c.l.b16 %v260
        %v433 = vunpack.c.h.b16 %v260
        %v434 = vunpack.c.l.b16 %v261
        %v435 = vunpack.c.h.b16 %v261
        %v436 = vunpack.c.l.b16 %v262
        %v437 = vunpack.c.h.b16 %v262
        %v438 = vunpack.c.l.b16 %v263
        %v439 = vunpack.c.h.b16 %v263
        %v440 = vunpack.c.l.b16 %v264
        %v441 = vunpack.c.h.b16 %v264
        %v442 = vunpack.c.l.b16 %v265
        %v443 = vunpack.c.h.b16 %v265
        %v444 = vunpack.c.l.b16 %v266
        %v445 = vunpack.c.h.b16 %v266
        %v446 = vunpack.c.l.b16 %v267
        %v447 = vunpack.c.h.b16 %v267
        %v448 = vunpack.c.l.b16 %v268
        %v449 = vunpack.c.h.b16 %v268
        %v450 = vunpack.c.l.b16 %v269
        %v451 = vunpack.c.h.b16 %v269
        %v452 = vunpack.c.l.b16 %v270
        %v453 = vunpack.c.h.b16 %v270
        %v454 = vunpack.c.l.b16 %v271
        %v455 = vunpack.c.h.b16 %v271
        %v456 = vunpack.c.l.b16 %v272
        %v457 = vunpack.c.h.b16 %v272
        %v458 = vunpack.c.l.b16 %v273
        %v459 = vunpack.c.h.b16 %v273
        %v460 = vunpack.c.l.b16 %v274
        %v461 = vunpack.c.h.b16 %v274
        %v462 = vunpack.c.l.b16 %v275
        %v463 = vunpack.c.h.b16 %v275
        %v464 = vunpack.c.l.b16 %v276
        %v465 = vunpack.c.h.b16 %v276
        %v466 = vunpack.c.l.b16 %v277
        %v467 = vunpack.c.h.b16 %v277
        %v468 = vunpack.c.l.b16 %v278
        %v469 = vunpack.c.h.b16 %v278
        %v470 = vunpack.c.l.b16 %v279
        %v471 = vunpack.c.h.b16 %v279
        %v472 = vunpack.c.l.b16 %v280
        %v473 = vunpack.c.h.b16 %v280
        %v474 = vunpack.c.l.b16 %v281
        %v475 = vunpack.c.h.b16 %v281
        %v476 = vunpack.c.l.b16 %v282
        %v477 = vunpack.c.h.b16 %v282
        %v478 = vunpack.c.l.b16 %v283
        %v479 = vunpack.c.h.b16 %v283
        %v480 = vunpack.c.l.b16 %v284
        %v481 = vunpack.c.h.b16 %v284
        %v482 = vunpack.c.l.b16 %v285
        %v483 = vunpack.c.h.b16 %v285
        %v484 = vunpack.c.l.b16 %v286
        %v485 = vunpack.c.h.b16 %v286
        %v486 = vunpack.c.l.b16 %v287
        %v487 = vunpack.c.h.b16 %v287
        %v488 = vunpack.c.l.b16 %v288
        %v489 = vunpack.c.h.b16 %v288
        %v490 = vunpack.c.l.b16 %v289
        %v491 = vunpack.c.h.b16 %v289
        %v492 = vunpack.c.l.b16 %v290
        %v493 = vunpack.c.h.b16 %v290
        %v494 = vunpack.c.l.b16 %v291
        %v495 = vunpack.c.h.b16 %v291
        %v496 = vunpack.c.l.b16 %v292
        %v497 = vunpack.c.h.b16 %v292
        %v498 = vunpack.c.l.b16 %v293
        %v499 = vunpack.c.h.b16 %v293
        %v500 = vunpack.c.l.b16 %v294
        %v501 = vunpack.c.h.b16 %v294
        %v502 = vunpack.c.l.b16 %v295
        %v503 = vunpack.c.h.b16 %v295
        %v504 = vunpack.c.l.b16 %v296
        %v505 = vunpack.c.h.b16 %v296
        %v506 = vunpack.c.l.b16 %v297
        %v507 = vunpack.c.h.b16 %v297
        %v508 = vunpack.c.l.b16 %v298
        %v509 = vunpack.c.h.b16 %v298
        %v510 = vunpack.c.l.b16 %v299
        %v511 = vunpack.c.h.b16 %v299
        %v512 = vunpack.c.l.b16 %v300
        %v513 = vunpack.c.h.b16 %v300
        %v514 = vunpack.c.l.b16 %v301
        %v515 = vunpack.c.h.b16 %v301
        %v516 = vunpack.c.l.b16 %v302
        %v517 = vunpack.c.h.b16 %v302
        %v518 = vunpack.c.l.b16 %v303
        %v519 = vunpack.c.h.b16 %v303
        %v520 = vunpack.c.l.b16 %v304
        %v521 = vunpack.c.h.b16 %v304
        %v522 = vunpack.c.l.b16 %v305
        %v523 = vunpack.c.h.b16 %v305
        %v524 = vunpack.c.l.b16 %v306
        %v525 = vunpack.c.h.b16 %v306
        %v526 = vunpack.c.l.b16 %v307
        %v527 = vunpack.c.h.b16 %v307
        %v528 = vunpack.c.l.b16 %v308
        %v529 = vunpack.c.h.b16 %v308
        %v530 = vunpack.c.l.b16 %v309
        %v531 = vunpack.c.h.b16 %v309
        %v532 = vunpack.c.l.b16 %v310
        %v533 = vunpack.c.h.b16 %v310
        %v534 = vunpack.c.l.b16 %v311
        %v535 = vunpack.c.h.b16 %v311
        %v536 = vunpack.c.l.b16 %v312
        %v537 = vunpack.c.h.b16 %v312
        %v538 = vunpack.c.l.b16 %v313
        %v539 = vunpack.c.h.b16 %v313
        %v540 = vunpack.c.l.b16 %v314
        %v541 = vunpack.c.h.b16 %v314
        %v542 = vunpack.c.l.b16 %v315
        %v543 = vunpack.c.h.b16 %v315
        %v544 = vunpack.c.l.b16 %v316
        %v545 = vunpack.c.h.b16 %v316
        %v546 = vunpack.c.l.b16 %v317
        %v547 = vunpack.c.h.b16 %v317
        %v548 = vpack.c.b16 %v424, %v420
        %v549 = vpack.c.b16 %v425, %v421
        %v550 = vpack.c.b16 %v426, %v422
        %v551 = vpack.c.b16 %v427, %v423
        %v552 = vpack.c.b16 %v432, %v428
        %v553 = vpack.c.b16 %v433, %v429
        %v554 = vpack.c.b16 %v434, %v430
        %v555 = vpack.c.b16 %v435, %v431
        %v556 = vpack.c.b16 %v440, %v436
        %v557 = vpack.c.b16 %v441, %v437
        %v558 = vpack.c.b16 %v442, %v438
        %v559 = vpack.c.b16 %v443, %v439
        %v560 = vpack.c.b16 %v448, %v444
        %v561 = vpack.c.b16 %v449, %v445
        %v562 = vpack.c.b16 %v450, %v446
        %v563 = vpack.c.b16 %v451, %v447
        %v564 = vpack.c.b16 %v456, %v452
        %v565 = vpack.c.b16 %v457, %v453
        %v566 = vpack.c.b16 %v458, %v454
        %v567 = vpack.c.b16 %v459, %v455
        %v568 = vpack.c.b16 %v464, %v460
        %v569 = vpack.c.b16 %v465, %v461
        %v570 = vpack.c.b16 %v466, %v462
        %v571 = vpack.c.b16 %v467, %v463
        %v572 = vpack.c.b16 %v472, %v468
        %v573 = vpack.c.b16 %v473, %v469
        %v574 = vpack.c.b16 %v474, %v470
        %v575 = vpack.c.b16 %v475, %v471
        %v576 = vpack.c.b16 %v480, %v476
        %v577 = vpack.c.b16 %v481, %v477
        %v578 = vpack.c.b16 %v482, %v478
        %v579 = vpack.c.b16 %v483, %v479
        %v580 = vpack.c.b16 %v488, %v484
        %v581 = vpack.c.b16 %v489, %v485
        %v582 = vpack.c.b16 %v490, %v486
        %v583 = vpack.c.b16 %v491, %v487
        %v584 = vpack.c.b16 %v496, %v492
        %v585 = vpack.c.b16 %v497, %v493
        %v586 = vpack.c.b16 %v498, %v494
        %v587 = vpack.c.b16 %v499, %v495
        %v588 = vpack.c.b16 %v504, %v500
        %v589 = vpack.c.b16 %v505, %v501
        %v590 = vpack.c.b16 %v506, %v502
        %v591 = vpack.c.b16 %v507, %v503
        %v592 = vpack.c.b16 %v512, %v508
        %v593 = vpack.c.b16 %v513, %v509
        %v594 = vpack.c.b16 %v514, %v510
        %v595 = vpack.c.b16 %v515, %v511
        %v596 = vpack.c.b16 %v520, %v516
        %v597 = vpack.c.b16 %v521, %v517
        %v598 = vpack.c.b16 %v522, %v518
        %v599 = vpack.c.b16 %v523, %v519
        %v600 = vpack.c.b16 %v528, %v524
        %v601 = vpack.c.b16 %v529, %v525
        %v602 = vpack.c.b16 %v530, %v526
        %v603 = vpack.c.b16 %v531, %v527
        %v604 = vpack.c.b16 %v536, %v532
        %v605 = vpack.c.b16 %v537, %v533
        %v606 = vpack.c.b16 %v538, %v534
        %v607 = vpack.c.b16 %v539, %v535
        %v608 = vpack.c.b16 %v544, %v540
        %v609 = vpack.c.b16 %v545, %v541
        %v610 = vpack.c.b16 %v546, %v542
        %v611 = vpack.c.b16 %v547, %v543
        %676 = vmatprep.subr.bf16.mxu0 %v549
        %677 = vmatpush1.bf16.msra.mxu0 %v548
        %678 = vmatprep.subr.bf16.mxu0 %v553
        %679 = vmatpush1.bf16.msra.mxu0 %v552
        %680 = vmatprep.subr.bf16.mxu0 %v557
        %681 = vmatpush1.bf16.msra.mxu0 %v556
        %682 = vmatprep.subr.bf16.mxu0 %v561
        %683 = vmatpush1.bf16.msra.mxu0 %v560
        %684 = vmatprep.subr.bf16.mxu0 %v565
        %685 = vmatpush1.bf16.msra.mxu0 %v564
        %686 = vmatprep.subr.bf16.mxu0 %v569
        %687 = vmatpush1.bf16.msra.mxu0 %v568
        %688 = vmatprep.subr.bf16.mxu0 %v573
        %689 = vmatpush1.bf16.msra.mxu0 %v572
        %690 = vmatprep.subr.bf16.mxu0 %v577
        %691 = vmatpush1.bf16.msra.mxu0 %v576
        %692 = vmatprep.subr.bf16.mxu0 %v581
        %693 = vmatpush1.bf16.msra.mxu0 %v580
        %694 = vmatprep.subr.bf16.mxu0 %v585
        %695 = vmatpush1.bf16.msra.mxu0 %v584
        %696 = vmatprep.subr.bf16.mxu0 %v589
        %697 = vmatpush1.bf16.msra.mxu0 %v588
        %698 = vmatprep.subr.bf16.mxu0 %v593
        %699 = vmatpush1.bf16.msra.mxu0 %v592
        %700 = vmatprep.subr.bf16.mxu0 %v597
        %701 = vmatpush1.bf16.msra.mxu0 %v596
        %702 = vmatprep.subr.bf16.mxu0 %v601
        %703 = vmatpush1.bf16.msra.mxu0 %v600
        %704 = vmatprep.subr.bf16.mxu0 %v605
        %705 = vmatpush1.bf16.msra.mxu0 %v604
        %706 = vmatprep.subr.bf16.mxu0 %v609
        %707 = vmatpush1.bf16.msra.mxu0 %v608
        %708 = vmatprep.mubr.bf16.mxu0 %v320
        %709 = vmatmul.mubr.bf16.gmra.mrb[0].mxu0 %v319
        %v710 = vpop.f32.mrb[0].mxu0
        %v711 = vadd.f32 %v339, %v710
        %v712 = vpop.f32.mrb[0].mxu0
        %v713 = vadd.f32 %v343, %v712
        %v714 = vpop.f32.mrb[0].mxu0
        %v715 = vadd.f32 %v339, %v714
        %v716 = vpop.f32.mrb[0].mxu0
        %v717 = vadd.f32 %v343, %v716
        %718 = vmatprep.mubr.bf16.mxu0 %v322
        %719 = vmatmul.mubr.bf16.gmra.mrb[0].mxu0 %v321
        %v720 = vpop.f32.mrb[0].mxu0
        %v721 = vadd.f32 %v339, %v720
        %v722 = vpop.f32.mrb[0].mxu0
        %v723 = vadd.f32 %v343, %v722
        %v724 = vpop.f32.mrb[0].mxu0
        %v725 = vadd.f32 %v339, %v724
        %v726 = vpop.f32.mrb[0].mxu0
        %v727 = vadd.f32 %v343, %v726
        %728 = vmatprep.mubr.bf16.mxu0 %v324
        %729 = vmatmul.mubr.bf16.gmra.mrb[0].mxu0 %v323
        %v730 = vpop.f32.mrb[0].mxu0
        %v731 = vadd.f32 %v339, %v730
        %v732 = vpop.f32.mrb[0].mxu0
        %v733 = vadd.f32 %v343, %v732
        %v734 = vpop.f32.mrb[0].mxu0
        %v735 = vadd.f32 %v339, %v734
        %v736 = vpop.f32.mrb[0].mxu0
        %v737 = vadd.f32 %v343, %v736
        %738 = vmatprep.mubr.bf16.mxu0 %v326
        %739 = vmatmul.mubr.bf16.gmra.mrb[0].mxu0 %v325
        %v740 = vpop.f32.mrb[0].mxu0
        %v741 = vadd.f32 %v339, %v740
        %v742 = vpop.f32.mrb[0].mxu0
        %v743 = vadd.f32 %v343, %v742
        %v744 = vpop.f32.mrb[0].mxu0
        %v745 = vadd.f32 %v339, %v744
        %v746 = vpop.f32.mrb[0].mxu0
        %v747 = vadd.f32 %v343, %v746
        %748 = vmatprep.mubr.bf16.mxu0 %v328
        %749 = vmatmul.mubr.bf16.gmra.mrb[0].mxu0 %v327
        %v750 = vpop.f32.mrb[0].mxu0
        %v751 = vadd.f32 %v339, %v750
        %v752 = vpop.f32.mrb[0].mxu0
        %v753 = vadd.f32 %v343, %v752
        %v754 = vpop.f32.mrb[0].mxu0
        %v755 = vadd.f32 %v339, %v754
        %v756 = vpop.f32.mrb[0].mxu0
        %v757 = vadd.f32 %v343, %v756
        %758 = vmatprep.mubr.bf16.mxu0 %v330
        %759 = vmatmul.mubr.bf16.gmra.mrb[0].mxu0 %v329
        %v760 = vpop.f32.mrb[0].mxu0
        %v761 = vadd.f32 %v339, %v760
        %v762 = vpop.f32.mrb[0].mxu0
        %v763 = vadd.f32 %v343, %v762
        %v764 = vpop.f32.mrb[0].mxu0
        %v765 = vadd.f32 %v339, %v764
        %v766 = vpop.f32.mrb[0].mxu0
        %v767 = vadd.f32 %v343, %v766
        %768 = vmatprep.mubr.bf16.mxu0 %v332
        %769 = vmatmul.mubr.bf16.gmra.mrb[0].mxu0 %v331
        %v770 = vpop.f32.mrb[0].mxu0
        %v771 = vadd.f32 %v339, %v770
        %v772 = vpop.f32.mrb[0].mxu0
        %v773 = vadd.f32 %v343, %v772
        %v774 = vpop.f32.mrb[0].mxu0
        %v775 = vadd.f32 %v339, %v774
        %v776 = vpop.f32.mrb[0].mxu0
        %v777 = vadd.f32 %v343, %v776
        %778 = vmatprep.mubr.bf16.mxu0 %v334
        %779 = vmatmul.mubr.bf16.gmra.mrb[0].mxu0 %v333
        %v780 = vpop.f32.mrb[0].mxu0
        %v781 = vadd.f32 %v339, %v780
        %v782 = vpop.f32.mrb[0].mxu0
        %v783 = vadd.f32 %v343, %v782
        %v784 = vpop.f32.mrb[0].mxu0
        %v785 = vadd.f32 %v339, %v784
        %v786 = vpop.f32.mrb[0].mxu0
        %v787 = vadd.f32 %v343, %v786
        %788 = vdwg.mxu0
        %789 = vmatprep.subr.bf16.mxu0 %v551
        %790 = vmatpush1.bf16.msra.mxu0 %v550
        %791 = vmatprep.subr.bf16.mxu0 %v555
        %792 = vmatpush1.bf16.msra.mxu0 %v554
        %793 = vmatprep.subr.bf16.mxu0 %v559
        %794 = vmatpush1.bf16.msra.mxu0 %v558
        %795 = vmatprep.subr.bf16.mxu0 %v563
        %796 = vmatpush1.bf16.msra.mxu0 %v562
        %797 = vmatprep.subr.bf16.mxu0 %v567
        %798 = vmatpush1.bf16.msra.mxu0 %v566
        %799 = vmatprep.subr.bf16.mxu0 %v571
        %800 = vmatpush1.bf16.msra.mxu0 %v570
        %801 = vmatprep.subr.bf16.mxu0 %v575
        %802 = vmatpush1.bf16.msra.mxu0 %v574
        %803 = vmatprep.subr.bf16.mxu0 %v579
        %804 = vmatpush1.bf16.msra.mxu0 %v578
        %805 = vmatprep.subr.bf16.mxu0 %v583
        %806 = vmatpush1.bf16.msra.mxu0 %v582
        %807 = vmatprep.subr.bf16.mxu0 %v587
        %808 = vmatpush1.bf16.msra.mxu0 %v586
        %809 = vmatprep.subr.bf16.mxu0 %v591
        %810 = vmatpush1.bf16.msra.mxu0 %v590
        %811 = vmatprep.subr.bf16.mxu0 %v595
        %812 = vmatpush1.bf16.msra.mxu0 %v594
        %813 = vmatprep.subr.bf16.mxu0 %v599
        %814 = vmatpush1.bf16.msra.mxu0 %v598
        %815 = vmatprep.subr.bf16.mxu0 %v603
        %816 = vmatpush1.bf16.msra.mxu0 %v602
        %817 = vmatprep.subr.bf16.mxu0 %v607
        %818 = vmatpush1.bf16.msra.mxu0 %v606
        %819 = vmatprep.subr.bf16.mxu0 %v611
        %820 = vmatpush1.bf16.msra.mxu0 %v610
        %821 = vmatprep.mubr.bf16.mxu0 %v320
        %822 = vmatmul.mubr.bf16.gmra.mrb[0].mxu0 %v319
        %v823 = vpop.f32.mrb[0].mxu0
        %v824 = vadd.f32 %v347, %v823
        %v825 = vpop.f32.mrb[0].mxu0
        %v826 = vadd.f32 %v351, %v825
        %v827 = vpop.f32.mrb[0].mxu0
        %v828 = vadd.f32 %v347, %v827
        %v829 = vpop.f32.mrb[0].mxu0
        %v830 = vadd.f32 %v351, %v829
        %831 = vmatprep.mubr.bf16.mxu0 %v322
        %832 = vmatmul.mubr.bf16.gmra.mrb[0].mxu0 %v321
        %v833 = vpop.f32.mrb[0].mxu0
        %v834 = vadd.f32 %v347, %v833
        %v835 = vpop.f32.mrb[0].mxu0
        %v836 = vadd.f32 %v351, %v835
        %v837 = vpop.f32.mrb[0].mxu0
        %v838 = vadd.f32 %v347, %v837
        %v839 = vpop.f32.mrb[0].mxu0
        %v840 = vadd.f32 %v351, %v839
        %841 = vmatprep.mubr.bf16.mxu0 %v324
        %842 = vmatmul.mubr.bf16.gmra.mrb[0].mxu0 %v323
        %v843 = vpop.f32.mrb[0].mxu0
        %v844 = vadd.f32 %v347, %v843
        %v845 = vpop.f32.mrb[0].mxu0
        %v846 = vadd.f32 %v351, %v845
        %v847 = vpop.f32.mrb[0].mxu0
        %v848 = vadd.f32 %v347, %v847
        %v849 = vpop.f32.mrb[0].mxu0
        %v850 = vadd.f32 %v351, %v849
        %851 = vmatprep.mubr.bf16.mxu0 %v326
        %852 = vmatmul.mubr.bf16.gmra.mrb[0].mxu0 %v325
        %v853 = vpop.f32.mrb[0].mxu0
        %v854 = vadd.f32 %v347, %v853
        %v855 = vpop.f32.mrb[0].mxu0
        %v856 = vadd.f32 %v351, %v855
        %v857 = vpop.f32.mrb[0].mxu0
        %v858 = vadd.f32 %v347, %v857
        %v859 = vpop.f32.mrb[0].mxu0
        %v860 = vadd.f32 %v351, %v859
        %861 = vmatprep.mubr.bf16.mxu0 %v328
        %862 = vmatmul.mubr.bf16.gmra.mrb[0].mxu0 %v327
        %v863 = vpop.f32.mrb[0].mxu0
        %v864 = vadd.f32 %v347, %v863
        %v865 = vpop.f32.mrb[0].mxu0
        %v866 = vadd.f32 %v351, %v865
        %v867 = vpop.f32.mrb[0].mxu0
        %v868 = vadd.f32 %v347, %v867
        %v869 = vpop.f32.mrb[0].mxu0
        %v870 = vadd.f32 %v351, %v869
        %871 = vmatprep.mubr.bf16.mxu0 %v330
        %872 = vmatmul.mubr.bf16.gmra.mrb[0].mxu0 %v329
        %v873 = vpop.f32.mrb[0].mxu0
        %v874 = vadd.f32 %v347, %v873
        %v875 = vpop.f32.mrb[0].mxu0
        %v876 = vadd.f32 %v351, %v875
        %v877 = vpop.f32.mrb[0].mxu0
        %v878 = vadd.f32 %v347, %v877
        %v879 = vpop.f32.mrb[0].mxu0
        %v880 = vadd.f32 %v351, %v879
        %881 = vmatprep.mubr.bf16.mxu0 %v332
        %882 = vmatmul.mubr.bf16.gmra.mrb[0].mxu0 %v331
        %v883 = vpop.f32.mrb[0].mxu0
        %v884 = vadd.f32 %v347, %v883
        %v885 = vpop.f32.mrb[0].mxu0
        %v886 = vadd.f32 %v351, %v885
        %v887 = vpop.f32.mrb[0].mxu0
        %v888 = vadd.f32 %v347, %v887
        %v889 = vpop.f32.mrb[0].mxu0
        %v890 = vadd.f32 %v351, %v889
        %891 = vmatprep.mubr.bf16.mxu0 %v334
        %892 = vmatmul.mubr.bf16.gmra.mrb[0].mxu0 %v333
        %v893 = vpop.f32.mrb[0].mxu0
        %v894 = vadd.f32 %v347, %v893
        %v895 = vpop.f32.mrb[0].mxu0
        %v896 = vadd.f32 %v351, %v895
        %v897 = vpop.f32.mrb[0].mxu0
        %v898 = vadd.f32 %v347, %v897
        %v899 = vpop.f32.mrb[0].mxu0
        %v900 = vadd.f32 %v351, %v899
        %901 = vdwg.mxu0
        %v902 = vmul.f32 %v711, 0.01
        %v903 = vmul.f32 %v713, 0.01
        %v904 = vmul.f32 %v824, 0.01
        %v905 = vmul.f32 %v826, 0.01
        %v906 = vmul.f32 %v715, 0.01
        %v907 = vmul.f32 %v717, 0.01
        %v908 = vmul.f32 %v828, 0.01
        %v909 = vmul.f32 %v830, 0.01
        %v910 = vmul.f32 %v721, 0.01
        %v911 = vmul.f32 %v723, 0.01
        %v912 = vmul.f32 %v834, 0.01
        %v913 = vmul.f32 %v836, 0.01
        %v914 = vmul.f32 %v725, 0.01
        %v915 = vmul.f32 %v727, 0.01
        %v916 = vmul.f32 %v838, 0.01
        %v917 = vmul.f32 %v840, 0.01
        %v918 = vmul.f32 %v731, 0.01
        %v919 = vmul.f32 %v733, 0.01
        %v920 = vmul.f32 %v844, 0.01
        %v921 = vmul.f32 %v846, 0.01
        %v922 = vmul.f32 %v735, 0.01
        %v923 = vmul.f32 %v737, 0.01
        %v924 = vmul.f32 %v848, 0.01
        %v925 = vmul.f32 %v850, 0.01
        %v926 = vmul.f32 %v741, 0.01
        %v927 = vmul.f32 %v743, 0.01
        %v928 = vmul.f32 %v854, 0.01
        %v929 = vmul.f32 %v856, 0.01
        %v930 = vmul.f32 %v745, 0.01
        %v931 = vmul.f32 %v747, 0.01
        %v932 = vmul.f32 %v858, 0.01
        %v933 = vmul.f32 %v860, 0.01
        %v934 = vmul.f32 %v751, 0.01
        %v935 = vmul.f32 %v753, 0.01
        %v936 = vmul.f32 %v864, 0.01
        %v937 = vmul.f32 %v866, 0.01
        %v938 = vmul.f32 %v755, 0.01
        %v939 = vmul.f32 %v757, 0.01
        %v940 = vmul.f32 %v868, 0.01
        %v941 = vmul.f32 %v870, 0.01
        %v942 = vmul.f32 %v761, 0.01
        %v943 = vmul.f32 %v763, 0.01
        %v944 = vmul.f32 %v874, 0.01
        %v945 = vmul.f32 %v876, 0.01
        %v946 = vmul.f32 %v765, 0.01
        %v947 = vmul.f32 %v767, 0.01
        %v948 = vmul.f32 %v878, 0.01
        %v949 = vmul.f32 %v880, 0.01
        %v950 = vmul.f32 %v771, 0.01
        %v951 = vmul.f32 %v773, 0.01
        %v952 = vmul.f32 %v884, 0.01
        %v953 = vmul.f32 %v886, 0.01
        %v954 = vmul.f32 %v775, 0.01
        %v955 = vmul.f32 %v777, 0.01
        %v956 = vmul.f32 %v888, 0.01
        %v957 = vmul.f32 %v890, 0.01
        %v958 = vmul.f32 %v781, 0.01
        %v959 = vmul.f32 %v783, 0.01
        %v960 = vmul.f32 %v894, 0.01
        %v961 = vmul.f32 %v896, 0.01
        %v962 = vmul.f32 %v785, 0.01
        %v963 = vmul.f32 %v787, 0.01
        %v964 = vmul.f32 %v898, 0.01
        %v965 = vmul.f32 %v900, 0.01
        %v966 = vmax.f32 %v711, %v902
        %v967 = vmax.f32 %v713, %v903
        %v968 = vmax.f32 %v824, %v904
        %v969 = vmax.f32 %v826, %v905
        %v970 = vmax.f32 %v715, %v906
        %v971 = vmax.f32 %v717, %v907
        %v972 = vmax.f32 %v828, %v908
        %v973 = vmax.f32 %v830, %v909
        %v974 = vmax.f32 %v721, %v910
        %v975 = vmax.f32 %v723, %v911
        %v976 = vmax.f32 %v834, %v912
        %v977 = vmax.f32 %v836, %v913
        %v978 = vmax.f32 %v725, %v914
        %v979 = vmax.f32 %v727, %v915
        %v980 = vmax.f32 %v838, %v916
        %v981 = vmax.f32 %v840, %v917
        %v982 = vmax.f32 %v731, %v918
        %v983 = vmax.f32 %v733, %v919
        %v984 = vmax.f32 %v844, %v920
        %v985 = vmax.f32 %v846, %v921
        %v986 = vmax.f32 %v735, %v922
        %v987 = vmax.f32 %v737, %v923
        %v988 = vmax.f32 %v848, %v924
        %v989 = vmax.f32 %v850, %v925
        %v990 = vmax.f32 %v741, %v926
        %v991 = vmax.f32 %v743, %v927
        %v992 = vmax.f32 %v854, %v928
        %v993 = vmax.f32 %v856, %v929
        %v994 = vmax.f32 %v745, %v930
        %v995 = vmax.f32 %v747, %v931
        %v996 = vmax.f32 %v858, %v932
        %v997 = vmax.f32 %v860, %v933
        %v998 = vmax.f32 %v751, %v934
        %v999 = vmax.f32 %v753, %v935
        %v1000 = vmax.f32 %v864, %v936
        %v1001 = vmax.f32 %v866, %v937
        %v1002 = vmax.f32 %v755, %v938
        %v1003 = vmax.f32 %v757, %v939
        %v1004 = vmax.f32 %v868, %v940
        %v1005 = vmax.f32 %v870, %v941
        %v1006 = vmax.f32 %v761, %v942
        %v1007 = vmax.f32 %v763, %v943
        %v1008 = vmax.f32 %v874, %v944
        %v1009 = vmax.f32 %v876, %v945
        %v1010 = vmax.f32 %v765, %v946
        %v1011 = vmax.f32 %v767, %v947
        %v1012 = vmax.f32 %v878, %v948
        %v1013 = vmax.f32 %v880, %v949
        %v1014 = vmax.f32 %v771, %v950
        %v1015 = vmax.f32 %v773, %v951
        %v1016 = vmax.f32 %v884, %v952
        %v1017 = vmax.f32 %v886, %v953
        %v1018 = vmax.f32 %v775, %v954
        %v1019 = vmax.f32 %v777, %v955
        %v1020 = vmax.f32 %v888, %v956
        %v1021 = vmax.f32 %v890, %v957
        %v1022 = vmax.f32 %v781, %v958
        %v1023 = vmax.f32 %v783, %v959
        %v1024 = vmax.f32 %v894, %v960
        %v1025 = vmax.f32 %v896, %v961
        %v1026 = vmax.f32 %v785, %v962
        %v1027 = vmax.f32 %v787, %v963
        %v1028 = vmax.f32 %v898, %v964
        %v1029 = vmax.f32 %v900, %v965
        %v1030 = vld [vmem:[#allocation5 + $0x200] sm:$0xff]
        %v1031 = vld [vmem:[#allocation5 + $0x210] sm:$0xff]
        %v1032 = vld [vmem:[#allocation5 + $0x220] sm:$0xff]
        %v1033 = vld [vmem:[#allocation5 + $0x230] sm:$0xff]
        %v1034 = vld [vmem:[#allocation5 + $0x240] sm:$0xff]
        %v1035 = vld [vmem:[#allocation5 + $0x250] sm:$0xff]
        %v1036 = vld [vmem:[#allocation5 + $0x260] sm:$0xff]
        %v1037 = vld [vmem:[#allocation5 + $0x270] sm:$0xff]
        %v1038 = vld [vmem:[#allocation5 + $0x280] sm:$0xff]
        %v1039 = vld [vmem:[#allocation5 + $0x290] sm:$0xff]
        %v1040 = vld [vmem:[#allocation5 + $0x2a0] sm:$0xff]
        %v1041 = vld [vmem:[#allocation5 + $0x2b0] sm:$0xff]
        %v1042 = vld [vmem:[#allocation5 + $0x2c0] sm:$0xff]
        %v1043 = vld [vmem:[#allocation5 + $0x2d0] sm:$0xff]
        %v1044 = vld [vmem:[#allocation5 + $0x2e0] sm:$0xff]
        %v1045 = vld [vmem:[#allocation5 + $0x2f0] sm:$0xff]
        %v1046 = vld [vmem:[#allocation5 + $0x300] sm:$0xff]
        %v1047 = vld [vmem:[#allocation5 + $0x310] sm:$0xff]
        %v1048 = vld [vmem:[#allocation5 + $0x320] sm:$0xff]
        %v1049 = vld [vmem:[#allocation5 + $0x330] sm:$0xff]
        %v1050 = vld [vmem:[#allocation5 + $0x340] sm:$0xff]
        %v1051 = vld [vmem:[#allocation5 + $0x350] sm:$0xff]
        %v1052 = vld [vmem:[#allocation5 + $0x360] sm:$0xff]
        %v1053 = vld [vmem:[#allocation5 + $0x370] sm:$0xff]
        %v1054 = vld [vmem:[#allocation5 + $0x380] sm:$0xff]
        %v1055 = vld [vmem:[#allocation5 + $0x390] sm:$0xff]
        %v1056 = vld [vmem:[#allocation5 + $0x3a0] sm:$0xff]
        %v1057 = vld [vmem:[#allocation5 + $0x3b0] sm:$0xff]
        %v1058 = vld [vmem:[#allocation5 + $0x3c0] sm:$0xff]
        %v1059 = vld [vmem:[#allocation5 + $0x3d0] sm:$0xff]
        %v1060 = vld [vmem:[#allocation5 + $0x3e0] sm:$0xff]
        %v1061 = vld [vmem:[#allocation5 + $0x3f0] sm:$0xff]
        %v1062 = vld [vmem:[#allocation5 + $0x400] sm:$0xff]
        %v1063 = vld [vmem:[#allocation5 + $0x410] sm:$0xff]
        %v1064 = vld [vmem:[#allocation5 + $0x420] sm:$0xff]
        %v1065 = vld [vmem:[#allocation5 + $0x430] sm:$0xff]
        %v1066 = vld [vmem:[#allocation5 + $0x440] sm:$0xff]
        %v1067 = vld [vmem:[#allocation5 + $0x450] sm:$0xff]
        %v1068 = vld [vmem:[#allocation5 + $0x460] sm:$0xff]
        %v1069 = vld [vmem:[#allocation5 + $0x470] sm:$0xff]
        %v1070 = vld [vmem:[#allocation5 + $0x480] sm:$0xff]
        %v1071 = vld [vmem:[#allocation5 + $0x490] sm:$0xff]
        %v1072 = vld [vmem:[#allocation5 + $0x4a0] sm:$0xff]
        %v1073 = vld [vmem:[#allocation5 + $0x4b0] sm:$0xff]
        %v1074 = vld [vmem:[#allocation5 + $0x4c0] sm:$0xff]
        %v1075 = vld [vmem:[#allocation5 + $0x4d0] sm:$0xff]
        %v1076 = vld [vmem:[#allocation5 + $0x4e0] sm:$0xff]
        %v1077 = vld [vmem:[#allocation5 + $0x4f0] sm:$0xff]
        %v1078 = vld [vmem:[#allocation5 + $0x500] sm:$0xff]
        %v1079 = vld [vmem:[#allocation5 + $0x510] sm:$0xff]
        %v1080 = vld [vmem:[#allocation5 + $0x520] sm:$0xff]
        %v1081 = vld [vmem:[#allocation5 + $0x530] sm:$0xff]
        %v1082 = vld [vmem:[#allocation5 + $0x540] sm:$0xff]
        %v1083 = vld [vmem:[#allocation5 + $0x550] sm:$0xff]
        %v1084 = vld [vmem:[#allocation5 + $0x560] sm:$0xff]
        %v1085 = vld [vmem:[#allocation5 + $0x570] sm:$0xff]
        %v1086 = vld [vmem:[#allocation5 + $0x580] sm:$0xff]
        %v1087 = vld [vmem:[#allocation5 + $0x590] sm:$0xff]
        %v1088 = vld [vmem:[#allocation5 + $0x5a0] sm:$0xff]
        %v1089 = vld [vmem:[#allocation5 + $0x5b0] sm:$0xff]
        %v1090 = vld [vmem:[#allocation5 + $0x5c0] sm:$0xff]
        %v1091 = vld [vmem:[#allocation5 + $0x5d0] sm:$0xff]
        %v1092 = vld [vmem:[#allocation5 + $0x5e0] sm:$0xff]
        %v1093 = vld [vmem:[#allocation5 + $0x5f0] sm:$0xff]
        %s1094 = scalar_lea.vmem [#allocation7], 1
        %v1095 = vld [vmem:[%s1094] ss:$8 sm:$0x3]
        %v1096 = vpack.c.bf16 %v970, %v966
        %v1097 = vpack.c.bf16 %v971, %v967
        %v1098 = vpack.c.bf16 %v972, %v968
        %v1099 = vpack.c.bf16 %v973, %v969
        %v1100 = vpack.c.bf16 %v978, %v974
        %v1101 = vpack.c.bf16 %v979, %v975
        %v1102 = vpack.c.bf16 %v980, %v976
        %v1103 = vpack.c.bf16 %v981, %v977
        %v1104 = vpack.c.bf16 %v986, %v982
        %v1105 = vpack.c.bf16 %v987, %v983
        %v1106 = vpack.c.bf16 %v988, %v984
        %v1107 = vpack.c.bf16 %v989, %v985
        %v1108 = vpack.c.bf16 %v994, %v990
        %v1109 = vpack.c.bf16 %v995, %v991
        %v1110 = vpack.c.bf16 %v996, %v992
        %v1111 = vpack.c.bf16 %v997, %v993
        %v1112 = vpack.c.bf16 %v1002, %v998
        %v1113 = vpack.c.bf16 %v1003, %v999
        %v1114 = vpack.c.bf16 %v1004, %v1000
        %v1115 = vpack.c.bf16 %v1005, %v1001
        %v1116 = vpack.c.bf16 %v1010, %v1006
        %v1117 = vpack.c.bf16 %v1011, %v1007
        %v1118 = vpack.c.bf16 %v1012, %v1008
        %v1119 = vpack.c.bf16 %v1013, %v1009
        %v1120 = vpack.c.bf16 %v1018, %v1014
        %v1121 = vpack.c.bf16 %v1019, %v1015
        %v1122 = vpack.c.bf16 %v1020, %v1016
        %v1123 = vpack.c.bf16 %v1021, %v1017
        %v1124 = vpack.c.bf16 %v1026, %v1022
        %v1125 = vpack.c.bf16 %v1027, %v1023
        %v1126 = vpack.c.bf16 %v1028, %v1024
        %v1127 = vpack.c.bf16 %v1029, %v1025
        %v1129 = vlaneseq
        %v1130 = vshrl.u32 %v1129, 7
        %v1131 = vsub.s32 0, %v1130
        %v1132 = vrot.slane %v1095, %v1131
        %v1133 = vlaneseq
        %v1134 = vshrl.u32 %v1133, 7
        %v1135 = vsub.s32 1, %v1134
        %v1136 = vrot.slane %v1095, %v1135
        %v1203 = vunpack.c.l.b16 %v1030
        %v1204 = vunpack.c.h.b16 %v1030
        %v1205 = vunpack.c.l.b16 %v1031
        %v1206 = vunpack.c.h.b16 %v1031
        %v1207 = vunpack.c.l.b16 %v1032
        %v1208 = vunpack.c.h.b16 %v1032
        %v1209 = vunpack.c.l.b16 %v1033
        %v1210 = vunpack.c.h.b16 %v1033
        %v1211 = vunpack.c.l.b16 %v1034
        %v1212 = vunpack.c.h.b16 %v1034
        %v1213 = vunpack.c.l.b16 %v1035
        %v1214 = vunpack.c.h.b16 %v1035
        %v1215 = vunpack.c.l.b16 %v1036
        %v1216 = vunpack.c.h.b16 %v1036
        %v1217 = vunpack.c.l.b16 %v1037
        %v1218 = vunpack.c.h.b16 %v1037
        %v1219 = vunpack.c.l.b16 %v1038
        %v1220 = vunpack.c.h.b16 %v1038
        %v1221 = vunpack.c.l.b16 %v1039
        %v1222 = vunpack.c.h.b16 %v1039
        %v1223 = vunpack.c.l.b16 %v1040
        %v1224 = vunpack.c.h.b16 %v1040
        %v1225 = vunpack.c.l.b16 %v1041
        %v1226 = vunpack.c.h.b16 %v1041
        %v1227 = vunpack.c.l.b16 %v1042
        %v1228 = vunpack.c.h.b16 %v1042
        %v1229 = vunpack.c.l.b16 %v1043
        %v1230 = vunpack.c.h.b16 %v1043
        %v1231 = vunpack.c.l.b16 %v1044
        %v1232 = vunpack.c.h.b16 %v1044
        %v1233 = vunpack.c.l.b16 %v1045
        %v1234 = vunpack.c.h.b16 %v1045
        %v1235 = vunpack.c.l.b16 %v1046
        %v1236 = vunpack.c.h.b16 %v1046
        %v1237 = vunpack.c.l.b16 %v1047
        %v1238 = vunpack.c.h.b16 %v1047
        %v1239 = vunpack.c.l.b16 %v1048
        %v1240 = vunpack.c.h.b16 %v1048
        %v1241 = vunpack.c.l.b16 %v1049
        %v1242 = vunpack.c.h.b16 %v1049
        %v1243 = vunpack.c.l.b16 %v1050
        %v1244 = vunpack.c.h.b16 %v1050
        %v1245 = vunpack.c.l.b16 %v1051
        %v1246 = vunpack.c.h.b16 %v1051
        %v1247 = vunpack.c.l.b16 %v1052
        %v1248 = vunpack.c.h.b16 %v1052
        %v1249 = vunpack.c.l.b16 %v1053
        %v1250 = vunpack.c.h.b16 %v1053
        %v1251 = vunpack.c.l.b16 %v1054
        %v1252 = vunpack.c.h.b16 %v1054
        %v1253 = vunpack.c.l.b16 %v1055
        %v1254 = vunpack.c.h.b16 %v1055
        %v1255 = vunpack.c.l.b16 %v1056
        %v1256 = vunpack.c.h.b16 %v1056
        %v1257 = vunpack.c.l.b16 %v1057
        %v1258 = vunpack.c.h.b16 %v1057
        %v1259 = vunpack.c.l.b16 %v1058
        %v1260 = vunpack.c.h.b16 %v1058
        %v1261 = vunpack.c.l.b16 %v1059
        %v1262 = vunpack.c.h.b16 %v1059
        %v1263 = vunpack.c.l.b16 %v1060
        %v1264 = vunpack.c.h.b16 %v1060
        %v1265 = vunpack.c.l.b16 %v1061
        %v1266 = vunpack.c.h.b16 %v1061
        %v1267 = vunpack.c.l.b16 %v1062
        %v1268 = vunpack.c.h.b16 %v1062
        %v1269 = vunpack.c.l.b16 %v1063
        %v1270 = vunpack.c.h.b16 %v1063
        %v1271 = vunpack.c.l.b16 %v1064
        %v1272 = vunpack.c.h.b16 %v1064
        %v1273 = vunpack.c.l.b16 %v1065
        %v1274 = vunpack.c.h.b16 %v1065
        %v1275 = vunpack.c.l.b16 %v1066
        %v1276 = vunpack.c.h.b16 %v1066
        %v1277 = vunpack.c.l.b16 %v1067
        %v1278 = vunpack.c.h.b16 %v1067
        %v1279 = vunpack.c.l.b16 %v1068
        %v1280 = vunpack.c.h.b16 %v1068
        %v1281 = vunpack.c.l.b16 %v1069
        %v1282 = vunpack.c.h.b16 %v1069
        %v1283 = vunpack.c.l.b16 %v1070
        %v1284 = vunpack.c.h.b16 %v1070
        %v1285 = vunpack.c.l.b16 %v1071
        %v1286 = vunpack.c.h.b16 %v1071
        %v1287 = vunpack.c.l.b16 %v1072
        %v1288 = vunpack.c.h.b16 %v1072
        %v1289 = vunpack.c.l.b16 %v1073
        %v1290 = vunpack.c.h.b16 %v1073
        %v1291 = vunpack.c.l.b16 %v1074
        %v1292 = vunpack.c.h.b16 %v1074
        %v1293 = vunpack.c.l.b16 %v1075
        %v1294 = vunpack.c.h.b16 %v1075
        %v1295 = vunpack.c.l.b16 %v1076
        %v1296 = vunpack.c.h.b16 %v1076
        %v1297 = vunpack.c.l.b16 %v1077
        %v1298 = vunpack.c.h.b16 %v1077
        %v1299 = vunpack.c.l.b16 %v1078
        %v1300 = vunpack.c.h.b16 %v1078
        %v1301 = vunpack.c.l.b16 %v1079
        %v1302 = vunpack.c.h.b16 %v1079
        %v1303 = vunpack.c.l.b16 %v1080
        %v1304 = vunpack.c.h.b16 %v1080
        %v1305 = vunpack.c.l.b16 %v1081
        %v1306 = vunpack.c.h.b16 %v1081
        %v1307 = vunpack.c.l.b16 %v1082
        %v1308 = vunpack.c.h.b16 %v1082
        %v1309 = vunpack.c.l.b16 %v1083
        %v1310 = vunpack.c.h.b16 %v1083
        %v1311 = vunpack.c.l.b16 %v1084
        %v1312 = vunpack.c.h.b16 %v1084
        %v1313 = vunpack.c.l.b16 %v1085
        %v1314 = vunpack.c.h.b16 %v1085
        %v1315 = vunpack.c.l.b16 %v1086
        %v1316 = vunpack.c.h.b16 %v1086
        %v1317 = vunpack.c.l.b16 %v1087
        %v1318 = vunpack.c.h.b16 %v1087
        %v1319 = vunpack.c.l.b16 %v1088
        %v1320 = vunpack.c.h.b16 %v1088
        %v1321 = vunpack.c.l.b16 %v1089
        %v1322 = vunpack.c.h.b16 %v1089
        %v1323 = vunpack.c.l.b16 %v1090
        %v1324 = vunpack.c.h.b16 %v1090
        %v1325 = vunpack.c.l.b16 %v1091
        %v1326 = vunpack.c.h.b16 %v1091
        %v1327 = vunpack.c.l.b16 %v1092
        %v1328 = vunpack.c.h.b16 %v1092
        %v1329 = vunpack.c.l.b16 %v1093
        %v1330 = vunpack.c.h.b16 %v1093
        %v1331 = vpack.c.b16 %v1205, %v1203
        %v1332 = vpack.c.b16 %v1206, %v1204
        %v1333 = vpack.c.b16 %v1209, %v1207
        %v1334 = vpack.c.b16 %v1210, %v1208
        %v1335 = vpack.c.b16 %v1213, %v1211
        %v1336 = vpack.c.b16 %v1214, %v1212
        %v1337 = vpack.c.b16 %v1217, %v1215
        %v1338 = vpack.c.b16 %v1218, %v1216
        %v1339 = vpack.c.b16 %v1221, %v1219
        %v1340 = vpack.c.b16 %v1222, %v1220
        %v1341 = vpack.c.b16 %v1225, %v1223
        %v1342 = vpack.c.b16 %v1226, %v1224
        %v1343 = vpack.c.b16 %v1229, %v1227
        %v1344 = vpack.c.b16 %v1230, %v1228
        %v1345 = vpack.c.b16 %v1233, %v1231
        %v1346 = vpack.c.b16 %v1234, %v1232
        %v1347 = vpack.c.b16 %v1237, %v1235
        %v1348 = vpack.c.b16 %v1238, %v1236
        %v1349 = vpack.c.b16 %v1241, %v1239
        %v1350 = vpack.c.b16 %v1242, %v1240
        %v1351 = vpack.c.b16 %v1245, %v1243
        %v1352 = vpack.c.b16 %v1246, %v1244
        %v1353 = vpack.c.b16 %v1249, %v1247
        %v1354 = vpack.c.b16 %v1250, %v1248
        %v1355 = vpack.c.b16 %v1253, %v1251
        %v1356 = vpack.c.b16 %v1254, %v1252
        %v1357 = vpack.c.b16 %v1257, %v1255
        %v1358 = vpack.c.b16 %v1258, %v1256
        %v1359 = vpack.c.b16 %v1261, %v1259
        %v1360 = vpack.c.b16 %v1262, %v1260
        %v1361 = vpack.c.b16 %v1265, %v1263
        %v1362 = vpack.c.b16 %v1266, %v1264
        %v1363 = vpack.c.b16 %v1269, %v1267
        %v1364 = vpack.c.b16 %v1270, %v1268
        %v1365 = vpack.c.b16 %v1273, %v1271
        %v1366 = vpack.c.b16 %v1274, %v1272
        %v1367 = vpack.c.b16 %v1277, %v1275
        %v1368 = vpack.c.b16 %v1278, %v1276
        %v1369 = vpack.c.b16 %v1281, %v1279
        %v1370 = vpack.c.b16 %v1282, %v1280
        %v1371 = vpack.c.b16 %v1285, %v1283
        %v1372 = vpack.c.b16 %v1286, %v1284
        %v1373 = vpack.c.b16 %v1289, %v1287
        %v1374 = vpack.c.b16 %v1290, %v1288
        %v1375 = vpack.c.b16 %v1293, %v1291
        %v1376 = vpack.c.b16 %v1294, %v1292
        %v1377 = vpack.c.b16 %v1297, %v1295
        %v1378 = vpack.c.b16 %v1298, %v1296
        %v1379 = vpack.c.b16 %v1301, %v1299
        %v1380 = vpack.c.b16 %v1302, %v1300
        %v1381 = vpack.c.b16 %v1305, %v1303
        %v1382 = vpack.c.b16 %v1306, %v1304
        %v1383 = vpack.c.b16 %v1309, %v1307
        %v1384 = vpack.c.b16 %v1310, %v1308
        %v1385 = vpack.c.b16 %v1313, %v1311
        %v1386 = vpack.c.b16 %v1314, %v1312
        %v1387 = vpack.c.b16 %v1317, %v1315
        %v1388 = vpack.c.b16 %v1318, %v1316
        %v1389 = vpack.c.b16 %v1321, %v1319
        %v1390 = vpack.c.b16 %v1322, %v1320
        %v1391 = vpack.c.b16 %v1325, %v1323
        %v1392 = vpack.c.b16 %v1326, %v1324
        %v1393 = vpack.c.b16 %v1329, %v1327
        %v1394 = vpack.c.b16 %v1330, %v1328
        %1459 = vmatprep.subr.bf16.mxu0 %v1332
        %1460 = vmatpush1.bf16.msra.mxu0 %v1331
        %1461 = vmatprep.subr.bf16.mxu0 %v1334
        %1462 = vmatpush1.bf16.msra.mxu0 %v1333
        %1463 = vmatprep.subr.bf16.mxu0 %v1336
        %1464 = vmatpush1.bf16.msra.mxu0 %v1335
        %1465 = vmatprep.subr.bf16.mxu0 %v1338
        %1466 = vmatpush1.bf16.msra.mxu0 %v1337
        %1467 = vmatprep.subr.bf16.mxu0 %v1340
        %1468 = vmatpush1.bf16.msra.mxu0 %v1339
        %1469 = vmatprep.subr.bf16.mxu0 %v1342
        %1470 = vmatpush1.bf16.msra.mxu0 %v1341
        %1471 = vmatprep.subr.bf16.mxu0 %v1344
        %1472 = vmatpush1.bf16.msra.mxu0 %v1343
        %1473 = vmatprep.subr.bf16.mxu0 %v1346
        %1474 = vmatpush1.bf16.msra.mxu0 %v1345
        %1475 = vmatprep.subr.bf16.mxu0 %v1348
        %1476 = vmatpush1.bf16.msra.mxu0 %v1347
        %1477 = vmatprep.subr.bf16.mxu0 %v1350
        %1478 = vmatpush1.bf16.msra.mxu0 %v1349
        %1479 = vmatprep.subr.bf16.mxu0 %v1352
        %1480 = vmatpush1.bf16.msra.mxu0 %v1351
        %1481 = vmatprep.subr.bf16.mxu0 %v1354
        %1482 = vmatpush1.bf16.msra.mxu0 %v1353
        %1483 = vmatprep.subr.bf16.mxu0 %v1356
        %1484 = vmatpush1.bf16.msra.mxu0 %v1355
        %1485 = vmatprep.subr.bf16.mxu0 %v1358
        %1486 = vmatpush1.bf16.msra.mxu0 %v1357
        %1487 = vmatprep.subr.bf16.mxu0 %v1360
        %1488 = vmatpush1.bf16.msra.mxu0 %v1359
        %1489 = vmatprep.subr.bf16.mxu0 %v1362
        %1490 = vmatpush1.bf16.msra.mxu0 %v1361
        %1491 = vmatprep.mubr.bf16.mxu0 %v1097
        %1492 = vmatmul.mubr.bf16.gmra.mrb[0].mxu0 %v1096
        %v1493 = vpop.f32.mrb[0].mxu0
        %v1494 = vadd.f32 %v1132, %v1493
        %v1495 = vpop.f32.mrb[0].mxu0
        %v1496 = vadd.f32 %v1136, %v1495
        %v1497 = vpop.f32.mrb[0].mxu0
        %v1498 = vadd.f32 %v1132, %v1497
        %v1499 = vpop.f32.mrb[0].mxu0
        %v1500 = vadd.f32 %v1136, %v1499
        %1501 = vmatprep.mubr.bf16.mxu0 %v1101
        %1502 = vmatmul.mubr.bf16.gmra.mrb[0].mxu0 %v1100
        %v1503 = vpop.f32.mrb[0].mxu0
        %v1504 = vadd.f32 %v1132, %v1503
        %v1505 = vpop.f32.mrb[0].mxu0
        %v1506 = vadd.f32 %v1136, %v1505
        %v1507 = vpop.f32.mrb[0].mxu0
        %v1508 = vadd.f32 %v1132, %v1507
        %v1509 = vpop.f32.mrb[0].mxu0
        %v1510 = vadd.f32 %v1136, %v1509
        %1511 = vmatprep.mubr.bf16.mxu0 %v1105
        %1512 = vmatmul.mubr.bf16.gmra.mrb[0].mxu0 %v1104
        %v1513 = vpop.f32.mrb[0].mxu0
        %v1514 = vadd.f32 %v1132, %v1513
        %v1515 = vpop.f32.mrb[0].mxu0
        %v1516 = vadd.f32 %v1136, %v1515
        %v1517 = vpop.f32.mrb[0].mxu0
        %v1518 = vadd.f32 %v1132, %v1517
        %v1519 = vpop.f32.mrb[0].mxu0
        %v1520 = vadd.f32 %v1136, %v1519
        %1521 = vmatprep.mubr.bf16.mxu0 %v1109
        %1522 = vmatmul.mubr.bf16.gmra.mrb[0].mxu0 %v1108
        %v1523 = vpop.f32.mrb[0].mxu0
        %v1524 = vadd.f32 %v1132, %v1523
        %v1525 = vpop.f32.mrb[0].mxu0
        %v1526 = vadd.f32 %v1136, %v1525
        %v1527 = vpop.f32.mrb[0].mxu0
        %v1528 = vadd.f32 %v1132, %v1527
        %v1529 = vpop.f32.mrb[0].mxu0
        %v1530 = vadd.f32 %v1136, %v1529
        %1531 = vmatprep.mubr.bf16.mxu0 %v1113
        %1532 = vmatmul.mubr.bf16.gmra.mrb[0].mxu0 %v1112
        %v1533 = vpop.f32.mrb[0].mxu0
        %v1534 = vadd.f32 %v1132, %v1533
        %v1535 = vpop.f32.mrb[0].mxu0
        %v1536 = vadd.f32 %v1136, %v1535
        %v1537 = vpop.f32.mrb[0].mxu0
        %v1538 = vadd.f32 %v1132, %v1537
        %v1539 = vpop.f32.mrb[0].mxu0
        %v1540 = vadd.f32 %v1136, %v1539
        %1541 = vmatprep.mubr.bf16.mxu0 %v1117
        %1542 = vmatmul.mubr.bf16.gmra.mrb[0].mxu0 %v1116
        %v1543 = vpop.f32.mrb[0].mxu0
        %v1544 = vadd.f32 %v1132, %v1543
        %v1545 = vpop.f32.mrb[0].mxu0
        %v1546 = vadd.f32 %v1136, %v1545
        %v1547 = vpop.f32.mrb[0].mxu0
        %v1548 = vadd.f32 %v1132, %v1547
        %v1549 = vpop.f32.mrb[0].mxu0
        %v1550 = vadd.f32 %v1136, %v1549
        %1551 = vmatprep.mubr.bf16.mxu0 %v1121
        %1552 = vmatmul.mubr.bf16.gmra.mrb[0].mxu0 %v1120
        %v1553 = vpop.f32.mrb[0].mxu0
        %v1554 = vadd.f32 %v1132, %v1553
        %v1555 = vpop.f32.mrb[0].mxu0
        %v1556 = vadd.f32 %v1136, %v1555
        %v1557 = vpop.f32.mrb[0].mxu0
        %v1558 = vadd.f32 %v1132, %v1557
        %v1559 = vpop.f32.mrb[0].mxu0
        %v1560 = vadd.f32 %v1136, %v1559
        %1561 = vmatprep.mubr.bf16.mxu0 %v1125
        %1562 = vmatmul.mubr.bf16.gmra.mrb[0].mxu0 %v1124
        %v1563 = vpop.f32.mrb[0].mxu0
        %v1564 = vadd.f32 %v1132, %v1563
        %v1565 = vpop.f32.mrb[0].mxu0
        %v1566 = vadd.f32 %v1136, %v1565
        %v1567 = vpop.f32.mrb[0].mxu0
        %v1568 = vadd.f32 %v1132, %v1567
        %v1569 = vpop.f32.mrb[0].mxu0
        %v1570 = vadd.f32 %v1136, %v1569
        %1571 = vdwg.mxu0
        %1572 = vmatprep.subr.bf16.mxu0 %v1364
        %1573 = vmatpush1.bf16.msra.mxu0 %v1363
        %1574 = vmatprep.subr.bf16.mxu0 %v1366
        %1575 = vmatpush1.bf16.msra.mxu0 %v1365
        %1576 = vmatprep.subr.bf16.mxu0 %v1368
        %1577 = vmatpush1.bf16.msra.mxu0 %v1367
        %1578 = vmatprep.subr.bf16.mxu0 %v1370
        %1579 = vmatpush1.bf16.msra.mxu0 %v1369
        %1580 = vmatprep.subr.bf16.mxu0 %v1372
        %1581 = vmatpush1.bf16.msra.mxu0 %v1371
        %1582 = vmatprep.subr.bf16.mxu0 %v1374
        %1583 = vmatpush1.bf16.msra.mxu0 %v1373
        %1584 = vmatprep.subr.bf16.mxu0 %v1376
        %1585 = vmatpush1.bf16.msra.mxu0 %v1375
        %1586 = vmatprep.subr.bf16.mxu0 %v1378
        %1587 = vmatpush1.bf16.msra.mxu0 %v1377
        %1588 = vmatprep.subr.bf16.mxu0 %v1380
        %1589 = vmatpush1.bf16.msra.mxu0 %v1379
        %1590 = vmatprep.subr.bf16.mxu0 %v1382
        %1591 = vmatpush1.bf16.msra.mxu0 %v1381
        %1592 = vmatprep.subr.bf16.mxu0 %v1384
        %1593 = vmatpush1.bf16.msra.mxu0 %v1383
        %1594 = vmatprep.subr.bf16.mxu0 %v1386
        %1595 = vmatpush1.bf16.msra.mxu0 %v1385
        %1596 = vmatprep.subr.bf16.mxu0 %v1388
        %1597 = vmatpush1.bf16.msra.mxu0 %v1387
        %1598 = vmatprep.subr.bf16.mxu0 %v1390
        %1599 = vmatpush1.bf16.msra.mxu0 %v1389
        %1600 = vmatprep.subr.bf16.mxu0 %v1392
        %1601 = vmatpush1.bf16.msra.mxu0 %v1391
        %1602 = vmatprep.subr.bf16.mxu0 %v1394
        %1603 = vmatpush1.bf16.msra.mxu0 %v1393
        %1604 = vmatprep.mubr.bf16.mxu0 %v1099
        %1605 = vmatmul.mubr.bf16.gmra.mrb[0].mxu0 %v1098
        %v1606 = vpop.f32.mrb[0].mxu0
        %v1607 = vadd.f32 %v1494, %v1606
        %v1608 = vpop.f32.mrb[0].mxu0
        %v1609 = vadd.f32 %v1496, %v1608
        %v1610 = vpop.f32.mrb[0].mxu0
        %v1611 = vadd.f32 %v1498, %v1610
        %v1612 = vpop.f32.mrb[0].mxu0
        %v1613 = vadd.f32 %v1500, %v1612
        %1614 = vmatprep.mubr.bf16.mxu0 %v1103
        %1615 = vmatmul.mubr.bf16.gmra.mrb[0].mxu0 %v1102
        %v1616 = vpop.f32.mrb[0].mxu0
        %v1617 = vadd.f32 %v1504, %v1616
        %v1618 = vpop.f32.mrb[0].mxu0
        %v1619 = vadd.f32 %v1506, %v1618
        %v1620 = vpop.f32.mrb[0].mxu0
        %v1621 = vadd.f32 %v1508, %v1620
        %v1622 = vpop.f32.mrb[0].mxu0
        %v1623 = vadd.f32 %v1510, %v1622
        %1624 = vmatprep.mubr.bf16.mxu0 %v1107
        %1625 = vmatmul.mubr.bf16.gmra.mrb[0].mxu0 %v1106
        %v1626 = vpop.f32.mrb[0].mxu0
        %v1627 = vadd.f32 %v1514, %v1626
        %v1628 = vpop.f32.mrb[0].mxu0
        %v1629 = vadd.f32 %v1516, %v1628
        %v1630 = vpop.f32.mrb[0].mxu0
        %v1631 = vadd.f32 %v1518, %v1630
        %v1632 = vpop.f32.mrb[0].mxu0
        %v1633 = vadd.f32 %v1520, %v1632
        %1634 = vmatprep.mubr.bf16.mxu0 %v1111
        %1635 = vmatmul.mubr.bf16.gmra.mrb[0].mxu0 %v1110
        %v1636 = vpop.f32.mrb[0].mxu0
        %v1637 = vadd.f32 %v1524, %v1636
        %v1638 = vpop.f32.mrb[0].mxu0
        %v1639 = vadd.f32 %v1526, %v1638
        %v1640 = vpop.f32.mrb[0].mxu0
        %v1641 = vadd.f32 %v1528, %v1640
        %v1642 = vpop.f32.mrb[0].mxu0
        %v1643 = vadd.f32 %v1530, %v1642
        %1644 = vmatprep.mubr.bf16.mxu0 %v1115
        %1645 = vmatmul.mubr.bf16.gmra.mrb[0].mxu0 %v1114
        %v1646 = vpop.f32.mrb[0].mxu0
        %v1647 = vadd.f32 %v1534, %v1646
        %v1648 = vpop.f32.mrb[0].mxu0
        %v1649 = vadd.f32 %v1536, %v1648
        %v1650 = vpop.f32.mrb[0].mxu0
        %v1651 = vadd.f32 %v1538, %v1650
        %v1652 = vpop.f32.mrb[0].mxu0
        %v1653 = vadd.f32 %v1540, %v1652
        %1654 = vmatprep.mubr.bf16.mxu0 %v1119
        %1655 = vmatmul.mubr.bf16.gmra.mrb[0].mxu0 %v1118
        %v1656 = vpop.f32.mrb[0].mxu0
        %v1657 = vadd.f32 %v1544, %v1656
        %v1658 = vpop.f32.mrb[0].mxu0
        %v1659 = vadd.f32 %v1546, %v1658
        %v1660 = vpop.f32.mrb[0].mxu0
        %v1661 = vadd.f32 %v1548, %v1660
        %v1662 = vpop.f32.mrb[0].mxu0
        %v1663 = vadd.f32 %v1550, %v1662
        %1664 = vmatprep.mubr.bf16.mxu0 %v1123
        %1665 = vmatmul.mubr.bf16.gmra.mrb[0].mxu0 %v1122
        %v1666 = vpop.f32.mrb[0].mxu0
        %v1667 = vadd.f32 %v1554, %v1666
        %v1668 = vpop.f32.mrb[0].mxu0
        %v1669 = vadd.f32 %v1556, %v1668
        %v1670 = vpop.f32.mrb[0].mxu0
        %v1671 = vadd.f32 %v1558, %v1670
        %v1672 = vpop.f32.mrb[0].mxu0
        %v1673 = vadd.f32 %v1560, %v1672
        %1674 = vmatprep.mubr.bf16.mxu0 %v1127
        %1675 = vmatmul.mubr.bf16.gmra.mrb[0].mxu0 %v1126
        %v1676 = vpop.f32.mrb[0].mxu0
        %v1677 = vadd.f32 %v1564, %v1676
        %v1678 = vpop.f32.mrb[0].mxu0
        %v1679 = vadd.f32 %v1566, %v1678
        %v1680 = vpop.f32.mrb[0].mxu0
        %v1681 = vadd.f32 %v1568, %v1680
        %v1682 = vpop.f32.mrb[0].mxu0
        %v1683 = vadd.f32 %v1570, %v1682
        %1684 = vdwg.mxu0
        %v1685 = vmul.f32 %v1607, 0.01
        %v1686 = vmul.f32 %v1609, 0.01
        %v1687 = vmul.f32 %v1611, 0.01
        %v1688 = vmul.f32 %v1613, 0.01
        %v1689 = vmul.f32 %v1617, 0.01
        %v1690 = vmul.f32 %v1619, 0.01
        %v1691 = vmul.f32 %v1621, 0.01
        %v1692 = vmul.f32 %v1623, 0.01
        %v1693 = vmul.f32 %v1627, 0.01
        %v1694 = vmul.f32 %v1629, 0.01
        %v1695 = vmul.f32 %v1631, 0.01
        %v1696 = vmul.f32 %v1633, 0.01
        %v1697 = vmul.f32 %v1637, 0.01
        %v1698 = vmul.f32 %v1639, 0.01
        %v1699 = vmul.f32 %v1641, 0.01
        %v1700 = vmul.f32 %v1643, 0.01
        %v1701 = vmul.f32 %v1647, 0.01
        %v1702 = vmul.f32 %v1649, 0.01
        %v1703 = vmul.f32 %v1651, 0.01
        %v1704 = vmul.f32 %v1653, 0.01
        %v1705 = vmul.f32 %v1657, 0.01
        %v1706 = vmul.f32 %v1659, 0.01
        %v1707 = vmul.f32 %v1661, 0.01
        %v1708 = vmul.f32 %v1663, 0.01
        %v1709 = vmul.f32 %v1667, 0.01
        %v1710 = vmul.f32 %v1669, 0.01
        %v1711 = vmul.f32 %v1671, 0.01
        %v1712 = vmul.f32 %v1673, 0.01
        %v1713 = vmul.f32 %v1677, 0.01
        %v1714 = vmul.f32 %v1679, 0.01
        %v1715 = vmul.f32 %v1681, 0.01
        %v1716 = vmul.f32 %v1683, 0.01
        %v1717 = vmax.f32 %v1607, %v1685
        %v1718 = vmax.f32 %v1609, %v1686
        %v1719 = vmax.f32 %v1611, %v1687
        %v1720 = vmax.f32 %v1613, %v1688
        %v1721 = vmax.f32 %v1617, %v1689
        %v1722 = vmax.f32 %v1619, %v1690
        %v1723 = vmax.f32 %v1621, %v1691
        %v1724 = vmax.f32 %v1623, %v1692
        %v1725 = vmax.f32 %v1627, %v1693
        %v1726 = vmax.f32 %v1629, %v1694
        %v1727 = vmax.f32 %v1631, %v1695
        %v1728 = vmax.f32 %v1633, %v1696
        %v1729 = vmax.f32 %v1637, %v1697
        %v1730 = vmax.f32 %v1639, %v1698
        %v1731 = vmax.f32 %v1641, %v1699
        %v1732 = vmax.f32 %v1643, %v1700
        %v1733 = vmax.f32 %v1647, %v1701
        %v1734 = vmax.f32 %v1649, %v1702
        %v1735 = vmax.f32 %v1651, %v1703
        %v1736 = vmax.f32 %v1653, %v1704
        %v1737 = vmax.f32 %v1657, %v1705
        %v1738 = vmax.f32 %v1659, %v1706
        %v1739 = vmax.f32 %v1661, %v1707
        %v1740 = vmax.f32 %v1663, %v1708
        %v1741 = vmax.f32 %v1667, %v1709
        %v1742 = vmax.f32 %v1669, %v1710
        %v1743 = vmax.f32 %v1671, %v1711
        %v1744 = vmax.f32 %v1673, %v1712
        %v1745 = vmax.f32 %v1677, %v1713
        %v1746 = vmax.f32 %v1679, %v1714
        %v1747 = vmax.f32 %v1681, %v1715
        %v1748 = vmax.f32 %v1683, %v1716
        %v1749 = vld [vmem:[#allocation5 + $0x600] sm:$0xf]
        %v1750 = vld [vmem:[#allocation5 + $0x610] sm:$0xf]
        %v1751 = vld [vmem:[#allocation5 + $0x620] sm:$0xf]
        %v1752 = vld [vmem:[#allocation5 + $0x630] sm:$0xf]
        %v1753 = vld [vmem:[#allocation5 + $0x640] sm:$0xf]
        %v1754 = vld [vmem:[#allocation5 + $0x650] sm:$0xf]
        %v1755 = vld [vmem:[#allocation5 + $0x660] sm:$0xf]
        %v1756 = vld [vmem:[#allocation5 + $0x670] sm:$0xf]
        %v1757 = vld [vmem:[#allocation5 + $0x680] sm:$0xf]
        %v1758 = vld [vmem:[#allocation5 + $0x690] sm:$0xf]
        %v1759 = vld [vmem:[#allocation5 + $0x6a0] sm:$0xf]
        %v1760 = vld [vmem:[#allocation5 + $0x6b0] sm:$0xf]
        %v1761 = vld [vmem:[#allocation5 + $0x6c0] sm:$0xf]
        %v1762 = vld [vmem:[#allocation5 + $0x6d0] sm:$0xf]
        %v1763 = vld [vmem:[#allocation5 + $0x6e0] sm:$0xf]
        %v1764 = vld [vmem:[#allocation5 + $0x6f0] sm:$0xf]
        %v1765 = vld [vmem:[#allocation5 + $0x700] sm:$0xf]
        %v1766 = vld [vmem:[#allocation5 + $0x710] sm:$0xf]
        %v1767 = vld [vmem:[#allocation5 + $0x720] sm:$0xf]
        %v1768 = vld [vmem:[#allocation5 + $0x730] sm:$0xf]
        %v1769 = vld [vmem:[#allocation5 + $0x740] sm:$0xf]
        %v1770 = vld [vmem:[#allocation5 + $0x750] sm:$0xf]
        %v1771 = vld [vmem:[#allocation5 + $0x760] sm:$0xf]
        %v1772 = vld [vmem:[#allocation5 + $0x770] sm:$0xf]
        %v1773 = vld [vmem:[#allocation5 + $0x780] sm:$0xf]
        %v1774 = vld [vmem:[#allocation5 + $0x790] sm:$0xf]
        %v1775 = vld [vmem:[#allocation5 + $0x7a0] sm:$0xf]
        %v1776 = vld [vmem:[#allocation5 + $0x7b0] sm:$0xf]
        %v1777 = vld [vmem:[#allocation5 + $0x7c0] sm:$0xf]
        %v1778 = vld [vmem:[#allocation5 + $0x7d0] sm:$0xf]
        %v1779 = vld [vmem:[#allocation5 + $0x7e0] sm:$0xf]
        %v1780 = vld [vmem:[#allocation5 + $0x7f0] sm:$0xf]
        %v1781 = vld [vmem:[#allocation7 + $0x2] ss:$0 sm:$0xff]
        %v1782 = vpack.c.bf16 %v1719, %v1717
        %v1783 = vpack.c.bf16 %v1720, %v1718
        %v1784 = vpack.c.bf16 %v1723, %v1721
        %v1785 = vpack.c.bf16 %v1724, %v1722
        %v1786 = vpack.c.bf16 %v1727, %v1725
        %v1787 = vpack.c.bf16 %v1728, %v1726
        %v1788 = vpack.c.bf16 %v1731, %v1729
        %v1789 = vpack.c.bf16 %v1732, %v1730
        %v1790 = vpack.c.bf16 %v1735, %v1733
        %v1791 = vpack.c.bf16 %v1736, %v1734
        %v1792 = vpack.c.bf16 %v1739, %v1737
        %v1793 = vpack.c.bf16 %v1740, %v1738
        %v1794 = vpack.c.bf16 %v1743, %v1741
        %v1795 = vpack.c.bf16 %v1744, %v1742
        %v1796 = vpack.c.bf16 %v1747, %v1745
        %v1797 = vpack.c.bf16 %v1748, %v1746
        %v1830 = vunpack.c.l.b16 %v1749
        %v1831 = vunpack.c.l.b16 %v1750
        %v1832 = vunpack.c.l.b16 %v1751
        %v1833 = vunpack.c.l.b16 %v1752
        %v1834 = vunpack.c.l.b16 %v1753
        %v1835 = vunpack.c.l.b16 %v1754
        %v1836 = vunpack.c.l.b16 %v1755
        %v1837 = vunpack.c.l.b16 %v1756
        %v1838 = vunpack.c.l.b16 %v1757
        %v1839 = vunpack.c.l.b16 %v1758
        %v1840 = vunpack.c.l.b16 %v1759
        %v1841 = vunpack.c.l.b16 %v1760
        %v1842 = vunpack.c.l.b16 %v1761
        %v1843 = vunpack.c.l.b16 %v1762
        %v1844 = vunpack.c.l.b16 %v1763
        %v1845 = vunpack.c.l.b16 %v1764
        %v1846 = vunpack.c.l.b16 %v1765
        %v1847 = vunpack.c.l.b16 %v1766
        %v1848 = vunpack.c.l.b16 %v1767
        %v1849 = vunpack.c.l.b16 %v1768
        %v1850 = vunpack.c.l.b16 %v1769
        %v1851 = vunpack.c.l.b16 %v1770
        %v1852 = vunpack.c.l.b16 %v1771
        %v1853 = vunpack.c.l.b16 %v1772
        %v1854 = vunpack.c.l.b16 %v1773
        %v1855 = vunpack.c.l.b16 %v1774
        %v1856 = vunpack.c.l.b16 %v1775
        %v1857 = vunpack.c.l.b16 %v1776
        %v1858 = vunpack.c.l.b16 %v1777
        %v1859 = vunpack.c.l.b16 %v1778
        %v1860 = vunpack.c.l.b16 %v1779
        %v1861 = vunpack.c.l.b16 %v1780
        %v1862 = vpack.c.b16 %v1831, %v1830
        %v1863 = vpack.c.b16 %v1833, %v1832
        %v1864 = vpack.c.b16 %v1835, %v1834
        %v1865 = vpack.c.b16 %v1837, %v1836
        %v1866 = vpack.c.b16 %v1839, %v1838
        %v1867 = vpack.c.b16 %v1841, %v1840
        %v1868 = vpack.c.b16 %v1843, %v1842
        %v1869 = vpack.c.b16 %v1845, %v1844
        %v1870 = vpack.c.b16 %v1847, %v1846
        %v1871 = vpack.c.b16 %v1849, %v1848
        %v1872 = vpack.c.b16 %v1851, %v1850
        %v1873 = vpack.c.b16 %v1853, %v1852
        %v1874 = vpack.c.b16 %v1855, %v1854
        %v1875 = vpack.c.b16 %v1857, %v1856
        %v1876 = vpack.c.b16 %v1859, %v1858
        %v1877 = vpack.c.b16 %v1861, %v1860
        %1894 = vmatprep.subr.bf16.mxu0 0
        %1895 = vmatpush1.bf16.msra.mxu0 %v1862
        %1896 = vmatprep.subr.bf16.mxu0 0
        %1897 = vmatpush1.bf16.msra.mxu0 %v1863
        %1898 = vmatprep.subr.bf16.mxu0 0
        %1899 = vmatpush1.bf16.msra.mxu0 %v1864
        %1900 = vmatprep.subr.bf16.mxu0 0
        %1901 = vmatpush1.bf16.msra.mxu0 %v1865
        %1902 = vmatprep.subr.bf16.mxu0 0
        %1903 = vmatpush1.bf16.msra.mxu0 %v1866
        %1904 = vmatprep.subr.bf16.mxu0 0
        %1905 = vmatpush1.bf16.msra.mxu0 %v1867
        %1906 = vmatprep.subr.bf16.mxu0 0
        %1907 = vmatpush1.bf16.msra.mxu0 %v1868
        %1908 = vmatprep.subr.bf16.mxu0 0
        %1909 = vmatpush1.bf16.msra.mxu0 %v1869
        %1910 = vmatprep.subr.bf16.mxu0 0
        %1911 = vmatpush1.bf16.msra.mxu0 %v1870
        %1912 = vmatprep.subr.bf16.mxu0 0
        %1913 = vmatpush1.bf16.msra.mxu0 %v1871
        %1914 = vmatprep.subr.bf16.mxu0 0
        %1915 = vmatpush1.bf16.msra.mxu0 %v1872
        %1916 = vmatprep.subr.bf16.mxu0 0
        %1917 = vmatpush1.bf16.msra.mxu0 %v1873
        %1918 = vmatprep.subr.bf16.mxu0 0
        %1919 = vmatpush1.bf16.msra.mxu0 %v1874
        %1920 = vmatprep.subr.bf16.mxu0 0
        %1921 = vmatpush1.bf16.msra.mxu0 %v1875
        %1922 = vmatprep.subr.bf16.mxu0 0
        %1923 = vmatpush1.bf16.msra.mxu0 %v1876
        %1924 = vmatprep.subr.bf16.mxu0 0
        %1925 = vmatpush1.bf16.msra.mxu0 %v1877
        %1926 = vmatprep.mubr.bf16.mxu0 %v1783
        %1927 = vmatmul.mubr.bf16.gmra.mrb[0].mxu0 %v1782
        %v1928 = vpop.f32.mrb[0].mxu0
        %v1929 = vadd.f32 %v1781, %v1928
        %v1930 = vpop.f32.mrb[0].mxu0
        %v1931 = vpop.f32.mrb[0].mxu0
        %v1932 = vadd.f32 %v1781, %v1931
        %v1933 = vpop.f32.mrb[0].mxu0
        %1934 = vmatprep.mubr.bf16.mxu0 %v1785
        %1935 = vmatmul.mubr.bf16.gmra.mrb[0].mxu0 %v1784
        %v1936 = vpop.f32.mrb[0].mxu0
        %v1937 = vadd.f32 %v1781, %v1936
        %v1938 = vpop.f32.mrb[0].mxu0
        %v1939 = vpop.f32.mrb[0].mxu0
        %v1940 = vadd.f32 %v1781, %v1939
        %v1941 = vpop.f32.mrb[0].mxu0
        %1942 = vmatprep.mubr.bf16.mxu0 %v1787
        %1943 = vmatmul.mubr.bf16.gmra.mrb[0].mxu0 %v1786
        %v1944 = vpop.f32.mrb[0].mxu0
        %v1945 = vadd.f32 %v1781, %v1944
        %v1946 = vpop.f32.mrb[0].mxu0
        %v1947 = vpop.f32.mrb[0].mxu0
        %v1948 = vadd.f32 %v1781, %v1947
        %v1949 = vpop.f32.mrb[0].mxu0
        %1950 = vmatprep.mubr.bf16.mxu0 %v1789
        %1951 = vmatmul.mubr.bf16.gmra.mrb[0].mxu0 %v1788
        %v1952 = vpop.f32.mrb[0].mxu0
        %v1953 = vadd.f32 %v1781, %v1952
        %v1954 = vpop.f32.mrb[0].mxu0
        %v1955 = vpop.f32.mrb[0].mxu0
        %v1956 = vadd.f32 %v1781, %v1955
        %v1957 = vpop.f32.mrb[0].mxu0
        %1958 = vmatprep.mubr.bf16.mxu0 %v1791
        %1959 = vmatmul.mubr.bf16.gmra.mrb[0].mxu0 %v1790
        %v1960 = vpop.f32.mrb[0].mxu0
        %v1961 = vadd.f32 %v1781, %v1960
        %v1962 = vpop.f32.mrb[0].mxu0
        %v1963 = vpop.f32.mrb[0].mxu0
        %v1964 = vadd.f32 %v1781, %v1963
        %v1965 = vpop.f32.mrb[0].mxu0
        %1966 = vmatprep.mubr.bf16.mxu0 %v1793
        %1967 = vmatmul.mubr.bf16.gmra.mrb[0].mxu0 %v1792
        %v1968 = vpop.f32.mrb[0].mxu0
        %v1969 = vadd.f32 %v1781, %v1968
        %v1970 = vpop.f32.mrb[0].mxu0
        %v1971 = vpop.f32.mrb[0].mxu0
        %v1972 = vadd.f32 %v1781, %v1971
        %v1973 = vpop.f32.mrb[0].mxu0
        %1974 = vmatprep.mubr.bf16.mxu0 %v1795
        %1975 = vmatmul.mubr.bf16.gmra.mrb[0].mxu0 %v1794
        %v1976 = vpop.f32.mrb[0].mxu0
        %v1977 = vadd.f32 %v1781, %v1976
        %v1978 = vpop.f32.mrb[0].mxu0
        %v1979 = vpop.f32.mrb[0].mxu0
        %v1980 = vadd.f32 %v1781, %v1979
        %v1981 = vpop.f32.mrb[0].mxu0
        %1982 = vmatprep.mubr.bf16.mxu0 %v1797
        %1983 = vmatmul.mubr.bf16.gmra.mrb[0].mxu0 %v1796
        %v1984 = vpop.f32.mrb[0].mxu0
        %v1985 = vadd.f32 %v1781, %v1984
        %v1986 = vpop.f32.mrb[0].mxu0
        %v1987 = vpop.f32.mrb[0].mxu0
        %v1988 = vadd.f32 %v1781, %v1987
        %v1989 = vpop.f32.mrb[0].mxu0
        %1990 = vdwg.mxu0
        %v1991 = vmul.f32 %v1929, 0.01
        %v1992 = vmul.f32 %v1932, 0.01
        %v1993 = vmul.f32 %v1937, 0.01
        %v1994 = vmul.f32 %v1940, 0.01
        %v1995 = vmul.f32 %v1945, 0.01
        %v1996 = vmul.f32 %v1948, 0.01
        %v1997 = vmul.f32 %v1953, 0.01
        %v1998 = vmul.f32 %v1956, 0.01
        %v1999 = vmul.f32 %v1961, 0.01
        %v2000 = vmul.f32 %v1964, 0.01
        %v2001 = vmul.f32 %v1969, 0.01
        %v2002 = vmul.f32 %v1972, 0.01
        %v2003 = vmul.f32 %v1977, 0.01
        %v2004 = vmul.f32 %v1980, 0.01
        %v2005 = vmul.f32 %v1985, 0.01
        %v2006 = vmul.f32 %v1988, 0.01
        %v2007 = vmax.f32 %v1929, %v1991
        %v2008 = vmax.f32 %v1932, %v1992
        %v2009 = vmax.f32 %v1937, %v1993
        %v2010 = vmax.f32 %v1940, %v1994
        %v2011 = vmax.f32 %v1945, %v1995
        %v2012 = vmax.f32 %v1948, %v1996
        %v2013 = vmax.f32 %v1953, %v1997
        %v2014 = vmax.f32 %v1956, %v1998
        %v2015 = vmax.f32 %v1961, %v1999
        %v2016 = vmax.f32 %v1964, %v2000
        %v2017 = vmax.f32 %v1969, %v2001
        %v2018 = vmax.f32 %v1972, %v2002
        %v2019 = vmax.f32 %v1977, %v2003
        %v2020 = vmax.f32 %v1980, %v2004
        %v2021 = vmax.f32 %v1985, %v2005
        %v2022 = vmax.f32 %v1988, %v2006
        %v2023 = vld [vmem:[#allocation5 + $0x800] sm:$0xf]
        %v2024 = vld [vmem:[#allocation5 + $0x810] sm:$0xf]
        %v2025 = vld [vmem:[#allocation5 + $0x820] sm:$0xf]
        %v2026 = vld [vmem:[#allocation5 + $0x830] sm:$0xf]
        %v2027 = vld [vmem:[#allocation5 + $0x840] sm:$0xf]
        %v2028 = vld [vmem:[#allocation5 + $0x850] sm:$0xf]
        %v2029 = vld [vmem:[#allocation5 + $0x860] sm:$0xf]
        %v2030 = vld [vmem:[#allocation5 + $0x870] sm:$0xf]
        %v2031 = vld [vmem:[#allocation5 + $0x880] sm:$0xf]
        %v2032 = vld [vmem:[#allocation5 + $0x890] sm:$0xf]
        %v2033 = vld [vmem:[#allocation5 + $0x8a0] sm:$0xf]
        %v2034 = vld [vmem:[#allocation5 + $0x8b0] sm:$0xf]
        %v2035 = vld [vmem:[#allocation5 + $0x8c0] sm:$0xf]
        %v2036 = vld [vmem:[#allocation5 + $0x8d0] sm:$0xf]
        %v2037 = vld [vmem:[#allocation5 + $0x8e0] sm:$0xf]
        %v2038 = vld [vmem:[#allocation5 + $0x8f0] sm:$0xf]
        %v2039 = vld [vmem:[#allocation7 + $0x3] ss:$0 sm:$0xff]
        %v2040 = vpack.c.bf16 %v2008, %v2007
        %v2041 = vpack.c.bf16 %v2010, %v2009
        %v2042 = vpack.c.bf16 %v2012, %v2011
        %v2043 = vpack.c.bf16 %v2014, %v2013
        %v2044 = vpack.c.bf16 %v2016, %v2015
        %v2045 = vpack.c.bf16 %v2018, %v2017
        %v2046 = vpack.c.bf16 %v2020, %v2019
        %v2047 = vpack.c.bf16 %v2022, %v2021
        %v2064 = vunpack.c.l.b16 %v2023
        %v2065 = vunpack.c.l.b16 %v2024
        %v2066 = vunpack.c.l.b16 %v2025
        %v2067 = vunpack.c.l.b16 %v2026
        %v2068 = vunpack.c.l.b16 %v2027
        %v2069 = vunpack.c.l.b16 %v2028
        %v2070 = vunpack.c.l.b16 %v2029
        %v2071 = vunpack.c.l.b16 %v2030
        %v2072 = vunpack.c.l.b16 %v2031
        %v2073 = vunpack.c.l.b16 %v2032
        %v2074 = vunpack.c.l.b16 %v2033
        %v2075 = vunpack.c.l.b16 %v2034
        %v2076 = vunpack.c.l.b16 %v2035
        %v2077 = vunpack.c.l.b16 %v2036
        %v2078 = vunpack.c.l.b16 %v2037
        %v2079 = vunpack.c.l.b16 %v2038
        %v2080 = vpack.c.b16 %v2065, %v2064
        %v2081 = vpack.c.b16 %v2067, %v2066
        %v2082 = vpack.c.b16 %v2069, %v2068
        %v2083 = vpack.c.b16 %v2071, %v2070
        %v2084 = vpack.c.b16 %v2073, %v2072
        %v2085 = vpack.c.b16 %v2075, %v2074
        %v2086 = vpack.c.b16 %v2077, %v2076
        %v2087 = vpack.c.b16 %v2079, %v2078
        %2096 = vmatprep.subr.bf16.mxu0 0
        %2097 = vmatpush1.bf16.msra.mxu0 %v2080
        %2098 = vmatprep.subr.bf16.mxu0 0
        %2099 = vmatpush1.bf16.msra.mxu0 %v2081
        %2100 = vmatprep.subr.bf16.mxu0 0
        %2101 = vmatpush1.bf16.msra.mxu0 %v2082
        %2102 = vmatprep.subr.bf16.mxu0 0
        %2103 = vmatpush1.bf16.msra.mxu0 %v2083
        %2104 = vmatprep.subr.bf16.mxu0 0
        %2105 = vmatpush1.bf16.msra.mxu0 %v2084
        %2106 = vmatprep.subr.bf16.mxu0 0
        %2107 = vmatpush1.bf16.msra.mxu0 %v2085
        %2108 = vmatprep.subr.bf16.mxu0 0
        %2109 = vmatpush1.bf16.msra.mxu0 %v2086
        %2110 = vmatprep.subr.bf16.mxu0 0
        %2111 = vmatpush1.bf16.msra.mxu0 %v2087
        %2112 = vmatprep.subr.bf16.mxu0 0
        %2113 = vmatpush1.bf16.msra.mxu0 0
        %2114 = vmatprep.subr.bf16.mxu0 0
        %2115 = vmatpush1.bf16.msra.mxu0 0
        %2116 = vmatprep.subr.bf16.mxu0 0
        %2117 = vmatpush1.bf16.msra.mxu0 0
        %2118 = vmatprep.subr.bf16.mxu0 0
        %2119 = vmatpush1.bf16.msra.mxu0 0
        %2120 = vmatprep.subr.bf16.mxu0 0
        %2121 = vmatpush1.bf16.msra.mxu0 0
        %2122 = vmatprep.subr.bf16.mxu0 0
        %2123 = vmatpush1.bf16.msra.mxu0 0
        %2124 = vmatprep.subr.bf16.mxu0 0
        %2125 = vmatpush1.bf16.msra.mxu0 0
        %2126 = vmatprep.subr.bf16.mxu0 0
        %2127 = vmatpush1.bf16.msra.mxu0 0
        %2128 = vmatprep.mubr.bf16.mxu0 0
        %2129 = vmatmul.mubr.bf16.gmra.mrb[0].mxu0 %v2040
        %v2130 = vpop.f32.mrb[0].mxu0
        %v2131 = vadd.f32 %v2039, %v2130
        %v2132 = vpop.f32.mrb[0].mxu0
        %v2133 = vpop.f32.mrb[0].mxu0
        %v2134 = vadd.f32 %v2039, %v2133
        %v2135 = vpop.f32.mrb[0].mxu0
        %2136 = vmatprep.mubr.bf16.mxu0 0
        %2137 = vmatmul.mubr.bf16.gmra.mrb[0].mxu0 %v2041
        %v2138 = vpop.f32.mrb[0].mxu0
        %v2139 = vadd.f32 %v2039, %v2138
        %v2140 = vpop.f32.mrb[0].mxu0
        %v2141 = vpop.f32.mrb[0].mxu0
        %v2142 = vadd.f32 %v2039, %v2141
        %v2143 = vpop.f32.mrb[0].mxu0
        %2144 = vmatprep.mubr.bf16.mxu0 0
        %2145 = vmatmul.mubr.bf16.gmra.mrb[0].mxu0 %v2042
        %v2146 = vpop.f32.mrb[0].mxu0
        %v2147 = vadd.f32 %v2039, %v2146
        %v2148 = vpop.f32.mrb[0].mxu0
        %v2149 = vpop.f32.mrb[0].mxu0
        %v2150 = vadd.f32 %v2039, %v2149
        %v2151 = vpop.f32.mrb[0].mxu0
        %2152 = vmatprep.mubr.bf16.mxu0 0
        %2153 = vmatmul.mubr.bf16.gmra.mrb[0].mxu0 %v2043
        %v2154 = vpop.f32.mrb[0].mxu0
        %v2155 = vadd.f32 %v2039, %v2154
        %v2156 = vpop.f32.mrb[0].mxu0
        %v2157 = vpop.f32.mrb[0].mxu0
        %v2158 = vadd.f32 %v2039, %v2157
        %v2159 = vpop.f32.mrb[0].mxu0
        %2160 = vmatprep.mubr.bf16.mxu0 0
        %2161 = vmatmul.mubr.bf16.gmra.mrb[0].mxu0 %v2044
        %v2162 = vpop.f32.mrb[0].mxu0
        %v2163 = vadd.f32 %v2039, %v2162
        %v2164 = vpop.f32.mrb[0].mxu0
        %v2165 = vpop.f32.mrb[0].mxu0
        %v2166 = vadd.f32 %v2039, %v2165
        %v2167 = vpop.f32.mrb[0].mxu0
        %2168 = vmatprep.mubr.bf16.mxu0 0
        %2169 = vmatmul.mubr.bf16.gmra.mrb[0].mxu0 %v2045
        %v2170 = vpop.f32.mrb[0].mxu0
        %v2171 = vadd.f32 %v2039, %v2170
        %v2172 = vpop.f32.mrb[0].mxu0
        %v2173 = vpop.f32.mrb[0].mxu0
        %v2174 = vadd.f32 %v2039, %v2173
        %v2175 = vpop.f32.mrb[0].mxu0
        %2176 = vmatprep.mubr.bf16.mxu0 0
        %2177 = vmatmul.mubr.bf16.gmra.mrb[0].mxu0 %v2046
        %v2178 = vpop.f32.mrb[0].mxu0
        %v2179 = vadd.f32 %v2039, %v2178
        %v2180 = vpop.f32.mrb[0].mxu0
        %v2181 = vpop.f32.mrb[0].mxu0
        %v2182 = vadd.f32 %v2039, %v2181
        %v2183 = vpop.f32.mrb[0].mxu0
        %2184 = vmatprep.mubr.bf16.mxu0 0
        %2185 = vmatmul.mubr.bf16.gmra.mrb[0].mxu0 %v2047
        %v2186 = vpop.f32.mrb[0].mxu0
        %v2187 = vadd.f32 %v2039, %v2186
        %v2188 = vpop.f32.mrb[0].mxu0
        %v2189 = vpop.f32.mrb[0].mxu0
        %v2190 = vadd.f32 %v2039, %v2189
        %v2191 = vpop.f32.mrb[0].mxu0
        %2192 = vdwg.mxu0
        %v2193 = vmul.f32 %v2131, 0.01
        %v2194 = vmul.f32 %v2134, 0.01
        %v2195 = vmul.f32 %v2139, 0.01
        %v2196 = vmul.f32 %v2142, 0.01
        %v2197 = vmul.f32 %v2147, 0.01
        %v2198 = vmul.f32 %v2150, 0.01
        %v2199 = vmul.f32 %v2155, 0.01
        %v2200 = vmul.f32 %v2158, 0.01
        %v2201 = vmul.f32 %v2163, 0.01
        %v2202 = vmul.f32 %v2166, 0.01
        %v2203 = vmul.f32 %v2171, 0.01
        %v2204 = vmul.f32 %v2174, 0.01
        %v2205 = vmul.f32 %v2179, 0.01
        %v2206 = vmul.f32 %v2182, 0.01
        %v2207 = vmul.f32 %v2187, 0.01
        %v2208 = vmul.f32 %v2190, 0.01
        %v2209 = vmax.f32 %v2131, %v2193
        %v2210 = vmax.f32 %v2134, %v2194
        %v2211 = vmax.f32 %v2139, %v2195
        %v2212 = vmax.f32 %v2142, %v2196
        %v2213 = vmax.f32 %v2147, %v2197
        %v2214 = vmax.f32 %v2150, %v2198
        %v2215 = vmax.f32 %v2155, %v2199
        %v2216 = vmax.f32 %v2158, %v2200
        %v2217 = vmax.f32 %v2163, %v2201
        %v2218 = vmax.f32 %v2166, %v2202
        %v2219 = vmax.f32 %v2171, %v2203
        %v2220 = vmax.f32 %v2174, %v2204
        %v2221 = vmax.f32 %v2179, %v2205
        %v2222 = vmax.f32 %v2182, %v2206
        %v2223 = vmax.f32 %v2187, %v2207
        %v2224 = vmax.f32 %v2190, %v2208
        %v2225 = vld [vmem:[#allocation5 + $0x900] sm:$0xf]
        %v2226 = vld [vmem:[#allocation5 + $0x910] sm:$0xf]
        %v2227 = vld [vmem:[#allocation5 + $0x920] sm:$0xf]
        %v2228 = vld [vmem:[#allocation5 + $0x930] sm:$0xf]
        %v2229 = vld [vmem:[#allocation5 + $0x940] sm:$0xf]
        %v2230 = vld [vmem:[#allocation5 + $0x950] sm:$0xf]
        %v2231 = vld [vmem:[#allocation5 + $0x960] sm:$0xf]
        %v2232 = vld [vmem:[#allocation5 + $0x970] sm:$0xf]
        %v2233 = vld [vmem:[#allocation5 + $0x980] sm:$0xf]
        %v2234 = vld [vmem:[#allocation5 + $0x990] sm:$0xf]
        %v2235 = vld [vmem:[#allocation5 + $0x9a0] sm:$0xf]
        %v2236 = vld [vmem:[#allocation5 + $0x9b0] sm:$0xf]
        %v2237 = vld [vmem:[#allocation5 + $0x9c0] sm:$0xf]
        %v2238 = vld [vmem:[#allocation5 + $0x9d0] sm:$0xf]
        %v2239 = vld [vmem:[#allocation5 + $0x9e0] sm:$0xf]
        %v2240 = vld [vmem:[#allocation5 + $0x9f0] sm:$0xf]
        %v2241 = vld [vmem:[#allocation7 + $0x4] ss:$0 sm:$0xff]
        %v2242 = vpack.c.bf16 %v2210, %v2209
        %v2243 = vpack.c.bf16 %v2212, %v2211
        %v2244 = vpack.c.bf16 %v2214, %v2213
        %v2245 = vpack.c.bf16 %v2216, %v2215
        %v2246 = vpack.c.bf16 %v2218, %v2217
        %v2247 = vpack.c.bf16 %v2220, %v2219
        %v2248 = vpack.c.bf16 %v2222, %v2221
        %v2249 = vpack.c.bf16 %v2224, %v2223
        %v2266 = vunpack.c.l.b16 %v2225
        %v2267 = vunpack.c.l.b16 %v2226
        %v2268 = vunpack.c.l.b16 %v2227
        %v2269 = vunpack.c.l.b16 %v2228
        %v2270 = vunpack.c.l.b16 %v2229
        %v2271 = vunpack.c.l.b16 %v2230
        %v2272 = vunpack.c.l.b16 %v2231
        %v2273 = vunpack.c.l.b16 %v2232
        %v2274 = vunpack.c.l.b16 %v2233
        %v2275 = vunpack.c.l.b16 %v2234
        %v2276 = vunpack.c.l.b16 %v2235
        %v2277 = vunpack.c.l.b16 %v2236
        %v2278 = vunpack.c.l.b16 %v2237
        %v2279 = vunpack.c.l.b16 %v2238
        %v2280 = vunpack.c.l.b16 %v2239
        %v2281 = vunpack.c.l.b16 %v2240
        %v2282 = vpack.c.b16 %v2267, %v2266
        %v2283 = vpack.c.b16 %v2269, %v2268
        %v2284 = vpack.c.b16 %v2271, %v2270
        %v2285 = vpack.c.b16 %v2273, %v2272
        %v2286 = vpack.c.b16 %v2275, %v2274
        %v2287 = vpack.c.b16 %v2277, %v2276
        %v2288 = vpack.c.b16 %v2279, %v2278
        %v2289 = vpack.c.b16 %v2281, %v2280
        %2298 = vmatprep.subr.bf16.mxu0 0
        %2299 = vmatpush1.bf16.msra.mxu0 %v2282
        %2300 = vmatprep.subr.bf16.mxu0 0
        %2301 = vmatpush1.bf16.msra.mxu0 %v2283
        %2302 = vmatprep.subr.bf16.mxu0 0
        %2303 = vmatpush1.bf16.msra.mxu0 %v2284
        %2304 = vmatprep.subr.bf16.mxu0 0
        %2305 = vmatpush1.bf16.msra.mxu0 %v2285
        %2306 = vmatprep.subr.bf16.mxu0 0
        %2307 = vmatpush1.bf16.msra.mxu0 %v2286
        %2308 = vmatprep.subr.bf16.mxu0 0
        %2309 = vmatpush1.bf16.msra.mxu0 %v2287
        %2310 = vmatprep.subr.bf16.mxu0 0
        %2311 = vmatpush1.bf16.msra.mxu0 %v2288
        %2312 = vmatprep.subr.bf16.mxu0 0
        %2313 = vmatpush1.bf16.msra.mxu0 %v2289
        %2314 = vmatprep.subr.bf16.mxu0 0
        %2315 = vmatpush1.bf16.msra.mxu0 0
        %2316 = vmatprep.subr.bf16.mxu0 0
        %2317 = vmatpush1.bf16.msra.mxu0 0
        %2318 = vmatprep.subr.bf16.mxu0 0
        %2319 = vmatpush1.bf16.msra.mxu0 0
        %2320 = vmatprep.subr.bf16.mxu0 0
        %2321 = vmatpush1.bf16.msra.mxu0 0
        %2322 = vmatprep.subr.bf16.mxu0 0
        %2323 = vmatpush1.bf16.msra.mxu0 0
        %2324 = vmatprep.subr.bf16.mxu0 0
        %2325 = vmatpush1.bf16.msra.mxu0 0
        %2326 = vmatprep.subr.bf16.mxu0 0
        %2327 = vmatpush1.bf16.msra.mxu0 0
        %2328 = vmatprep.subr.bf16.mxu0 0
        %2329 = vmatpush1.bf16.msra.mxu0 0
        %2330 = vmatprep.mubr.bf16.mxu0 0
        %2331 = vmatmul.mubr.bf16.gmra.mrb[0].mxu0 %v2242
        %v2332 = vpop.f32.mrb[0].mxu0
        %v2333 = vadd.f32 %v2241, %v2332
        %v2334 = vpop.f32.mrb[0].mxu0
        %v2335 = vpop.f32.mrb[0].mxu0
        %v2336 = vadd.f32 %v2241, %v2335
        %v2337 = vpop.f32.mrb[0].mxu0
        %2338 = vmatprep.mubr.bf16.mxu0 0
        %2339 = vmatmul.mubr.bf16.gmra.mrb[0].mxu0 %v2243
        %v2340 = vpop.f32.mrb[0].mxu0
        %v2341 = vadd.f32 %v2241, %v2340
        %v2342 = vpop.f32.mrb[0].mxu0
        %v2343 = vpop.f32.mrb[0].mxu0
        %v2344 = vadd.f32 %v2241, %v2343
        %v2345 = vpop.f32.mrb[0].mxu0
        %2346 = vmatprep.mubr.bf16.mxu0 0
        %2347 = vmatmul.mubr.bf16.gmra.mrb[0].mxu0 %v2244
        %v2348 = vpop.f32.mrb[0].mxu0
        %v2349 = vadd.f32 %v2241, %v2348
        %v2350 = vpop.f32.mrb[0].mxu0
        %v2351 = vpop.f32.mrb[0].mxu0
        %v2352 = vadd.f32 %v2241, %v2351
        %v2353 = vpop.f32.mrb[0].mxu0
        %2354 = vmatprep.mubr.bf16.mxu0 0
        %2355 = vmatmul.mubr.bf16.gmra.mrb[0].mxu0 %v2245
        %v2356 = vpop.f32.mrb[0].mxu0
        %v2357 = vadd.f32 %v2241, %v2356
        %v2358 = vpop.f32.mrb[0].mxu0
        %v2359 = vpop.f32.mrb[0].mxu0
        %v2360 = vadd.f32 %v2241, %v2359
        %v2361 = vpop.f32.mrb[0].mxu0
        %2362 = vmatprep.mubr.bf16.mxu0 0
        %2363 = vmatmul.mubr.bf16.gmra.mrb[0].mxu0 %v2246
        %v2364 = vpop.f32.mrb[0].mxu0
        %v2365 = vadd.f32 %v2241, %v2364
        %v2366 = vpop.f32.mrb[0].mxu0
        %v2367 = vpop.f32.mrb[0].mxu0
        %v2368 = vadd.f32 %v2241, %v2367
        %v2369 = vpop.f32.mrb[0].mxu0
        %2370 = vmatprep.mubr.bf16.mxu0 0
        %2371 = vmatmul.mubr.bf16.gmra.mrb[0].mxu0 %v2247
        %v2372 = vpop.f32.mrb[0].mxu0
        %v2373 = vadd.f32 %v2241, %v2372
        %v2374 = vpop.f32.mrb[0].mxu0
        %v2375 = vpop.f32.mrb[0].mxu0
        %v2376 = vadd.f32 %v2241, %v2375
        %v2377 = vpop.f32.mrb[0].mxu0
        %2378 = vmatprep.mubr.bf16.mxu0 0
        %2379 = vmatmul.mubr.bf16.gmra.mrb[0].mxu0 %v2248
        %v2380 = vpop.f32.mrb[0].mxu0
        %v2381 = vadd.f32 %v2241, %v2380
        %v2382 = vpop.f32.mrb[0].mxu0
        %v2383 = vpop.f32.mrb[0].mxu0
        %v2384 = vadd.f32 %v2241, %v2383
        %v2385 = vpop.f32.mrb[0].mxu0
        %2386 = vmatprep.mubr.bf16.mxu0 0
        %2387 = vmatmul.mubr.bf16.gmra.mrb[0].mxu0 %v2249
        %v2388 = vpop.f32.mrb[0].mxu0
        %v2389 = vadd.f32 %v2241, %v2388
        %v2390 = vpop.f32.mrb[0].mxu0
        %v2391 = vpop.f32.mrb[0].mxu0
        %v2392 = vadd.f32 %v2241, %v2391
        %v2393 = vpop.f32.mrb[0].mxu0
        %2394 = vdwg.mxu0
        %v2395 = vmul.f32 %v2333, 0.01
        %v2396 = vmul.f32 %v2336, 0.01
        %v2397 = vmul.f32 %v2341, 0.01
        %v2398 = vmul.f32 %v2344, 0.01
        %v2399 = vmul.f32 %v2349, 0.01
        %v2400 = vmul.f32 %v2352, 0.01
        %v2401 = vmul.f32 %v2357, 0.01
        %v2402 = vmul.f32 %v2360, 0.01
        %v2403 = vmul.f32 %v2365, 0.01
        %v2404 = vmul.f32 %v2368, 0.01
        %v2405 = vmul.f32 %v2373, 0.01
        %v2406 = vmul.f32 %v2376, 0.01
        %v2407 = vmul.f32 %v2381, 0.01
        %v2408 = vmul.f32 %v2384, 0.01
        %v2409 = vmul.f32 %v2389, 0.01
        %v2410 = vmul.f32 %v2392, 0.01
        %v2411 = vmax.f32 %v2333, %v2395
        %v2412 = vmax.f32 %v2336, %v2396
        %v2413 = vmax.f32 %v2341, %v2397
        %v2414 = vmax.f32 %v2344, %v2398
        %v2415 = vmax.f32 %v2349, %v2399
        %v2416 = vmax.f32 %v2352, %v2400
        %v2417 = vmax.f32 %v2357, %v2401
        %v2418 = vmax.f32 %v2360, %v2402
        %v2419 = vmax.f32 %v2365, %v2403
        %v2420 = vmax.f32 %v2368, %v2404
        %v2421 = vmax.f32 %v2373, %v2405
        %v2422 = vmax.f32 %v2376, %v2406
        %v2423 = vmax.f32 %v2381, %v2407
        %v2424 = vmax.f32 %v2384, %v2408
        %v2425 = vmax.f32 %v2389, %v2409
        %v2426 = vmax.f32 %v2392, %v2410
        %v2427 = vld [vmem:[#allocation5 + $0xa00] sm:$0xf]
        %v2428 = vld [vmem:[#allocation5 + $0xa10] sm:$0xf]
        %v2429 = vld [vmem:[#allocation5 + $0xa20] sm:$0xf]
        %v2430 = vld [vmem:[#allocation5 + $0xa30] sm:$0xf]
        %v2431 = vld [vmem:[#allocation5 + $0xa40] sm:$0xf]
        %v2432 = vld [vmem:[#allocation5 + $0xa50] sm:$0xf]
        %v2433 = vld [vmem:[#allocation5 + $0xa60] sm:$0xf]
        %v2434 = vld [vmem:[#allocation5 + $0xa70] sm:$0xf]
        %v2435 = vld [vmem:[#allocation5 + $0xa80] sm:$0xf]
        %v2436 = vld [vmem:[#allocation5 + $0xa90] sm:$0xf]
        %v2437 = vld [vmem:[#allocation5 + $0xaa0] sm:$0xf]
        %v2438 = vld [vmem:[#allocation5 + $0xab0] sm:$0xf]
        %v2439 = vld [vmem:[#allocation5 + $0xac0] sm:$0xf]
        %v2440 = vld [vmem:[#allocation5 + $0xad0] sm:$0xf]
        %v2441 = vld [vmem:[#allocation5 + $0xae0] sm:$0xf]
        %v2442 = vld [vmem:[#allocation5 + $0xaf0] sm:$0xf]
        %v2443 = vld [vmem:[#allocation7 + $0x5] ss:$0 sm:$0xff]
        %v2444 = vpack.c.bf16 %v2412, %v2411
        %v2445 = vpack.c.bf16 %v2414, %v2413
        %v2446 = vpack.c.bf16 %v2416, %v2415
        %v2447 = vpack.c.bf16 %v2418, %v2417
        %v2448 = vpack.c.bf16 %v2420, %v2419
        %v2449 = vpack.c.bf16 %v2422, %v2421
        %v2450 = vpack.c.bf16 %v2424, %v2423
        %v2451 = vpack.c.bf16 %v2426, %v2425
        %v2468 = vunpack.c.l.b16 %v2427
        %v2469 = vunpack.c.l.b16 %v2428
        %v2470 = vunpack.c.l.b16 %v2429
        %v2471 = vunpack.c.l.b16 %v2430
        %v2472 = vunpack.c.l.b16 %v2431
        %v2473 = vunpack.c.l.b16 %v2432
        %v2474 = vunpack.c.l.b16 %v2433
        %v2475 = vunpack.c.l.b16 %v2434
        %v2476 = vunpack.c.l.b16 %v2435
        %v2477 = vunpack.c.l.b16 %v2436
        %v2478 = vunpack.c.l.b16 %v2437
        %v2479 = vunpack.c.l.b16 %v2438
        %v2480 = vunpack.c.l.b16 %v2439
        %v2481 = vunpack.c.l.b16 %v2440
        %v2482 = vunpack.c.l.b16 %v2441
        %v2483 = vunpack.c.l.b16 %v2442
        %v2484 = vpack.c.b16 %v2469, %v2468
        %v2485 = vpack.c.b16 %v2471, %v2470
        %v2486 = vpack.c.b16 %v2473, %v2472
        %v2487 = vpack.c.b16 %v2475, %v2474
        %v2488 = vpack.c.b16 %v2477, %v2476
        %v2489 = vpack.c.b16 %v2479, %v2478
        %v2490 = vpack.c.b16 %v2481, %v2480
        %v2491 = vpack.c.b16 %v2483, %v2482
        %2500 = vmatprep.subr.bf16.mxu0 0
        %2501 = vmatpush1.bf16.msra.mxu0 %v2484
        %2502 = vmatprep.subr.bf16.mxu0 0
        %2503 = vmatpush1.bf16.msra.mxu0 %v2485
        %2504 = vmatprep.subr.bf16.mxu0 0
        %2505 = vmatpush1.bf16.msra.mxu0 %v2486
        %2506 = vmatprep.subr.bf16.mxu0 0
        %2507 = vmatpush1.bf16.msra.mxu0 %v2487
        %2508 = vmatprep.subr.bf16.mxu0 0
        %2509 = vmatpush1.bf16.msra.mxu0 %v2488
        %2510 = vmatprep.subr.bf16.mxu0 0
        %2511 = vmatpush1.bf16.msra.mxu0 %v2489
        %2512 = vmatprep.subr.bf16.mxu0 0
        %2513 = vmatpush1.bf16.msra.mxu0 %v2490
        %2514 = vmatprep.subr.bf16.mxu0 0
        %2515 = vmatpush1.bf16.msra.mxu0 %v2491
        %2516 = vmatprep.subr.bf16.mxu0 0
        %2517 = vmatpush1.bf16.msra.mxu0 0
        %2518 = vmatprep.subr.bf16.mxu0 0
        %2519 = vmatpush1.bf16.msra.mxu0 0
        %2520 = vmatprep.subr.bf16.mxu0 0
        %2521 = vmatpush1.bf16.msra.mxu0 0
        %2522 = vmatprep.subr.bf16.mxu0 0
        %2523 = vmatpush1.bf16.msra.mxu0 0
        %2524 = vmatprep.subr.bf16.mxu0 0
        %2525 = vmatpush1.bf16.msra.mxu0 0
        %2526 = vmatprep.subr.bf16.mxu0 0
        %2527 = vmatpush1.bf16.msra.mxu0 0
        %2528 = vmatprep.subr.bf16.mxu0 0
        %2529 = vmatpush1.bf16.msra.mxu0 0
        %2530 = vmatprep.subr.bf16.mxu0 0
        %2531 = vmatpush1.bf16.msra.mxu0 0
        %2532 = vmatprep.mubr.bf16.mxu0 0
        %2533 = vmatmul.mubr.bf16.gmra.mrb[0].mxu0 %v2444
        %v2534 = vpop.f32.mrb[0].mxu0
        %v2535 = vadd.f32 %v2443, %v2534
        %v2536 = vpop.f32.mrb[0].mxu0
        %v2537 = vpop.f32.mrb[0].mxu0
        %v2538 = vadd.f32 %v2443, %v2537
        %v2539 = vpop.f32.mrb[0].mxu0
        %2540 = vmatprep.mubr.bf16.mxu0 0
        %2541 = vmatmul.mubr.bf16.gmra.mrb[0].mxu0 %v2445
        %v2542 = vpop.f32.mrb[0].mxu0
        %v2543 = vadd.f32 %v2443, %v2542
        %v2544 = vpop.f32.mrb[0].mxu0
        %v2545 = vpop.f32.mrb[0].mxu0
        %v2546 = vadd.f32 %v2443, %v2545
        %v2547 = vpop.f32.mrb[0].mxu0
        %2548 = vmatprep.mubr.bf16.mxu0 0
        %2549 = vmatmul.mubr.bf16.gmra.mrb[0].mxu0 %v2446
        %v2550 = vpop.f32.mrb[0].mxu0
        %v2551 = vadd.f32 %v2443, %v2550
        %v2552 = vpop.f32.mrb[0].mxu0
        %v2553 = vpop.f32.mrb[0].mxu0
        %v2554 = vadd.f32 %v2443, %v2553
        %v2555 = vpop.f32.mrb[0].mxu0
        %2556 = vmatprep.mubr.bf16.mxu0 0
        %2557 = vmatmul.mubr.bf16.gmra.mrb[0].mxu0 %v2447
        %v2558 = vpop.f32.mrb[0].mxu0
        %v2559 = vadd.f32 %v2443, %v2558
        %v2560 = vpop.f32.mrb[0].mxu0
        %v2561 = vpop.f32.mrb[0].mxu0
        %v2562 = vadd.f32 %v2443, %v2561
        %v2563 = vpop.f32.mrb[0].mxu0
        %2564 = vmatprep.mubr.bf16.mxu0 0
        %2565 = vmatmul.mubr.bf16.gmra.mrb[0].mxu0 %v2448
        %v2566 = vpop.f32.mrb[0].mxu0
        %v2567 = vadd.f32 %v2443, %v2566
        %v2568 = vpop.f32.mrb[0].mxu0
        %v2569 = vpop.f32.mrb[0].mxu0
        %v2570 = vadd.f32 %v2443, %v2569
        %v2571 = vpop.f32.mrb[0].mxu0
        %2572 = vmatprep.mubr.bf16.mxu0 0
        %2573 = vmatmul.mubr.bf16.gmra.mrb[0].mxu0 %v2449
        %v2574 = vpop.f32.mrb[0].mxu0
        %v2575 = vadd.f32 %v2443, %v2574
        %v2576 = vpop.f32.mrb[0].mxu0
        %v2577 = vpop.f32.mrb[0].mxu0
        %v2578 = vadd.f32 %v2443, %v2577
        %v2579 = vpop.f32.mrb[0].mxu0
        %2580 = vmatprep.mubr.bf16.mxu0 0
        %2581 = vmatmul.mubr.bf16.gmra.mrb[0].mxu0 %v2450
        %v2582 = vpop.f32.mrb[0].mxu0
        %v2583 = vadd.f32 %v2443, %v2582
        %v2584 = vpop.f32.mrb[0].mxu0
        %v2585 = vpop.f32.mrb[0].mxu0
        %v2586 = vadd.f32 %v2443, %v2585
        %v2587 = vpop.f32.mrb[0].mxu0
        %2588 = vmatprep.mubr.bf16.mxu0 0
        %2589 = vmatmul.mubr.bf16.gmra.mrb[0].mxu0 %v2451
        %v2590 = vpop.f32.mrb[0].mxu0
        %v2591 = vadd.f32 %v2443, %v2590
        %v2592 = vpop.f32.mrb[0].mxu0
        %v2593 = vpop.f32.mrb[0].mxu0
        %v2594 = vadd.f32 %v2443, %v2593
        %v2595 = vpop.f32.mrb[0].mxu0
        %2596 = vdwg.mxu0
        %v2597 = vmul.f32 %v2535, 0.01
        %v2598 = vmul.f32 %v2538, 0.01
        %v2599 = vmul.f32 %v2543, 0.01
        %v2600 = vmul.f32 %v2546, 0.01
        %v2601 = vmul.f32 %v2551, 0.01
        %v2602 = vmul.f32 %v2554, 0.01
        %v2603 = vmul.f32 %v2559, 0.01
        %v2604 = vmul.f32 %v2562, 0.01
        %v2605 = vmul.f32 %v2567, 0.01
        %v2606 = vmul.f32 %v2570, 0.01
        %v2607 = vmul.f32 %v2575, 0.01
        %v2608 = vmul.f32 %v2578, 0.01
        %v2609 = vmul.f32 %v2583, 0.01
        %v2610 = vmul.f32 %v2586, 0.01
        %v2611 = vmul.f32 %v2591, 0.01
        %v2612 = vmul.f32 %v2594, 0.01
        %v2613 = vmax.f32 %v2535, %v2597
        %v2614 = vmax.f32 %v2538, %v2598
        %v2615 = vmax.f32 %v2543, %v2599
        %v2616 = vmax.f32 %v2546, %v2600
        %v2617 = vmax.f32 %v2551, %v2601
        %v2618 = vmax.f32 %v2554, %v2602
        %v2619 = vmax.f32 %v2559, %v2603
        %v2620 = vmax.f32 %v2562, %v2604
        %v2621 = vmax.f32 %v2567, %v2605
        %v2622 = vmax.f32 %v2570, %v2606
        %v2623 = vmax.f32 %v2575, %v2607
        %v2624 = vmax.f32 %v2578, %v2608
        %v2625 = vmax.f32 %v2583, %v2609
        %v2626 = vmax.f32 %v2586, %v2610
        %v2627 = vmax.f32 %v2591, %v2611
        %v2628 = vmax.f32 %v2594, %v2612
        %v2629 = vld [vmem:[#allocation5 + $0xb00] sm:$0xf]
        %v2630 = vld [vmem:[#allocation5 + $0xb10] sm:$0xf]
        %v2631 = vld [vmem:[#allocation5 + $0xb20] sm:$0xf]
        %v2632 = vld [vmem:[#allocation5 + $0xb30] sm:$0xf]
        %v2633 = vld [vmem:[#allocation5 + $0xb40] sm:$0xf]
        %v2634 = vld [vmem:[#allocation5 + $0xb50] sm:$0xf]
        %v2635 = vld [vmem:[#allocation5 + $0xb60] sm:$0xf]
        %v2636 = vld [vmem:[#allocation5 + $0xb70] sm:$0xf]
        %v2637 = vld [vmem:[#allocation5 + $0xb80] sm:$0xf]
        %v2638 = vld [vmem:[#allocation5 + $0xb90] sm:$0xf]
        %v2639 = vld [vmem:[#allocation5 + $0xba0] sm:$0xf]
        %v2640 = vld [vmem:[#allocation5 + $0xbb0] sm:$0xf]
        %v2641 = vld [vmem:[#allocation5 + $0xbc0] sm:$0xf]
        %v2642 = vld [vmem:[#allocation5 + $0xbd0] sm:$0xf]
        %v2643 = vld [vmem:[#allocation5 + $0xbe0] sm:$0xf]
        %v2644 = vld [vmem:[#allocation5 + $0xbf0] sm:$0xf]
        %v2645 = vld [vmem:[#allocation7 + $0x6] ss:$0 sm:$0xff]
        %v2646 = vpack.c.bf16 %v2614, %v2613
        %v2647 = vpack.c.bf16 %v2616, %v2615
        %v2648 = vpack.c.bf16 %v2618, %v2617
        %v2649 = vpack.c.bf16 %v2620, %v2619
        %v2650 = vpack.c.bf16 %v2622, %v2621
        %v2651 = vpack.c.bf16 %v2624, %v2623
        %v2652 = vpack.c.bf16 %v2626, %v2625
        %v2653 = vpack.c.bf16 %v2628, %v2627
        %v2670 = vunpack.c.l.b16 %v2629
        %v2671 = vunpack.c.l.b16 %v2630
        %v2672 = vunpack.c.l.b16 %v2631
        %v2673 = vunpack.c.l.b16 %v2632
        %v2674 = vunpack.c.l.b16 %v2633
        %v2675 = vunpack.c.l.b16 %v2634
        %v2676 = vunpack.c.l.b16 %v2635
        %v2677 = vunpack.c.l.b16 %v2636
        %v2678 = vunpack.c.l.b16 %v2637
        %v2679 = vunpack.c.l.b16 %v2638
        %v2680 = vunpack.c.l.b16 %v2639
        %v2681 = vunpack.c.l.b16 %v2640
        %v2682 = vunpack.c.l.b16 %v2641
        %v2683 = vunpack.c.l.b16 %v2642
        %v2684 = vunpack.c.l.b16 %v2643
        %v2685 = vunpack.c.l.b16 %v2644
        %v2686 = vpack.c.b16 %v2671, %v2670
        %v2687 = vpack.c.b16 %v2673, %v2672
        %v2688 = vpack.c.b16 %v2675, %v2674
        %v2689 = vpack.c.b16 %v2677, %v2676
        %v2690 = vpack.c.b16 %v2679, %v2678
        %v2691 = vpack.c.b16 %v2681, %v2680
        %v2692 = vpack.c.b16 %v2683, %v2682
        %v2693 = vpack.c.b16 %v2685, %v2684
        %2702 = vmatprep.subr.bf16.mxu0 0
        %2703 = vmatpush1.bf16.msra.mxu0 %v2686
        %2704 = vmatprep.subr.bf16.mxu0 0
        %2705 = vmatpush1.bf16.msra.mxu0 %v2687
        %2706 = vmatprep.subr.bf16.mxu0 0
        %2707 = vmatpush1.bf16.msra.mxu0 %v2688
        %2708 = vmatprep.subr.bf16.mxu0 0
        %2709 = vmatpush1.bf16.msra.mxu0 %v2689
        %2710 = vmatprep.subr.bf16.mxu0 0
        %2711 = vmatpush1.bf16.msra.mxu0 %v2690
        %2712 = vmatprep.subr.bf16.mxu0 0
        %2713 = vmatpush1.bf16.msra.mxu0 %v2691
        %2714 = vmatprep.subr.bf16.mxu0 0
        %2715 = vmatpush1.bf16.msra.mxu0 %v2692
        %2716 = vmatprep.subr.bf16.mxu0 0
        %2717 = vmatpush1.bf16.msra.mxu0 %v2693
        %2718 = vmatprep.subr.bf16.mxu0 0
        %2719 = vmatpush1.bf16.msra.mxu0 0
        %2720 = vmatprep.subr.bf16.mxu0 0
        %2721 = vmatpush1.bf16.msra.mxu0 0
        %2722 = vmatprep.subr.bf16.mxu0 0
        %2723 = vmatpush1.bf16.msra.mxu0 0
        %2724 = vmatprep.subr.bf16.mxu0 0
        %2725 = vmatpush1.bf16.msra.mxu0 0
        %2726 = vmatprep.subr.bf16.mxu0 0
        %2727 = vmatpush1.bf16.msra.mxu0 0
        %2728 = vmatprep.subr.bf16.mxu0 0
        %2729 = vmatpush1.bf16.msra.mxu0 0
        %2730 = vmatprep.subr.bf16.mxu0 0
        %2731 = vmatpush1.bf16.msra.mxu0 0
        %2732 = vmatprep.subr.bf16.mxu0 0
        %2733 = vmatpush1.bf16.msra.mxu0 0
        %2734 = vmatprep.mubr.bf16.mxu0 0
        %2735 = vmatmul.mubr.bf16.gmra.mrb[0].mxu0 %v2646
        %v2736 = vpop.f32.mrb[0].mxu0
        %v2737 = vadd.f32 %v2645, %v2736
        %v2738 = vpop.f32.mrb[0].mxu0
        %v2739 = vpop.f32.mrb[0].mxu0
        %v2740 = vadd.f32 %v2645, %v2739
        %v2741 = vpop.f32.mrb[0].mxu0
        %2742 = vmatprep.mubr.bf16.mxu0 0
        %2743 = vmatmul.mubr.bf16.gmra.mrb[0].mxu0 %v2647
        %v2744 = vpop.f32.mrb[0].mxu0
        %v2745 = vadd.f32 %v2645, %v2744
        %v2746 = vpop.f32.mrb[0].mxu0
        %v2747 = vpop.f32.mrb[0].mxu0
        %v2748 = vadd.f32 %v2645, %v2747
        %v2749 = vpop.f32.mrb[0].mxu0
        %2750 = vmatprep.mubr.bf16.mxu0 0
        %2751 = vmatmul.mubr.bf16.gmra.mrb[0].mxu0 %v2648
        %v2752 = vpop.f32.mrb[0].mxu0
        %v2753 = vadd.f32 %v2645, %v2752
        %v2754 = vpop.f32.mrb[0].mxu0
        %v2755 = vpop.f32.mrb[0].mxu0
        %v2756 = vadd.f32 %v2645, %v2755
        %v2757 = vpop.f32.mrb[0].mxu0
        %2758 = vmatprep.mubr.bf16.mxu0 0
        %2759 = vmatmul.mubr.bf16.gmra.mrb[0].mxu0 %v2649
        %v2760 = vpop.f32.mrb[0].mxu0
        %v2761 = vadd.f32 %v2645, %v2760
        %v2762 = vpop.f32.mrb[0].mxu0
        %v2763 = vpop.f32.mrb[0].mxu0
        %v2764 = vadd.f32 %v2645, %v2763
        %v2765 = vpop.f32.mrb[0].mxu0
        %2766 = vmatprep.mubr.bf16.mxu0 0
        %2767 = vmatmul.mubr.bf16.gmra.mrb[0].mxu0 %v2650
        %v2768 = vpop.f32.mrb[0].mxu0
        %v2769 = vadd.f32 %v2645, %v2768
        %v2770 = vpop.f32.mrb[0].mxu0
        %v2771 = vpop.f32.mrb[0].mxu0
        %v2772 = vadd.f32 %v2645, %v2771
        %v2773 = vpop.f32.mrb[0].mxu0
        %2774 = vmatprep.mubr.bf16.mxu0 0
        %2775 = vmatmul.mubr.bf16.gmra.mrb[0].mxu0 %v2651
        %v2776 = vpop.f32.mrb[0].mxu0
        %v2777 = vadd.f32 %v2645, %v2776
        %v2778 = vpop.f32.mrb[0].mxu0
        %v2779 = vpop.f32.mrb[0].mxu0
        %v2780 = vadd.f32 %v2645, %v2779
        %v2781 = vpop.f32.mrb[0].mxu0
        %2782 = vmatprep.mubr.bf16.mxu0 0
        %2783 = vmatmul.mubr.bf16.gmra.mrb[0].mxu0 %v2652
        %v2784 = vpop.f32.mrb[0].mxu0
        %v2785 = vadd.f32 %v2645, %v2784
        %v2786 = vpop.f32.mrb[0].mxu0
        %v2787 = vpop.f32.mrb[0].mxu0
        %v2788 = vadd.f32 %v2645, %v2787
        %v2789 = vpop.f32.mrb[0].mxu0
        %2790 = vmatprep.mubr.bf16.mxu0 0
        %2791 = vmatmul.mubr.bf16.gmra.mrb[0].mxu0 %v2653
        %v2792 = vpop.f32.mrb[0].mxu0
        %v2793 = vadd.f32 %v2645, %v2792
        %v2794 = vpop.f32.mrb[0].mxu0
        %v2795 = vpop.f32.mrb[0].mxu0
        %v2796 = vadd.f32 %v2645, %v2795
        %v2797 = vpop.f32.mrb[0].mxu0
        %2798 = vdwg.mxu0
        %v2799 = vmul.f32 %v2737, 0.01
        %v2800 = vmul.f32 %v2740, 0.01
        %v2801 = vmul.f32 %v2745, 0.01
        %v2802 = vmul.f32 %v2748, 0.01
        %v2803 = vmul.f32 %v2753, 0.01
        %v2804 = vmul.f32 %v2756, 0.01
        %v2805 = vmul.f32 %v2761, 0.01
        %v2806 = vmul.f32 %v2764, 0.01
        %v2807 = vmul.f32 %v2769, 0.01
        %v2808 = vmul.f32 %v2772, 0.01
        %v2809 = vmul.f32 %v2777, 0.01
        %v2810 = vmul.f32 %v2780, 0.01
        %v2811 = vmul.f32 %v2785, 0.01
        %v2812 = vmul.f32 %v2788, 0.01
        %v2813 = vmul.f32 %v2793, 0.01
        %v2814 = vmul.f32 %v2796, 0.01
        %v2815 = vmax.f32 %v2737, %v2799
        %v2816 = vmax.f32 %v2740, %v2800
        %v2817 = vmax.f32 %v2745, %v2801
        %v2818 = vmax.f32 %v2748, %v2802
        %v2819 = vmax.f32 %v2753, %v2803
        %v2820 = vmax.f32 %v2756, %v2804
        %v2821 = vmax.f32 %v2761, %v2805
        %v2822 = vmax.f32 %v2764, %v2806
        %v2823 = vmax.f32 %v2769, %v2807
        %v2824 = vmax.f32 %v2772, %v2808
        %v2825 = vmax.f32 %v2777, %v2809
        %v2826 = vmax.f32 %v2780, %v2810
        %v2827 = vmax.f32 %v2785, %v2811
        %v2828 = vmax.f32 %v2788, %v2812
        %v2829 = vmax.f32 %v2793, %v2813
        %v2830 = vmax.f32 %v2796, %v2814
        %v2831 = vld [vmem:[#allocation5 + $0xc00] sm:$0xf]
        %v2832 = vld [vmem:[#allocation5 + $0xc10] sm:$0xf]
        %v2833 = vld [vmem:[#allocation5 + $0xc20] sm:$0xf]
        %v2834 = vld [vmem:[#allocation5 + $0xc30] sm:$0xf]
        %v2835 = vld [vmem:[#allocation5 + $0xc40] sm:$0xf]
        %v2836 = vld [vmem:[#allocation5 + $0xc50] sm:$0xf]
        %v2837 = vld [vmem:[#allocation5 + $0xc60] sm:$0xf]
        %v2838 = vld [vmem:[#allocation5 + $0xc70] sm:$0xf]
        %v2839 = vld [vmem:[#allocation5 + $0xc80] sm:$0xf]
        %v2840 = vld [vmem:[#allocation5 + $0xc90] sm:$0xf]
        %v2841 = vld [vmem:[#allocation5 + $0xca0] sm:$0xf]
        %v2842 = vld [vmem:[#allocation5 + $0xcb0] sm:$0xf]
        %v2843 = vld [vmem:[#allocation5 + $0xcc0] sm:$0xf]
        %v2844 = vld [vmem:[#allocation5 + $0xcd0] sm:$0xf]
        %v2845 = vld [vmem:[#allocation5 + $0xce0] sm:$0xf]
        %v2846 = vld [vmem:[#allocation5 + $0xcf0] sm:$0xf]
        %v2847 = vld [vmem:[#allocation7 + $0x7] ss:$0 sm:$0xff]
        %v2848 = vpack.c.bf16 %v2816, %v2815
        %v2849 = vpack.c.bf16 %v2818, %v2817
        %v2850 = vpack.c.bf16 %v2820, %v2819
        %v2851 = vpack.c.bf16 %v2822, %v2821
        %v2852 = vpack.c.bf16 %v2824, %v2823
        %v2853 = vpack.c.bf16 %v2826, %v2825
        %v2854 = vpack.c.bf16 %v2828, %v2827
        %v2855 = vpack.c.bf16 %v2830, %v2829
        %v2872 = vunpack.c.l.b16 %v2831
        %v2873 = vunpack.c.l.b16 %v2832
        %v2874 = vunpack.c.l.b16 %v2833
        %v2875 = vunpack.c.l.b16 %v2834
        %v2876 = vunpack.c.l.b16 %v2835
        %v2877 = vunpack.c.l.b16 %v2836
        %v2878 = vunpack.c.l.b16 %v2837
        %v2879 = vunpack.c.l.b16 %v2838
        %v2880 = vunpack.c.l.b16 %v2839
        %v2881 = vunpack.c.l.b16 %v2840
        %v2882 = vunpack.c.l.b16 %v2841
        %v2883 = vunpack.c.l.b16 %v2842
        %v2884 = vunpack.c.l.b16 %v2843
        %v2885 = vunpack.c.l.b16 %v2844
        %v2886 = vunpack.c.l.b16 %v2845
        %v2887 = vunpack.c.l.b16 %v2846
        %v2888 = vpack.c.b16 %v2873, %v2872
        %v2889 = vpack.c.b16 %v2875, %v2874
        %v2890 = vpack.c.b16 %v2877, %v2876
        %v2891 = vpack.c.b16 %v2879, %v2878
        %v2892 = vpack.c.b16 %v2881, %v2880
        %v2893 = vpack.c.b16 %v2883, %v2882
        %v2894 = vpack.c.b16 %v2885, %v2884
        %v2895 = vpack.c.b16 %v2887, %v2886
        %2904 = vmatprep.subr.bf16.mxu0 0
        %2905 = vmatpush1.bf16.msra.mxu0 %v2888
        %2906 = vmatprep.subr.bf16.mxu0 0
        %2907 = vmatpush1.bf16.msra.mxu0 %v2889
        %2908 = vmatprep.subr.bf16.mxu0 0
        %2909 = vmatpush1.bf16.msra.mxu0 %v2890
        %2910 = vmatprep.subr.bf16.mxu0 0
        %2911 = vmatpush1.bf16.msra.mxu0 %v2891
        %2912 = vmatprep.subr.bf16.mxu0 0
        %2913 = vmatpush1.bf16.msra.mxu0 %v2892
        %2914 = vmatprep.subr.bf16.mxu0 0
        %2915 = vmatpush1.bf16.msra.mxu0 %v2893
        %2916 = vmatprep.subr.bf16.mxu0 0
        %2917 = vmatpush1.bf16.msra.mxu0 %v2894
        %2918 = vmatprep.subr.bf16.mxu0 0
        %2919 = vmatpush1.bf16.msra.mxu0 %v2895
        %2920 = vmatprep.subr.bf16.mxu0 0
        %2921 = vmatpush1.bf16.msra.mxu0 0
        %2922 = vmatprep.subr.bf16.mxu0 0
        %2923 = vmatpush1.bf16.msra.mxu0 0
        %2924 = vmatprep.subr.bf16.mxu0 0
        %2925 = vmatpush1.bf16.msra.mxu0 0
        %2926 = vmatprep.subr.bf16.mxu0 0
        %2927 = vmatpush1.bf16.msra.mxu0 0
        %2928 = vmatprep.subr.bf16.mxu0 0
        %2929 = vmatpush1.bf16.msra.mxu0 0
        %2930 = vmatprep.subr.bf16.mxu0 0
        %2931 = vmatpush1.bf16.msra.mxu0 0
        %2932 = vmatprep.subr.bf16.mxu0 0
        %2933 = vmatpush1.bf16.msra.mxu0 0
        %2934 = vmatprep.subr.bf16.mxu0 0
        %2935 = vmatpush1.bf16.msra.mxu0 0
        %2936 = vmatprep.mubr.bf16.mxu0 0
        %2937 = vmatmul.mubr.bf16.gmra.mrb[0].mxu0 %v2848
        %v2938 = vpop.f32.mrb[0].mxu0
        %v2939 = vadd.f32 %v2847, %v2938
        %v2940 = vpop.f32.mrb[0].mxu0
        %v2941 = vpop.f32.mrb[0].mxu0
        %v2942 = vadd.f32 %v2847, %v2941
        %v2943 = vpop.f32.mrb[0].mxu0
        %2944 = vmatprep.mubr.bf16.mxu0 0
        %2945 = vmatmul.mubr.bf16.gmra.mrb[0].mxu0 %v2849
        %v2946 = vpop.f32.mrb[0].mxu0
        %v2947 = vadd.f32 %v2847, %v2946
        %v2948 = vpop.f32.mrb[0].mxu0
        %v2949 = vpop.f32.mrb[0].mxu0
        %v2950 = vadd.f32 %v2847, %v2949
        %v2951 = vpop.f32.mrb[0].mxu0
        %2952 = vmatprep.mubr.bf16.mxu0 0
        %2953 = vmatmul.mubr.bf16.gmra.mrb[0].mxu0 %v2850
        %v2954 = vpop.f32.mrb[0].mxu0
        %v2955 = vadd.f32 %v2847, %v2954
        %v2956 = vpop.f32.mrb[0].mxu0
        %v2957 = vpop.f32.mrb[0].mxu0
        %v2958 = vadd.f32 %v2847, %v2957
        %v2959 = vpop.f32.mrb[0].mxu0
        %2960 = vmatprep.mubr.bf16.mxu0 0
        %2961 = vmatmul.mubr.bf16.gmra.mrb[0].mxu0 %v2851
        %v2962 = vpop.f32.mrb[0].mxu0
        %v2963 = vadd.f32 %v2847, %v2962
        %v2964 = vpop.f32.mrb[0].mxu0
        %v2965 = vpop.f32.mrb[0].mxu0
        %v2966 = vadd.f32 %v2847, %v2965
        %v2967 = vpop.f32.mrb[0].mxu0
        %2968 = vmatprep.mubr.bf16.mxu0 0
        %2969 = vmatmul.mubr.bf16.gmra.mrb[0].mxu0 %v2852
        %v2970 = vpop.f32.mrb[0].mxu0
        %v2971 = vadd.f32 %v2847, %v2970
        %v2972 = vpop.f32.mrb[0].mxu0
        %v2973 = vpop.f32.mrb[0].mxu0
        %v2974 = vadd.f32 %v2847, %v2973
        %v2975 = vpop.f32.mrb[0].mxu0
        %2976 = vmatprep.mubr.bf16.mxu0 0
        %2977 = vmatmul.mubr.bf16.gmra.mrb[0].mxu0 %v2853
        %v2978 = vpop.f32.mrb[0].mxu0
        %v2979 = vadd.f32 %v2847, %v2978
        %v2980 = vpop.f32.mrb[0].mxu0
        %v2981 = vpop.f32.mrb[0].mxu0
        %v2982 = vadd.f32 %v2847, %v2981
        %v2983 = vpop.f32.mrb[0].mxu0
        %2984 = vmatprep.mubr.bf16.mxu0 0
        %2985 = vmatmul.mubr.bf16.gmra.mrb[0].mxu0 %v2854
        %v2986 = vpop.f32.mrb[0].mxu0
        %v2987 = vadd.f32 %v2847, %v2986
        %v2988 = vpop.f32.mrb[0].mxu0
        %v2989 = vpop.f32.mrb[0].mxu0
        %v2990 = vadd.f32 %v2847, %v2989
        %v2991 = vpop.f32.mrb[0].mxu0
        %2992 = vmatprep.mubr.bf16.mxu0 0
        %2993 = vmatmul.mubr.bf16.gmra.mrb[0].mxu0 %v2855
        %v2994 = vpop.f32.mrb[0].mxu0
        %v2995 = vadd.f32 %v2847, %v2994
        %v2996 = vpop.f32.mrb[0].mxu0
        %v2997 = vpop.f32.mrb[0].mxu0
        %v2998 = vadd.f32 %v2847, %v2997
        %v2999 = vpop.f32.mrb[0].mxu0
        %3000 = vdwg.mxu0
        %v3001 = vmul.f32 %v2939, 0.01
        %v3002 = vmul.f32 %v2942, 0.01
        %v3003 = vmul.f32 %v2947, 0.01
        %v3004 = vmul.f32 %v2950, 0.01
        %v3005 = vmul.f32 %v2955, 0.01
        %v3006 = vmul.f32 %v2958, 0.01
        %v3007 = vmul.f32 %v2963, 0.01
        %v3008 = vmul.f32 %v2966, 0.01
        %v3009 = vmul.f32 %v2971, 0.01
        %v3010 = vmul.f32 %v2974, 0.01
        %v3011 = vmul.f32 %v2979, 0.01
        %v3012 = vmul.f32 %v2982, 0.01
        %v3013 = vmul.f32 %v2987, 0.01
        %v3014 = vmul.f32 %v2990, 0.01
        %v3015 = vmul.f32 %v2995, 0.01
        %v3016 = vmul.f32 %v2998, 0.01
        %v3017 = vmax.f32 %v2939, %v3001
        %v3018 = vmax.f32 %v2942, %v3002
        %v3019 = vmax.f32 %v2947, %v3003
        %v3020 = vmax.f32 %v2950, %v3004
        %v3021 = vmax.f32 %v2955, %v3005
        %v3022 = vmax.f32 %v2958, %v3006
        %v3023 = vmax.f32 %v2963, %v3007
        %v3024 = vmax.f32 %v2966, %v3008
        %v3025 = vmax.f32 %v2971, %v3009
        %v3026 = vmax.f32 %v2974, %v3010
        %v3027 = vmax.f32 %v2979, %v3011
        %v3028 = vmax.f32 %v2982, %v3012
        %v3029 = vmax.f32 %v2987, %v3013
        %v3030 = vmax.f32 %v2990, %v3014
        %v3031 = vmax.f32 %v2995, %v3015
        %v3032 = vmax.f32 %v2998, %v3016
        %v3033 = vld [vmem:[#allocation5 + $0xd00] sm:$0xf]
        %v3034 = vld [vmem:[#allocation5 + $0xd10] sm:$0xf]
        %v3035 = vld [vmem:[#allocation5 + $0xd20] sm:$0xf]
        %v3036 = vld [vmem:[#allocation5 + $0xd30] sm:$0xf]
        %v3037 = vld [vmem:[#allocation5 + $0xd40] sm:$0xf]
        %v3038 = vld [vmem:[#allocation5 + $0xd50] sm:$0xf]
        %v3039 = vld [vmem:[#allocation5 + $0xd60] sm:$0xf]
        %v3040 = vld [vmem:[#allocation5 + $0xd70] sm:$0xf]
        %v3041 = vld [vmem:[#allocation5 + $0xd80] sm:$0xf]
        %v3042 = vld [vmem:[#allocation5 + $0xd90] sm:$0xf]
        %v3043 = vld [vmem:[#allocation5 + $0xda0] sm:$0xf]
        %v3044 = vld [vmem:[#allocation5 + $0xdb0] sm:$0xf]
        %v3045 = vld [vmem:[#allocation5 + $0xdc0] sm:$0xf]
        %v3046 = vld [vmem:[#allocation5 + $0xdd0] sm:$0xf]
        %v3047 = vld [vmem:[#allocation5 + $0xde0] sm:$0xf]
        %v3048 = vld [vmem:[#allocation5 + $0xdf0] sm:$0xf]
        %v3049 = vld [vmem:[#allocation7 + $0x20] ss:$0 sm:$0xff]
        %v3050 = vpack.c.bf16 %v3018, %v3017
        %v3051 = vpack.c.bf16 %v3020, %v3019
        %v3052 = vpack.c.bf16 %v3022, %v3021
        %v3053 = vpack.c.bf16 %v3024, %v3023
        %v3054 = vpack.c.bf16 %v3026, %v3025
        %v3055 = vpack.c.bf16 %v3028, %v3027
        %v3056 = vpack.c.bf16 %v3030, %v3029
        %v3057 = vpack.c.bf16 %v3032, %v3031
        %v3074 = vunpack.c.l.b16 %v3033
        %v3075 = vunpack.c.l.b16 %v3034
        %v3076 = vunpack.c.l.b16 %v3035
        %v3077 = vunpack.c.l.b16 %v3036
        %v3078 = vunpack.c.l.b16 %v3037
        %v3079 = vunpack.c.l.b16 %v3038
        %v3080 = vunpack.c.l.b16 %v3039
        %v3081 = vunpack.c.l.b16 %v3040
        %v3082 = vunpack.c.l.b16 %v3041
        %v3083 = vunpack.c.l.b16 %v3042
        %v3084 = vunpack.c.l.b16 %v3043
        %v3085 = vunpack.c.l.b16 %v3044
        %v3086 = vunpack.c.l.b16 %v3045
        %v3087 = vunpack.c.l.b16 %v3046
        %v3088 = vunpack.c.l.b16 %v3047
        %v3089 = vunpack.c.l.b16 %v3048
        %v3090 = vpack.c.b16 %v3075, %v3074
        %v3091 = vpack.c.b16 %v3077, %v3076
        %v3092 = vpack.c.b16 %v3079, %v3078
        %v3093 = vpack.c.b16 %v3081, %v3080
        %v3094 = vpack.c.b16 %v3083, %v3082
        %v3095 = vpack.c.b16 %v3085, %v3084
        %v3096 = vpack.c.b16 %v3087, %v3086
        %v3097 = vpack.c.b16 %v3089, %v3088
        %3106 = vmatprep.subr.bf16.mxu0 0
        %3107 = vmatpush1.bf16.msra.mxu0 %v3090
        %3108 = vmatprep.subr.bf16.mxu0 0
        %3109 = vmatpush1.bf16.msra.mxu0 %v3091
        %3110 = vmatprep.subr.bf16.mxu0 0
        %3111 = vmatpush1.bf16.msra.mxu0 %v3092
        %3112 = vmatprep.subr.bf16.mxu0 0
        %3113 = vmatpush1.bf16.msra.mxu0 %v3093
        %3114 = vmatprep.subr.bf16.mxu0 0
        %3115 = vmatpush1.bf16.msra.mxu0 %v3094
        %3116 = vmatprep.subr.bf16.mxu0 0
        %3117 = vmatpush1.bf16.msra.mxu0 %v3095
        %3118 = vmatprep.subr.bf16.mxu0 0
        %3119 = vmatpush1.bf16.msra.mxu0 %v3096
        %3120 = vmatprep.subr.bf16.mxu0 0
        %3121 = vmatpush1.bf16.msra.mxu0 %v3097
        %3122 = vmatprep.subr.bf16.mxu0 0
        %3123 = vmatpush1.bf16.msra.mxu0 0
        %3124 = vmatprep.subr.bf16.mxu0 0
        %3125 = vmatpush1.bf16.msra.mxu0 0
        %3126 = vmatprep.subr.bf16.mxu0 0
        %3127 = vmatpush1.bf16.msra.mxu0 0
        %3128 = vmatprep.subr.bf16.mxu0 0
        %3129 = vmatpush1.bf16.msra.mxu0 0
        %3130 = vmatprep.subr.bf16.mxu0 0
        %3131 = vmatpush1.bf16.msra.mxu0 0
        %3132 = vmatprep.subr.bf16.mxu0 0
        %3133 = vmatpush1.bf16.msra.mxu0 0
        %3134 = vmatprep.subr.bf16.mxu0 0
        %3135 = vmatpush1.bf16.msra.mxu0 0
        %3136 = vmatprep.subr.bf16.mxu0 0
        %3137 = vmatpush1.bf16.msra.mxu0 0
        %3138 = vmatprep.mubr.bf16.mxu0 0
        %3139 = vmatmul.mubr.bf16.gmra.mrb[0].mxu0 %v3050
        %v3140 = vpop.f32.mrb[0].mxu0
        %v3141 = vadd.f32 %v3049, %v3140
        %v3142 = vpop.f32.mrb[0].mxu0
        %v3143 = vpop.f32.mrb[0].mxu0
        %v3144 = vadd.f32 %v3049, %v3143
        %v3145 = vpop.f32.mrb[0].mxu0
        %3146 = vmatprep.mubr.bf16.mxu0 0
        %3147 = vmatmul.mubr.bf16.gmra.mrb[0].mxu0 %v3051
        %v3148 = vpop.f32.mrb[0].mxu0
        %v3149 = vadd.f32 %v3049, %v3148
        %v3150 = vpop.f32.mrb[0].mxu0
        %v3151 = vpop.f32.mrb[0].mxu0
        %v3152 = vadd.f32 %v3049, %v3151
        %v3153 = vpop.f32.mrb[0].mxu0
        %3154 = vmatprep.mubr.bf16.mxu0 0
        %3155 = vmatmul.mubr.bf16.gmra.mrb[0].mxu0 %v3052
        %v3156 = vpop.f32.mrb[0].mxu0
        %v3157 = vadd.f32 %v3049, %v3156
        %v3158 = vpop.f32.mrb[0].mxu0
        %v3159 = vpop.f32.mrb[0].mxu0
        %v3160 = vadd.f32 %v3049, %v3159
        %v3161 = vpop.f32.mrb[0].mxu0
        %3162 = vmatprep.mubr.bf16.mxu0 0
        %3163 = vmatmul.mubr.bf16.gmra.mrb[0].mxu0 %v3053
        %v3164 = vpop.f32.mrb[0].mxu0
        %v3165 = vadd.f32 %v3049, %v3164
        %v3166 = vpop.f32.mrb[0].mxu0
        %v3167 = vpop.f32.mrb[0].mxu0
        %v3168 = vadd.f32 %v3049, %v3167
        %v3169 = vpop.f32.mrb[0].mxu0
        %3170 = vmatprep.mubr.bf16.mxu0 0
        %3171 = vmatmul.mubr.bf16.gmra.mrb[0].mxu0 %v3054
        %v3172 = vpop.f32.mrb[0].mxu0
        %v3173 = vadd.f32 %v3049, %v3172
        %v3174 = vpop.f32.mrb[0].mxu0
        %v3175 = vpop.f32.mrb[0].mxu0
        %v3176 = vadd.f32 %v3049, %v3175
        %v3177 = vpop.f32.mrb[0].mxu0
        %3178 = vmatprep.mubr.bf16.mxu0 0
        %3179 = vmatmul.mubr.bf16.gmra.mrb[0].mxu0 %v3055
        %v3180 = vpop.f32.mrb[0].mxu0
        %v3181 = vadd.f32 %v3049, %v3180
        %v3182 = vpop.f32.mrb[0].mxu0
        %v3183 = vpop.f32.mrb[0].mxu0
        %v3184 = vadd.f32 %v3049, %v3183
        %v3185 = vpop.f32.mrb[0].mxu0
        %3186 = vmatprep.mubr.bf16.mxu0 0
        %3187 = vmatmul.mubr.bf16.gmra.mrb[0].mxu0 %v3056
        %v3188 = vpop.f32.mrb[0].mxu0
        %v3189 = vadd.f32 %v3049, %v3188
        %v3190 = vpop.f32.mrb[0].mxu0
        %v3191 = vpop.f32.mrb[0].mxu0
        %v3192 = vadd.f32 %v3049, %v3191
        %v3193 = vpop.f32.mrb[0].mxu0
        %3194 = vmatprep.mubr.bf16.mxu0 0
        %3195 = vmatmul.mubr.bf16.gmra.mrb[0].mxu0 %v3057
        %v3196 = vpop.f32.mrb[0].mxu0
        %v3197 = vadd.f32 %v3049, %v3196
        %v3198 = vpop.f32.mrb[0].mxu0
        %v3199 = vpop.f32.mrb[0].mxu0
        %v3200 = vadd.f32 %v3049, %v3199
        %v3201 = vpop.f32.mrb[0].mxu0
        %3202 = vdwg.mxu0
        %v3203 = vmul.f32 %v3141, 0.01
        %v3204 = vmul.f32 %v3144, 0.01
        %v3205 = vmul.f32 %v3149, 0.01
        %v3206 = vmul.f32 %v3152, 0.01
        %v3207 = vmul.f32 %v3157, 0.01
        %v3208 = vmul.f32 %v3160, 0.01
        %v3209 = vmul.f32 %v3165, 0.01
        %v3210 = vmul.f32 %v3168, 0.01
        %v3211 = vmul.f32 %v3173, 0.01
        %v3212 = vmul.f32 %v3176, 0.01
        %v3213 = vmul.f32 %v3181, 0.01
        %v3214 = vmul.f32 %v3184, 0.01
        %v3215 = vmul.f32 %v3189, 0.01
        %v3216 = vmul.f32 %v3192, 0.01
        %v3217 = vmul.f32 %v3197, 0.01
        %v3218 = vmul.f32 %v3200, 0.01
        %v3219 = vmax.f32 %v3141, %v3203
        %v3220 = vmax.f32 %v3144, %v3204
        %v3221 = vmax.f32 %v3149, %v3205
        %v3222 = vmax.f32 %v3152, %v3206
        %v3223 = vmax.f32 %v3157, %v3207
        %v3224 = vmax.f32 %v3160, %v3208
        %v3225 = vmax.f32 %v3165, %v3209
        %v3226 = vmax.f32 %v3168, %v3210
        %v3227 = vmax.f32 %v3173, %v3211
        %v3228 = vmax.f32 %v3176, %v3212
        %v3229 = vmax.f32 %v3181, %v3213
        %v3230 = vmax.f32 %v3184, %v3214
        %v3231 = vmax.f32 %v3189, %v3215
        %v3232 = vmax.f32 %v3192, %v3216
        %v3233 = vmax.f32 %v3197, %v3217
        %v3234 = vmax.f32 %v3200, %v3218
        %v3235 = vld [vmem:[#allocation5 + $0xe00] sm:$0xff]
        %v3236 = vld [vmem:[#allocation5 + $0xe10] sm:$0xff]
        %v3237 = vld [vmem:[#allocation5 + $0xe20] sm:$0xff]
        %v3238 = vld [vmem:[#allocation5 + $0xe30] sm:$0xff]
        %v3239 = vld [vmem:[#allocation5 + $0xe40] sm:$0xff]
        %v3240 = vld [vmem:[#allocation5 + $0xe50] sm:$0xff]
        %v3241 = vld [vmem:[#allocation5 + $0xe60] sm:$0xff]
        %v3242 = vld [vmem:[#allocation5 + $0xe70] sm:$0xff]
        %v3243 = vld [vmem:[#allocation5 + $0xe80] sm:$0xff]
        %v3244 = vld [vmem:[#allocation5 + $0xe90] sm:$0xff]
        %v3245 = vld [vmem:[#allocation5 + $0xea0] sm:$0xff]
        %v3246 = vld [vmem:[#allocation5 + $0xeb0] sm:$0xff]
        %v3247 = vld [vmem:[#allocation5 + $0xec0] sm:$0xff]
        %v3248 = vld [vmem:[#allocation5 + $0xed0] sm:$0xff]
        %v3249 = vld [vmem:[#allocation5 + $0xee0] sm:$0xff]
        %v3250 = vld [vmem:[#allocation5 + $0xef0] sm:$0xff]
        %s3251 = scalar_lea.vmem [#allocation7], 33
        %v3252 = vld [vmem:[%s3251] ss:$8 sm:$0x3]
        %v3253 = vpack.c.bf16 %v3220, %v3219
        %v3254 = vpack.c.bf16 %v3222, %v3221
        %v3255 = vpack.c.bf16 %v3224, %v3223
        %v3256 = vpack.c.bf16 %v3226, %v3225
        %v3257 = vpack.c.bf16 %v3228, %v3227
        %v3258 = vpack.c.bf16 %v3230, %v3229
        %v3259 = vpack.c.bf16 %v3232, %v3231
        %v3260 = vpack.c.bf16 %v3234, %v3233
        %v3262 = vlaneseq
        %v3263 = vshrl.u32 %v3262, 7
        %v3264 = vsub.s32 0, %v3263
        %v3265 = vrot.slane %v3252, %v3264
        %v3266 = vlaneseq
        %v3267 = vshrl.u32 %v3266, 7
        %v3268 = vsub.s32 1, %v3267
        %v3269 = vrot.slane %v3252, %v3268
        %v3288 = vunpack.c.l.b16 %v3235
        %v3289 = vunpack.c.h.b16 %v3235
        %v3290 = vunpack.c.l.b16 %v3236
        %v3291 = vunpack.c.h.b16 %v3236
        %v3292 = vunpack.c.l.b16 %v3237
        %v3293 = vunpack.c.h.b16 %v3237
        %v3294 = vunpack.c.l.b16 %v3238
        %v3295 = vunpack.c.h.b16 %v3238
        %v3296 = vunpack.c.l.b16 %v3239
        %v3297 = vunpack.c.h.b16 %v3239
        %v3298 = vunpack.c.l.b16 %v3240
        %v3299 = vunpack.c.h.b16 %v3240
        %v3300 = vunpack.c.l.b16 %v3241
        %v3301 = vunpack.c.h.b16 %v3241
        %v3302 = vunpack.c.l.b16 %v3242
        %v3303 = vunpack.c.h.b16 %v3242
        %v3304 = vunpack.c.l.b16 %v3243
        %v3305 = vunpack.c.h.b16 %v3243
        %v3306 = vunpack.c.l.b16 %v3244
        %v3307 = vunpack.c.h.b16 %v3244
        %v3308 = vunpack.c.l.b16 %v3245
        %v3309 = vunpack.c.h.b16 %v3245
        %v3310 = vunpack.c.l.b16 %v3246
        %v3311 = vunpack.c.h.b16 %v3246
        %v3312 = vunpack.c.l.b16 %v3247
        %v3313 = vunpack.c.h.b16 %v3247
        %v3314 = vunpack.c.l.b16 %v3248
        %v3315 = vunpack.c.h.b16 %v3248
        %v3316 = vunpack.c.l.b16 %v3249
        %v3317 = vunpack.c.h.b16 %v3249
        %v3318 = vunpack.c.l.b16 %v3250
        %v3319 = vunpack.c.h.b16 %v3250
        %v3320 = vpack.c.b16 %v3290, %v3288
        %v3321 = vpack.c.b16 %v3291, %v3289
        %v3322 = vpack.c.b16 %v3294, %v3292
        %v3323 = vpack.c.b16 %v3295, %v3293
        %v3324 = vpack.c.b16 %v3298, %v3296
        %v3325 = vpack.c.b16 %v3299, %v3297
        %v3326 = vpack.c.b16 %v3302, %v3300
        %v3327 = vpack.c.b16 %v3303, %v3301
        %v3328 = vpack.c.b16 %v3306, %v3304
        %v3329 = vpack.c.b16 %v3307, %v3305
        %v3330 = vpack.c.b16 %v3310, %v3308
        %v3331 = vpack.c.b16 %v3311, %v3309
        %v3332 = vpack.c.b16 %v3314, %v3312
        %v3333 = vpack.c.b16 %v3315, %v3313
        %v3334 = vpack.c.b16 %v3318, %v3316
        %v3335 = vpack.c.b16 %v3319, %v3317
        %3352 = vmatprep.subr.bf16.mxu0 %v3321
        %3353 = vmatpush1.bf16.msra.mxu0 %v3320
        %3354 = vmatprep.subr.bf16.mxu0 %v3323
        %3355 = vmatpush1.bf16.msra.mxu0 %v3322
        %3356 = vmatprep.subr.bf16.mxu0 %v3325
        %3357 = vmatpush1.bf16.msra.mxu0 %v3324
        %3358 = vmatprep.subr.bf16.mxu0 %v3327
        %3359 = vmatpush1.bf16.msra.mxu0 %v3326
        %3360 = vmatprep.subr.bf16.mxu0 %v3329
        %3361 = vmatpush1.bf16.msra.mxu0 %v3328
        %3362 = vmatprep.subr.bf16.mxu0 %v3331
        %3363 = vmatpush1.bf16.msra.mxu0 %v3330
        %3364 = vmatprep.subr.bf16.mxu0 %v3333
        %3365 = vmatpush1.bf16.msra.mxu0 %v3332
        %3366 = vmatprep.subr.bf16.mxu0 %v3335
        %3367 = vmatpush1.bf16.msra.mxu0 %v3334
        %3368 = vmatprep.subr.bf16.mxu0 0
        %3369 = vmatpush1.bf16.msra.mxu0 0
        %3370 = vmatprep.subr.bf16.mxu0 0
        %3371 = vmatpush1.bf16.msra.mxu0 0
        %3372 = vmatprep.subr.bf16.mxu0 0
        %3373 = vmatpush1.bf16.msra.mxu0 0
        %3374 = vmatprep.subr.bf16.mxu0 0
        %3375 = vmatpush1.bf16.msra.mxu0 0
        %3376 = vmatprep.subr.bf16.mxu0 0
        %3377 = vmatpush1.bf16.msra.mxu0 0
        %3378 = vmatprep.subr.bf16.mxu0 0
        %3379 = vmatpush1.bf16.msra.mxu0 0
        %3380 = vmatprep.subr.bf16.mxu0 0
        %3381 = vmatpush1.bf16.msra.mxu0 0
        %3382 = vmatprep.subr.bf16.mxu0 0
        %3383 = vmatpush1.bf16.msra.mxu0 0
        %3384 = vmatprep.mubr.bf16.mxu0 0
        %3385 = vmatmul.mubr.bf16.gmra.mrb[0].mxu0 %v3253
        %v3386 = vpop.f32.mrb[0].mxu0
        %v3387 = vadd.f32 %v3265, %v3386
        %v3388 = vpop.f32.mrb[0].mxu0
        %v3389 = vadd.f32 %v3269, %v3388
        %v3390 = vpop.f32.mrb[0].mxu0
        %v3391 = vadd.f32 %v3265, %v3390
        %v3392 = vpop.f32.mrb[0].mxu0
        %v3393 = vadd.f32 %v3269, %v3392
        %3394 = vmatprep.mubr.bf16.mxu0 0
        %3395 = vmatmul.mubr.bf16.gmra.mrb[0].mxu0 %v3254
        %v3396 = vpop.f32.mrb[0].mxu0
        %v3397 = vadd.f32 %v3265, %v3396
        %v3398 = vpop.f32.mrb[0].mxu0
        %v3399 = vadd.f32 %v3269, %v3398
        %v3400 = vpop.f32.mrb[0].mxu0
        %v3401 = vadd.f32 %v3265, %v3400
        %v3402 = vpop.f32.mrb[0].mxu0
        %v3403 = vadd.f32 %v3269, %v3402
        %3404 = vmatprep.mubr.bf16.mxu0 0
        %3405 = vmatmul.mubr.bf16.gmra.mrb[0].mxu0 %v3255
        %v3406 = vpop.f32.mrb[0].mxu0
        %v3407 = vadd.f32 %v3265, %v3406
        %v3408 = vpop.f32.mrb[0].mxu0
        %v3409 = vadd.f32 %v3269, %v3408
        %v3410 = vpop.f32.mrb[0].mxu0
        %v3411 = vadd.f32 %v3265, %v3410
        %v3412 = vpop.f32.mrb[0].mxu0
        %v3413 = vadd.f32 %v3269, %v3412
        %3414 = vmatprep.mubr.bf16.mxu0 0
        %3415 = vmatmul.mubr.bf16.gmra.mrb[0].mxu0 %v3256
        %v3416 = vpop.f32.mrb[0].mxu0
        %v3417 = vadd.f32 %v3265, %v3416
        %v3418 = vpop.f32.mrb[0].mxu0
        %v3419 = vadd.f32 %v3269, %v3418
        %v3420 = vpop.f32.mrb[0].mxu0
        %v3421 = vadd.f32 %v3265, %v3420
        %v3422 = vpop.f32.mrb[0].mxu0
        %v3423 = vadd.f32 %v3269, %v3422
        %3424 = vmatprep.mubr.bf16.mxu0 0
        %3425 = vmatmul.mubr.bf16.gmra.mrb[0].mxu0 %v3257
        %v3426 = vpop.f32.mrb[0].mxu0
        %v3427 = vadd.f32 %v3265, %v3426
        %v3428 = vpop.f32.mrb[0].mxu0
        %v3429 = vadd.f32 %v3269, %v3428
        %v3430 = vpop.f32.mrb[0].mxu0
        %v3431 = vadd.f32 %v3265, %v3430
        %v3432 = vpop.f32.mrb[0].mxu0
        %v3433 = vadd.f32 %v3269, %v3432
        %3434 = vmatprep.mubr.bf16.mxu0 0
        %3435 = vmatmul.mubr.bf16.gmra.mrb[0].mxu0 %v3258
        %v3436 = vpop.f32.mrb[0].mxu0
        %v3437 = vadd.f32 %v3265, %v3436
        %v3438 = vpop.f32.mrb[0].mxu0
        %v3439 = vadd.f32 %v3269, %v3438
        %v3440 = vpop.f32.mrb[0].mxu0
        %v3441 = vadd.f32 %v3265, %v3440
        %v3442 = vpop.f32.mrb[0].mxu0
        %v3443 = vadd.f32 %v3269, %v3442
        %3444 = vmatprep.mubr.bf16.mxu0 0
        %3445 = vmatmul.mubr.bf16.gmra.mrb[0].mxu0 %v3259
        %v3446 = vpop.f32.mrb[0].mxu0
        %v3447 = vadd.f32 %v3265, %v3446
        %v3448 = vpop.f32.mrb[0].mxu0
        %v3449 = vadd.f32 %v3269, %v3448
        %v3450 = vpop.f32.mrb[0].mxu0
        %v3451 = vadd.f32 %v3265, %v3450
        %v3452 = vpop.f32.mrb[0].mxu0
        %v3453 = vadd.f32 %v3269, %v3452
        %3454 = vmatprep.mubr.bf16.mxu0 0
        %3455 = vmatmul.mubr.bf16.gmra.mrb[0].mxu0 %v3260
        %v3456 = vpop.f32.mrb[0].mxu0
        %v3457 = vadd.f32 %v3265, %v3456
        %v3458 = vpop.f32.mrb[0].mxu0
        %v3459 = vadd.f32 %v3269, %v3458
        %v3460 = vpop.f32.mrb[0].mxu0
        %v3461 = vadd.f32 %v3265, %v3460
        %v3462 = vpop.f32.mrb[0].mxu0
        %v3463 = vadd.f32 %v3269, %v3462
        %3464 = vdwg.mxu0
        %v3465 = vmul.f32 %v3387, 0.01
        %v3466 = vmul.f32 %v3389, 0.01
        %v3467 = vmul.f32 %v3391, 0.01
        %v3468 = vmul.f32 %v3393, 0.01
        %v3469 = vmul.f32 %v3397, 0.01
        %v3470 = vmul.f32 %v3399, 0.01
        %v3471 = vmul.f32 %v3401, 0.01
        %v3472 = vmul.f32 %v3403, 0.01
        %v3473 = vmul.f32 %v3407, 0.01
        %v3474 = vmul.f32 %v3409, 0.01
        %v3475 = vmul.f32 %v3411, 0.01
        %v3476 = vmul.f32 %v3413, 0.01
        %v3477 = vmul.f32 %v3417, 0.01
        %v3478 = vmul.f32 %v3419, 0.01
        %v3479 = vmul.f32 %v3421, 0.01
        %v3480 = vmul.f32 %v3423, 0.01
        %v3481 = vmul.f32 %v3427, 0.01
        %v3482 = vmul.f32 %v3429, 0.01
        %v3483 = vmul.f32 %v3431, 0.01
        %v3484 = vmul.f32 %v3433, 0.01
        %v3485 = vmul.f32 %v3437, 0.01
        %v3486 = vmul.f32 %v3439, 0.01
        %v3487 = vmul.f32 %v3441, 0.01
        %v3488 = vmul.f32 %v3443, 0.01
        %v3489 = vmul.f32 %v3447, 0.01
        %v3490 = vmul.f32 %v3449, 0.01
        %v3491 = vmul.f32 %v3451, 0.01
        %v3492 = vmul.f32 %v3453, 0.01
        %v3493 = vmul.f32 %v3457, 0.01
        %v3494 = vmul.f32 %v3459, 0.01
        %v3495 = vmul.f32 %v3461, 0.01
        %v3496 = vmul.f32 %v3463, 0.01
        %v3497 = vmax.f32 %v3387, %v3465
        %v3498 = vmax.f32 %v3389, %v3466
        %v3499 = vmax.f32 %v3391, %v3467
        %v3500 = vmax.f32 %v3393, %v3468
        %v3501 = vmax.f32 %v3397, %v3469
        %v3502 = vmax.f32 %v3399, %v3470
        %v3503 = vmax.f32 %v3401, %v3471
        %v3504 = vmax.f32 %v3403, %v3472
        %v3505 = vmax.f32 %v3407, %v3473
        %v3506 = vmax.f32 %v3409, %v3474
        %v3507 = vmax.f32 %v3411, %v3475
        %v3508 = vmax.f32 %v3413, %v3476
        %v3509 = vmax.f32 %v3417, %v3477
        %v3510 = vmax.f32 %v3419, %v3478
        %v3511 = vmax.f32 %v3421, %v3479
        %v3512 = vmax.f32 %v3423, %v3480
        %v3513 = vmax.f32 %v3427, %v3481
        %v3514 = vmax.f32 %v3429, %v3482
        %v3515 = vmax.f32 %v3431, %v3483
        %v3516 = vmax.f32 %v3433, %v3484
        %v3517 = vmax.f32 %v3437, %v3485
        %v3518 = vmax.f32 %v3439, %v3486
        %v3519 = vmax.f32 %v3441, %v3487
        %v3520 = vmax.f32 %v3443, %v3488
        %v3521 = vmax.f32 %v3447, %v3489
        %v3522 = vmax.f32 %v3449, %v3490
        %v3523 = vmax.f32 %v3451, %v3491
        %v3524 = vmax.f32 %v3453, %v3492
        %v3525 = vmax.f32 %v3457, %v3493
        %v3526 = vmax.f32 %v3459, %v3494
        %v3527 = vmax.f32 %v3461, %v3495
        %v3528 = vmax.f32 %v3463, %v3496
        %v3529 = vld [vmem:[#allocation5 + $0xf00] sm:$0xff]
        %v3530 = vld [vmem:[#allocation5 + $0xf08] sm:$0xff]
        %v3531 = vld [vmem:[#allocation5 + $0xf10] sm:$0xff]
        %v3532 = vld [vmem:[#allocation5 + $0xf18] sm:$0xff]
        %v3533 = vld [vmem:[#allocation5 + $0xf20] sm:$0xff]
        %v3534 = vld [vmem:[#allocation5 + $0xf28] sm:$0xff]
        %v3535 = vld [vmem:[#allocation5 + $0xf30] sm:$0xff]
        %v3536 = vld [vmem:[#allocation5 + $0xf38] sm:$0xff]
        %v3537 = vld [vmem:[#allocation5 + $0xf40] sm:$0xff]
        %v3538 = vld [vmem:[#allocation5 + $0xf48] sm:$0xff]
        %v3539 = vld [vmem:[#allocation5 + $0xf50] sm:$0xff]
        %v3540 = vld [vmem:[#allocation5 + $0xf58] sm:$0xff]
        %v3541 = vld [vmem:[#allocation5 + $0xf60] sm:$0xff]
        %v3542 = vld [vmem:[#allocation5 + $0xf68] sm:$0xff]
        %v3543 = vld [vmem:[#allocation5 + $0xf70] sm:$0xff]
        %v3544 = vld [vmem:[#allocation5 + $0xf78] sm:$0xff]
        %v3545 = vld [vmem:[#allocation5 + $0xf80] sm:$0xff]
        %v3546 = vld [vmem:[#allocation5 + $0xf88] sm:$0xff]
        %v3547 = vld [vmem:[#allocation5 + $0xf90] sm:$0xff]
        %v3548 = vld [vmem:[#allocation5 + $0xf98] sm:$0xff]
        %v3549 = vld [vmem:[#allocation5 + $0xfa0] sm:$0xff]
        %v3550 = vld [vmem:[#allocation5 + $0xfa8] sm:$0xff]
        %v3551 = vld [vmem:[#allocation5 + $0xfb0] sm:$0xff]
        %v3552 = vld [vmem:[#allocation5 + $0xfb8] sm:$0xff]
        %v3553 = vld [vmem:[#allocation5 + $0xfc0] sm:$0xff]
        %v3554 = vld [vmem:[#allocation5 + $0xfc8] sm:$0xff]
        %v3555 = vld [vmem:[#allocation5 + $0xfd0] sm:$0xff]
        %v3556 = vld [vmem:[#allocation5 + $0xfd8] sm:$0xff]
        %v3557 = vld [vmem:[#allocation5 + $0xfe0] sm:$0xff]
        %v3558 = vld [vmem:[#allocation5 + $0xfe8] sm:$0xff]
        %v3559 = vld [vmem:[#allocation5 + $0xff0] sm:$0xff]
        %v3560 = vld [vmem:[#allocation5 + $0xff8] sm:$0xff]
        %v3561 = vld [vmem:[#allocation5 + $0x1000] sm:$0xff]
        %v3562 = vld [vmem:[#allocation5 + $0x1008] sm:$0xff]
        %v3563 = vld [vmem:[#allocation5 + $0x1010] sm:$0xff]
        %v3564 = vld [vmem:[#allocation5 + $0x1018] sm:$0xff]
        %v3565 = vld [vmem:[#allocation5 + $0x1020] sm:$0xff]
        %v3566 = vld [vmem:[#allocation5 + $0x1028] sm:$0xff]
        %v3567 = vld [vmem:[#allocation5 + $0x1030] sm:$0xff]
        %v3568 = vld [vmem:[#allocation5 + $0x1038] sm:$0xff]
        %v3569 = vld [vmem:[#allocation5 + $0x1040] sm:$0xff]
        %v3570 = vld [vmem:[#allocation5 + $0x1048] sm:$0xff]
        %v3571 = vld [vmem:[#allocation5 + $0x1050] sm:$0xff]
        %v3572 = vld [vmem:[#allocation5 + $0x1058] sm:$0xff]
        %v3573 = vld [vmem:[#allocation5 + $0x1060] sm:$0xff]
        %v3574 = vld [vmem:[#allocation5 + $0x1068] sm:$0xff]
        %v3575 = vld [vmem:[#allocation5 + $0x1070] sm:$0xff]
        %v3576 = vld [vmem:[#allocation5 + $0x1078] sm:$0xff]
        %v3577 = vld [vmem:[#allocation5 + $0x1080] sm:$0xff]
        %v3578 = vld [vmem:[#allocation5 + $0x1088] sm:$0xff]
        %v3579 = vld [vmem:[#allocation5 + $0x1090] sm:$0xff]
        %v3580 = vld [vmem:[#allocation5 + $0x1098] sm:$0xff]
        %v3581 = vld [vmem:[#allocation5 + $0x10a0] sm:$0xff]
        %v3582 = vld [vmem:[#allocation5 + $0x10a8] sm:$0xff]
        %v3583 = vld [vmem:[#allocation5 + $0x10b0] sm:$0xff]
        %v3584 = vld [vmem:[#allocation5 + $0x10b8] sm:$0xff]
        %v3585 = vld [vmem:[#allocation5 + $0x10c0] sm:$0xff]
        %v3586 = vld [vmem:[#allocation5 + $0x10c8] sm:$0xff]
        %v3587 = vld [vmem:[#allocation5 + $0x10d0] sm:$0xff]
        %v3588 = vld [vmem:[#allocation5 + $0x10d8] sm:$0xff]
        %v3589 = vld [vmem:[#allocation5 + $0x10e0] sm:$0xff]
        %v3590 = vld [vmem:[#allocation5 + $0x10e8] sm:$0xff]
        %v3591 = vld [vmem:[#allocation5 + $0x10f0] sm:$0xff]
        %v3592 = vld [vmem:[#allocation5 + $0x10f8] sm:$0xff]
        %s3593 = scalar_lea.vmem [#allocation7], 34
        %v3594 = vld [vmem:[%s3593] ss:$8 sm:$0xf]
        %v3595 = vpack.c.bf16 %v3499, %v3497
        %v3596 = vpack.c.bf16 %v3500, %v3498
        %v3597 = vpack.c.bf16 %v3503, %v3501
        %v3598 = vpack.c.bf16 %v3504, %v3502
        %v3599 = vpack.c.bf16 %v3507, %v3505
        %v3600 = vpack.c.bf16 %v3508, %v3506
        %v3601 = vpack.c.bf16 %v3511, %v3509
        %v3602 = vpack.c.bf16 %v3512, %v3510
        %v3603 = vpack.c.bf16 %v3515, %v3513
        %v3604 = vpack.c.bf16 %v3516, %v3514
        %v3605 = vpack.c.bf16 %v3519, %v3517
        %v3606 = vpack.c.bf16 %v3520, %v3518
        %v3607 = vpack.c.bf16 %v3523, %v3521
        %v3608 = vpack.c.bf16 %v3524, %v3522
        %v3609 = vpack.c.bf16 %v3527, %v3525
        %v3610 = vpack.c.bf16 %v3528, %v3526
        %v3612 = vlaneseq
        %v3613 = vshrl.u32 %v3612, 7
        %v3614 = vsub.s32 0, %v3613
        %v3615 = vrot.slane %v3594, %v3614
        %v3616 = vlaneseq
        %v3617 = vshrl.u32 %v3616, 7
        %v3618 = vsub.s32 1, %v3617
        %v3619 = vrot.slane %v3594, %v3618
        %v3620 = vlaneseq
        %v3621 = vshrl.u32 %v3620, 7
        %v3622 = vsub.s32 2, %v3621
        %v3623 = vrot.slane %v3594, %v3622
        %v3624 = vlaneseq
        %v3625 = vshrl.u32 %v3624, 7
        %v3626 = vsub.s32 3, %v3625
        %v3627 = vrot.slane %v3594, %v3626
        %v3696 = vunpack.c.l.b16 %v3529
        %v3697 = vunpack.c.h.b16 %v3529
        %v3698 = vunpack.c.l.b16 %v3530
        %v3699 = vunpack.c.h.b16 %v3530
        %v3700 = vunpack.c.l.b16 %v3531
        %v3701 = vunpack.c.h.b16 %v3531
        %v3702 = vunpack.c.l.b16 %v3532
        %v3703 = vunpack.c.h.b16 %v3532
        %v3704 = vunpack.c.l.b16 %v3533
        %v3705 = vunpack.c.h.b16 %v3533
        %v3706 = vunpack.c.l.b16 %v3534
        %v3707 = vunpack.c.h.b16 %v3534
        %v3708 = vunpack.c.l.b16 %v3535
        %v3709 = vunpack.c.h.b16 %v3535
        %v3710 = vunpack.c.l.b16 %v3536
        %v3711 = vunpack.c.h.b16 %v3536
        %v3712 = vunpack.c.l.b16 %v3537
        %v3713 = vunpack.c.h.b16 %v3537
        %v3714 = vunpack.c.l.b16 %v3538
        %v3715 = vunpack.c.h.b16 %v3538
        %v3716 = vunpack.c.l.b16 %v3539
        %v3717 = vunpack.c.h.b16 %v3539
        %v3718 = vunpack.c.l.b16 %v3540
        %v3719 = vunpack.c.h.b16 %v3540
        %v3720 = vunpack.c.l.b16 %v3541
        %v3721 = vunpack.c.h.b16 %v3541
        %v3722 = vunpack.c.l.b16 %v3542
        %v3723 = vunpack.c.h.b16 %v3542
        %v3724 = vunpack.c.l.b16 %v3543
        %v3725 = vunpack.c.h.b16 %v3543
        %v3726 = vunpack.c.l.b16 %v3544
        %v3727 = vunpack.c.h.b16 %v3544
        %v3728 = vunpack.c.l.b16 %v3545
        %v3729 = vunpack.c.h.b16 %v3545
        %v3730 = vunpack.c.l.b16 %v3546
        %v3731 = vunpack.c.h.b16 %v3546
        %v3732 = vunpack.c.l.b16 %v3547
        %v3733 = vunpack.c.h.b16 %v3547
        %v3734 = vunpack.c.l.b16 %v3548
        %v3735 = vunpack.c.h.b16 %v3548
        %v3736 = vunpack.c.l.b16 %v3549
        %v3737 = vunpack.c.h.b16 %v3549
        %v3738 = vunpack.c.l.b16 %v3550
        %v3739 = vunpack.c.h.b16 %v3550
        %v3740 = vunpack.c.l.b16 %v3551
        %v3741 = vunpack.c.h.b16 %v3551
        %v3742 = vunpack.c.l.b16 %v3552
        %v3743 = vunpack.c.h.b16 %v3552
        %v3744 = vunpack.c.l.b16 %v3553
        %v3745 = vunpack.c.h.b16 %v3553
        %v3746 = vunpack.c.l.b16 %v3554
        %v3747 = vunpack.c.h.b16 %v3554
        %v3748 = vunpack.c.l.b16 %v3555
        %v3749 = vunpack.c.h.b16 %v3555
        %v3750 = vunpack.c.l.b16 %v3556
        %v3751 = vunpack.c.h.b16 %v3556
        %v3752 = vunpack.c.l.b16 %v3557
        %v3753 = vunpack.c.h.b16 %v3557
        %v3754 = vunpack.c.l.b16 %v3558
        %v3755 = vunpack.c.h.b16 %v3558
        %v3756 = vunpack.c.l.b16 %v3559
        %v3757 = vunpack.c.h.b16 %v3559
        %v3758 = vunpack.c.l.b16 %v3560
        %v3759 = vunpack.c.h.b16 %v3560
        %v3760 = vunpack.c.l.b16 %v3561
        %v3761 = vunpack.c.h.b16 %v3561
        %v3762 = vunpack.c.l.b16 %v3562
        %v3763 = vunpack.c.h.b16 %v3562
        %v3764 = vunpack.c.l.b16 %v3563
        %v3765 = vunpack.c.h.b16 %v3563
        %v3766 = vunpack.c.l.b16 %v3564
        %v3767 = vunpack.c.h.b16 %v3564
        %v3768 = vunpack.c.l.b16 %v3565
        %v3769 = vunpack.c.h.b16 %v3565
        %v3770 = vunpack.c.l.b16 %v3566
        %v3771 = vunpack.c.h.b16 %v3566
        %v3772 = vunpack.c.l.b16 %v3567
        %v3773 = vunpack.c.h.b16 %v3567
        %v3774 = vunpack.c.l.b16 %v3568
        %v3775 = vunpack.c.h.b16 %v3568
        %v3776 = vunpack.c.l.b16 %v3569
        %v3777 = vunpack.c.h.b16 %v3569
        %v3778 = vunpack.c.l.b16 %v3570
        %v3779 = vunpack.c.h.b16 %v3570
        %v3780 = vunpack.c.l.b16 %v3571
        %v3781 = vunpack.c.h.b16 %v3571
        %v3782 = vunpack.c.l.b16 %v3572
        %v3783 = vunpack.c.h.b16 %v3572
        %v3784 = vunpack.c.l.b16 %v3573
        %v3785 = vunpack.c.h.b16 %v3573
        %v3786 = vunpack.c.l.b16 %v3574
        %v3787 = vunpack.c.h.b16 %v3574
        %v3788 = vunpack.c.l.b16 %v3575
        %v3789 = vunpack.c.h.b16 %v3575
        %v3790 = vunpack.c.l.b16 %v3576
        %v3791 = vunpack.c.h.b16 %v3576
        %v3792 = vunpack.c.l.b16 %v3577
        %v3793 = vunpack.c.h.b16 %v3577
        %v3794 = vunpack.c.l.b16 %v3578
        %v3795 = vunpack.c.h.b16 %v3578
        %v3796 = vunpack.c.l.b16 %v3579
        %v3797 = vunpack.c.h.b16 %v3579
        %v3798 = vunpack.c.l.b16 %v3580
        %v3799 = vunpack.c.h.b16 %v3580
        %v3800 = vunpack.c.l.b16 %v3581
        %v3801 = vunpack.c.h.b16 %v3581
        %v3802 = vunpack.c.l.b16 %v3582
        %v3803 = vunpack.c.h.b16 %v3582
        %v3804 = vunpack.c.l.b16 %v3583
        %v3805 = vunpack.c.h.b16 %v3583
        %v3806 = vunpack.c.l.b16 %v3584
        %v3807 = vunpack.c.h.b16 %v3584
        %v3808 = vunpack.c.l.b16 %v3585
        %v3809 = vunpack.c.h.b16 %v3585
        %v3810 = vunpack.c.l.b16 %v3586
        %v3811 = vunpack.c.h.b16 %v3586
        %v3812 = vunpack.c.l.b16 %v3587
        %v3813 = vunpack.c.h.b16 %v3587
        %v3814 = vunpack.c.l.b16 %v3588
        %v3815 = vunpack.c.h.b16 %v3588
        %v3816 = vunpack.c.l.b16 %v3589
        %v3817 = vunpack.c.h.b16 %v3589
        %v3818 = vunpack.c.l.b16 %v3590
        %v3819 = vunpack.c.h.b16 %v3590
        %v3820 = vunpack.c.l.b16 %v3591
        %v3821 = vunpack.c.h.b16 %v3591
        %v3822 = vunpack.c.l.b16 %v3592
        %v3823 = vunpack.c.h.b16 %v3592
        %v3824 = vpack.c.b16 %v3700, %v3696
        %v3825 = vpack.c.b16 %v3701, %v3697
        %v3826 = vpack.c.b16 %v3702, %v3698
        %v3827 = vpack.c.b16 %v3703, %v3699
        %v3828 = vpack.c.b16 %v3708, %v3704
        %v3829 = vpack.c.b16 %v3709, %v3705
        %v3830 = vpack.c.b16 %v3710, %v3706
        %v3831 = vpack.c.b16 %v3711, %v3707
        %v3832 = vpack.c.b16 %v3716, %v3712
        %v3833 = vpack.c.b16 %v3717, %v3713
        %v3834 = vpack.c.b16 %v3718, %v3714
        %v3835 = vpack.c.b16 %v3719, %v3715
        %v3836 = vpack.c.b16 %v3724, %v3720
        %v3837 = vpack.c.b16 %v3725, %v3721
        %v3838 = vpack.c.b16 %v3726, %v3722
        %v3839 = vpack.c.b16 %v3727, %v3723
        %v3840 = vpack.c.b16 %v3732, %v3728
        %v3841 = vpack.c.b16 %v3733, %v3729
        %v3842 = vpack.c.b16 %v3734, %v3730
        %v3843 = vpack.c.b16 %v3735, %v3731
        %v3844 = vpack.c.b16 %v3740, %v3736
        %v3845 = vpack.c.b16 %v3741, %v3737
        %v3846 = vpack.c.b16 %v3742, %v3738
        %v3847 = vpack.c.b16 %v3743, %v3739
        %v3848 = vpack.c.b16 %v3748, %v3744
        %v3849 = vpack.c.b16 %v3749, %v3745
        %v3850 = vpack.c.b16 %v3750, %v3746
        %v3851 = vpack.c.b16 %v3751, %v3747
        %v3852 = vpack.c.b16 %v3756, %v3752
        %v3853 = vpack.c.b16 %v3757, %v3753
        %v3854 = vpack.c.b16 %v3758, %v3754
        %v3855 = vpack.c.b16 %v3759, %v3755
        %v3856 = vpack.c.b16 %v3764, %v3760
        %v3857 = vpack.c.b16 %v3765, %v3761
        %v3858 = vpack.c.b16 %v3766, %v3762
        %v3859 = vpack.c.b16 %v3767, %v3763
        %v3860 = vpack.c.b16 %v3772, %v3768
        %v3861 = vpack.c.b16 %v3773, %v3769
        %v3862 = vpack.c.b16 %v3774, %v3770
        %v3863 = vpack.c.b16 %v3775, %v3771
        %v3864 = vpack.c.b16 %v3780, %v3776
        %v3865 = vpack.c.b16 %v3781, %v3777
        %v3866 = vpack.c.b16 %v3782, %v3778
        %v3867 = vpack.c.b16 %v3783, %v3779
        %v3868 = vpack.c.b16 %v3788, %v3784
        %v3869 = vpack.c.b16 %v3789, %v3785
        %v3870 = vpack.c.b16 %v3790, %v3786
        %v3871 = vpack.c.b16 %v3791, %v3787
        %v3872 = vpack.c.b16 %v3796, %v3792
        %v3873 = vpack.c.b16 %v3797, %v3793
        %v3874 = vpack.c.b16 %v3798, %v3794
        %v3875 = vpack.c.b16 %v3799, %v3795
        %v3876 = vpack.c.b16 %v3804, %v3800
        %v3877 = vpack.c.b16 %v3805, %v3801
        %v3878 = vpack.c.b16 %v3806, %v3802
        %v3879 = vpack.c.b16 %v3807, %v3803
        %v3880 = vpack.c.b16 %v3812, %v3808
        %v3881 = vpack.c.b16 %v3813, %v3809
        %v3882 = vpack.c.b16 %v3814, %v3810
        %v3883 = vpack.c.b16 %v3815, %v3811
        %v3884 = vpack.c.b16 %v3820, %v3816
        %v3885 = vpack.c.b16 %v3821, %v3817
        %v3886 = vpack.c.b16 %v3822, %v3818
        %v3887 = vpack.c.b16 %v3823, %v3819
        %3952 = vmatprep.subr.bf16.mxu0 %v3825
        %3953 = vmatpush1.bf16.msra.mxu0 %v3824
        %3954 = vmatprep.subr.bf16.mxu0 %v3829
        %3955 = vmatpush1.bf16.msra.mxu0 %v3828
        %3956 = vmatprep.subr.bf16.mxu0 %v3833
        %3957 = vmatpush1.bf16.msra.mxu0 %v3832
        %3958 = vmatprep.subr.bf16.mxu0 %v3837
        %3959 = vmatpush1.bf16.msra.mxu0 %v3836
        %3960 = vmatprep.subr.bf16.mxu0 %v3841
        %3961 = vmatpush1.bf16.msra.mxu0 %v3840
        %3962 = vmatprep.subr.bf16.mxu0 %v3845
        %3963 = vmatpush1.bf16.msra.mxu0 %v3844
        %3964 = vmatprep.subr.bf16.mxu0 %v3849
        %3965 = vmatpush1.bf16.msra.mxu0 %v3848
        %3966 = vmatprep.subr.bf16.mxu0 %v3853
        %3967 = vmatpush1.bf16.msra.mxu0 %v3852
        %3968 = vmatprep.subr.bf16.mxu0 %v3857
        %3969 = vmatpush1.bf16.msra.mxu0 %v3856
        %3970 = vmatprep.subr.bf16.mxu0 %v3861
        %3971 = vmatpush1.bf16.msra.mxu0 %v3860
        %3972 = vmatprep.subr.bf16.mxu0 %v3865
        %3973 = vmatpush1.bf16.msra.mxu0 %v3864
        %3974 = vmatprep.subr.bf16.mxu0 %v3869
        %3975 = vmatpush1.bf16.msra.mxu0 %v3868
        %3976 = vmatprep.subr.bf16.mxu0 %v3873
        %3977 = vmatpush1.bf16.msra.mxu0 %v3872
        %3978 = vmatprep.subr.bf16.mxu0 %v3877
        %3979 = vmatpush1.bf16.msra.mxu0 %v3876
        %3980 = vmatprep.subr.bf16.mxu0 %v3881
        %3981 = vmatpush1.bf16.msra.mxu0 %v3880
        %3982 = vmatprep.subr.bf16.mxu0 %v3885
        %3983 = vmatpush1.bf16.msra.mxu0 %v3884
        %3984 = vmatprep.mubr.bf16.mxu0 %v3596
        %3985 = vmatmul.mubr.bf16.gmra.mrb[0].mxu0 %v3595
        %v3986 = vpop.f32.mrb[0].mxu0
        %v3987 = vadd.f32 %v3615, %v3986
        %v3988 = vpop.f32.mrb[0].mxu0
        %v3989 = vadd.f32 %v3619, %v3988
        %v3990 = vpop.f32.mrb[0].mxu0
        %v3991 = vadd.f32 %v3615, %v3990
        %v3992 = vpop.f32.mrb[0].mxu0
        %v3993 = vadd.f32 %v3619, %v3992
        %3994 = vmatprep.mubr.bf16.mxu0 %v3598
        %3995 = vmatmul.mubr.bf16.gmra.mrb[0].mxu0 %v3597
        %v3996 = vpop.f32.mrb[0].mxu0
        %v3997 = vadd.f32 %v3615, %v3996
        %v3998 = vpop.f32.mrb[0].mxu0
        %v3999 = vadd.f32 %v3619, %v3998
        %v4000 = vpop.f32.mrb[0].mxu0
        %v4001 = vadd.f32 %v3615, %v4000
        %v4002 = vpop.f32.mrb[0].mxu0
        %v4003 = vadd.f32 %v3619, %v4002
        %4004 = vmatprep.mubr.bf16.mxu0 %v3600
        %4005 = vmatmul.mubr.bf16.gmra.mrb[0].mxu0 %v3599
        %v4006 = vpop.f32.mrb[0].mxu0
        %v4007 = vadd.f32 %v3615, %v4006
        %v4008 = vpop.f32.mrb[0].mxu0
        %v4009 = vadd.f32 %v3619, %v4008
        %v4010 = vpop.f32.mrb[0].mxu0
        %v4011 = vadd.f32 %v3615, %v4010
        %v4012 = vpop.f32.mrb[0].mxu0
        %v4013 = vadd.f32 %v3619, %v4012
        %4014 = vmatprep.mubr.bf16.mxu0 %v3602
        %4015 = vmatmul.mubr.bf16.gmra.mrb[0].mxu0 %v3601
        %v4016 = vpop.f32.mrb[0].mxu0
        %v4017 = vadd.f32 %v3615, %v4016
        %v4018 = vpop.f32.mrb[0].mxu0
        %v4019 = vadd.f32 %v3619, %v4018
        %v4020 = vpop.f32.mrb[0].mxu0
        %v4021 = vadd.f32 %v3615, %v4020
        %v4022 = vpop.f32.mrb[0].mxu0
        %v4023 = vadd.f32 %v3619, %v4022
        %4024 = vmatprep.mubr.bf16.mxu0 %v3604
        %4025 = vmatmul.mubr.bf16.gmra.mrb[0].mxu0 %v3603
        %v4026 = vpop.f32.mrb[0].mxu0
        %v4027 = vadd.f32 %v3615, %v4026
        %v4028 = vpop.f32.mrb[0].mxu0
        %v4029 = vadd.f32 %v3619, %v4028
        %v4030 = vpop.f32.mrb[0].mxu0
        %v4031 = vadd.f32 %v3615, %v4030
        %v4032 = vpop.f32.mrb[0].mxu0
        %v4033 = vadd.f32 %v3619, %v4032
        %4034 = vmatprep.mubr.bf16.mxu0 %v3606
        %4035 = vmatmul.mubr.bf16.gmra.mrb[0].mxu0 %v3605
        %v4036 = vpop.f32.mrb[0].mxu0
        %v4037 = vadd.f32 %v3615, %v4036
        %v4038 = vpop.f32.mrb[0].mxu0
        %v4039 = vadd.f32 %v3619, %v4038
        %v4040 = vpop.f32.mrb[0].mxu0
        %v4041 = vadd.f32 %v3615, %v4040
        %v4042 = vpop.f32.mrb[0].mxu0
        %v4043 = vadd.f32 %v3619, %v4042
        %4044 = vmatprep.mubr.bf16.mxu0 %v3608
        %4045 = vmatmul.mubr.bf16.gmra.mrb[0].mxu0 %v3607
        %v4046 = vpop.f32.mrb[0].mxu0
        %v4047 = vadd.f32 %v3615, %v4046
        %v4048 = vpop.f32.mrb[0].mxu0
        %v4049 = vadd.f32 %v3619, %v4048
        %v4050 = vpop.f32.mrb[0].mxu0
        %v4051 = vadd.f32 %v3615, %v4050
        %v4052 = vpop.f32.mrb[0].mxu0
        %v4053 = vadd.f32 %v3619, %v4052
        %4054 = vmatprep.mubr.bf16.mxu0 %v3610
        %4055 = vmatmul.mubr.bf16.gmra.mrb[0].mxu0 %v3609
        %v4056 = vpop.f32.mrb[0].mxu0
        %v4057 = vadd.f32 %v3615, %v4056
        %v4058 = vpop.f32.mrb[0].mxu0
        %v4059 = vadd.f32 %v3619, %v4058
        %v4060 = vpop.f32.mrb[0].mxu0
        %v4061 = vadd.f32 %v3615, %v4060
        %v4062 = vpop.f32.mrb[0].mxu0
        %v4063 = vadd.f32 %v3619, %v4062
        %4064 = vdwg.mxu0
        %4065 = vmatprep.subr.bf16.mxu0 %v3827
        %4066 = vmatpush1.bf16.msra.mxu0 %v3826
        %4067 = vmatprep.subr.bf16.mxu0 %v3831
        %4068 = vmatpush1.bf16.msra.mxu0 %v3830
        %4069 = vmatprep.subr.bf16.mxu0 %v3835
        %4070 = vmatpush1.bf16.msra.mxu0 %v3834
        %4071 = vmatprep.subr.bf16.mxu0 %v3839
        %4072 = vmatpush1.bf16.msra.mxu0 %v3838
        %4073 = vmatprep.subr.bf16.mxu0 %v3843
        %4074 = vmatpush1.bf16.msra.mxu0 %v3842
        %4075 = vmatprep.subr.bf16.mxu0 %v3847
        %4076 = vmatpush1.bf16.msra.mxu0 %v3846
        %4077 = vmatprep.subr.bf16.mxu0 %v3851
        %4078 = vmatpush1.bf16.msra.mxu0 %v3850
        %4079 = vmatprep.subr.bf16.mxu0 %v3855
        %4080 = vmatpush1.bf16.msra.mxu0 %v3854
        %4081 = vmatprep.subr.bf16.mxu0 %v3859
        %4082 = vmatpush1.bf16.msra.mxu0 %v3858
        %4083 = vmatprep.subr.bf16.mxu0 %v3863
        %4084 = vmatpush1.bf16.msra.mxu0 %v3862
        %4085 = vmatprep.subr.bf16.mxu0 %v3867
        %4086 = vmatpush1.bf16.msra.mxu0 %v3866
        %4087 = vmatprep.subr.bf16.mxu0 %v3871
        %4088 = vmatpush1.bf16.msra.mxu0 %v3870
        %4089 = vmatprep.subr.bf16.mxu0 %v3875
        %4090 = vmatpush1.bf16.msra.mxu0 %v3874
        %4091 = vmatprep.subr.bf16.mxu0 %v3879
        %4092 = vmatpush1.bf16.msra.mxu0 %v3878
        %4093 = vmatprep.subr.bf16.mxu0 %v3883
        %4094 = vmatpush1.bf16.msra.mxu0 %v3882
        %4095 = vmatprep.subr.bf16.mxu0 %v3887
        %4096 = vmatpush1.bf16.msra.mxu0 %v3886
        %4097 = vmatprep.mubr.bf16.mxu0 %v3596
        %4098 = vmatmul.mubr.bf16.gmra.mrb[0].mxu0 %v3595
        %v4099 = vpop.f32.mrb[0].mxu0
        %v4100 = vadd.f32 %v3623, %v4099
        %v4101 = vpop.f32.mrb[0].mxu0
        %v4102 = vadd.f32 %v3627, %v4101
        %v4103 = vpop.f32.mrb[0].mxu0
        %v4104 = vadd.f32 %v3623, %v4103
        %v4105 = vpop.f32.mrb[0].mxu0
        %v4106 = vadd.f32 %v3627, %v4105
        %4107 = vmatprep.mubr.bf16.mxu0 %v3598
        %4108 = vmatmul.mubr.bf16.gmra.mrb[0].mxu0 %v3597
        %v4109 = vpop.f32.mrb[0].mxu0
        %v4110 = vadd.f32 %v3623, %v4109
        %v4111 = vpop.f32.mrb[0].mxu0
        %v4112 = vadd.f32 %v3627, %v4111
        %v4113 = vpop.f32.mrb[0].mxu0
        %v4114 = vadd.f32 %v3623, %v4113
        %v4115 = vpop.f32.mrb[0].mxu0
        %v4116 = vadd.f32 %v3627, %v4115
        %4117 = vmatprep.mubr.bf16.mxu0 %v3600
        %4118 = vmatmul.mubr.bf16.gmra.mrb[0].mxu0 %v3599
        %v4119 = vpop.f32.mrb[0].mxu0
        %v4120 = vadd.f32 %v3623, %v4119
        %v4121 = vpop.f32.mrb[0].mxu0
        %v4122 = vadd.f32 %v3627, %v4121
        %v4123 = vpop.f32.mrb[0].mxu0
        %v4124 = vadd.f32 %v3623, %v4123
        %v4125 = vpop.f32.mrb[0].mxu0
        %v4126 = vadd.f32 %v3627, %v4125
        %4127 = vmatprep.mubr.bf16.mxu0 %v3602
        %4128 = vmatmul.mubr.bf16.gmra.mrb[0].mxu0 %v3601
        %v4129 = vpop.f32.mrb[0].mxu0
        %v4130 = vadd.f32 %v3623, %v4129
        %v4131 = vpop.f32.mrb[0].mxu0
        %v4132 = vadd.f32 %v3627, %v4131
        %v4133 = vpop.f32.mrb[0].mxu0
        %v4134 = vadd.f32 %v3623, %v4133
        %v4135 = vpop.f32.mrb[0].mxu0
        %v4136 = vadd.f32 %v3627, %v4135
        %4137 = vmatprep.mubr.bf16.mxu0 %v3604
        %4138 = vmatmul.mubr.bf16.gmra.mrb[0].mxu0 %v3603
        %v4139 = vpop.f32.mrb[0].mxu0
        %v4140 = vadd.f32 %v3623, %v4139
        %v4141 = vpop.f32.mrb[0].mxu0
        %v4142 = vadd.f32 %v3627, %v4141
        %v4143 = vpop.f32.mrb[0].mxu0
        %v4144 = vadd.f32 %v3623, %v4143
        %v4145 = vpop.f32.mrb[0].mxu0
        %v4146 = vadd.f32 %v3627, %v4145
        %4147 = vmatprep.mubr.bf16.mxu0 %v3606
        %4148 = vmatmul.mubr.bf16.gmra.mrb[0].mxu0 %v3605
        %v4149 = vpop.f32.mrb[0].mxu0
        %v4150 = vadd.f32 %v3623, %v4149
        %v4151 = vpop.f32.mrb[0].mxu0
        %v4152 = vadd.f32 %v3627, %v4151
        %v4153 = vpop.f32.mrb[0].mxu0
        %v4154 = vadd.f32 %v3623, %v4153
        %v4155 = vpop.f32.mrb[0].mxu0
        %v4156 = vadd.f32 %v3627, %v4155
        %4157 = vmatprep.mubr.bf16.mxu0 %v3608
        %4158 = vmatmul.mubr.bf16.gmra.mrb[0].mxu0 %v3607
        %v4159 = vpop.f32.mrb[0].mxu0
        %v4160 = vadd.f32 %v3623, %v4159
        %v4161 = vpop.f32.mrb[0].mxu0
        %v4162 = vadd.f32 %v3627, %v4161
        %v4163 = vpop.f32.mrb[0].mxu0
        %v4164 = vadd.f32 %v3623, %v4163
        %v4165 = vpop.f32.mrb[0].mxu0
        %v4166 = vadd.f32 %v3627, %v4165
        %4167 = vmatprep.mubr.bf16.mxu0 %v3610
        %4168 = vmatmul.mubr.bf16.gmra.mrb[0].mxu0 %v3609
        %v4169 = vpop.f32.mrb[0].mxu0
        %v4170 = vadd.f32 %v3623, %v4169
        %v4171 = vpop.f32.mrb[0].mxu0
        %v4172 = vadd.f32 %v3627, %v4171
        %v4173 = vpop.f32.mrb[0].mxu0
        %v4174 = vadd.f32 %v3623, %v4173
        %v4175 = vpop.f32.mrb[0].mxu0
        %v4176 = vadd.f32 %v3627, %v4175
        %4177 = vdwg.mxu0
        %v4178 = vmul.f32 %v3987, 0.01
        %v4179 = vmul.f32 %v3989, 0.01
        %v4180 = vmul.f32 %v4100, 0.01
        %v4181 = vmul.f32 %v4102, 0.01
        %v4182 = vmul.f32 %v3991, 0.01
        %v4183 = vmul.f32 %v3993, 0.01
        %v4184 = vmul.f32 %v4104, 0.01
        %v4185 = vmul.f32 %v4106, 0.01
        %v4186 = vmul.f32 %v3997, 0.01
        %v4187 = vmul.f32 %v3999, 0.01
        %v4188 = vmul.f32 %v4110, 0.01
        %v4189 = vmul.f32 %v4112, 0.01
        %v4190 = vmul.f32 %v4001, 0.01
        %v4191 = vmul.f32 %v4003, 0.01
        %v4192 = vmul.f32 %v4114, 0.01
        %v4193 = vmul.f32 %v4116, 0.01
        %v4194 = vmul.f32 %v4007, 0.01
        %v4195 = vmul.f32 %v4009, 0.01
        %v4196 = vmul.f32 %v4120, 0.01
        %v4197 = vmul.f32 %v4122, 0.01
        %v4198 = vmul.f32 %v4011, 0.01
        %v4199 = vmul.f32 %v4013, 0.01
        %v4200 = vmul.f32 %v4124, 0.01
        %v4201 = vmul.f32 %v4126, 0.01
        %v4202 = vmul.f32 %v4017, 0.01
        %v4203 = vmul.f32 %v4019, 0.01
        %v4204 = vmul.f32 %v4130, 0.01
        %v4205 = vmul.f32 %v4132, 0.01
        %v4206 = vmul.f32 %v4021, 0.01
        %v4207 = vmul.f32 %v4023, 0.01
        %v4208 = vmul.f32 %v4134, 0.01
        %v4209 = vmul.f32 %v4136, 0.01
        %v4210 = vmul.f32 %v4027, 0.01
        %v4211 = vmul.f32 %v4029, 0.01
        %v4212 = vmul.f32 %v4140, 0.01
        %v4213 = vmul.f32 %v4142, 0.01
        %v4214 = vmul.f32 %v4031, 0.01
        %v4215 = vmul.f32 %v4033, 0.01
        %v4216 = vmul.f32 %v4144, 0.01
        %v4217 = vmul.f32 %v4146, 0.01
        %v4218 = vmul.f32 %v4037, 0.01
        %v4219 = vmul.f32 %v4039, 0.01
        %v4220 = vmul.f32 %v4150, 0.01
        %v4221 = vmul.f32 %v4152, 0.01
        %v4222 = vmul.f32 %v4041, 0.01
        %v4223 = vmul.f32 %v4043, 0.01
        %v4224 = vmul.f32 %v4154, 0.01
        %v4225 = vmul.f32 %v4156, 0.01
        %v4226 = vmul.f32 %v4047, 0.01
        %v4227 = vmul.f32 %v4049, 0.01
        %v4228 = vmul.f32 %v4160, 0.01
        %v4229 = vmul.f32 %v4162, 0.01
        %v4230 = vmul.f32 %v4051, 0.01
        %v4231 = vmul.f32 %v4053, 0.01
        %v4232 = vmul.f32 %v4164, 0.01
        %v4233 = vmul.f32 %v4166, 0.01
        %v4234 = vmul.f32 %v4057, 0.01
        %v4235 = vmul.f32 %v4059, 0.01
        %v4236 = vmul.f32 %v4170, 0.01
        %v4237 = vmul.f32 %v4172, 0.01
        %v4238 = vmul.f32 %v4061, 0.01
        %v4239 = vmul.f32 %v4063, 0.01
        %v4240 = vmul.f32 %v4174, 0.01
        %v4241 = vmul.f32 %v4176, 0.01
        %v4242 = vmax.f32 %v3987, %v4178
        %v4243 = vmax.f32 %v3989, %v4179
        %v4244 = vmax.f32 %v4100, %v4180
        %v4245 = vmax.f32 %v4102, %v4181
        %v4246 = vmax.f32 %v3991, %v4182
        %v4247 = vmax.f32 %v3993, %v4183
        %v4248 = vmax.f32 %v4104, %v4184
        %v4249 = vmax.f32 %v4106, %v4185
        %v4250 = vmax.f32 %v3997, %v4186
        %v4251 = vmax.f32 %v3999, %v4187
        %v4252 = vmax.f32 %v4110, %v4188
        %v4253 = vmax.f32 %v4112, %v4189
        %v4254 = vmax.f32 %v4001, %v4190
        %v4255 = vmax.f32 %v4003, %v4191
        %v4256 = vmax.f32 %v4114, %v4192
        %v4257 = vmax.f32 %v4116, %v4193
        %v4258 = vmax.f32 %v4007, %v4194
        %v4259 = vmax.f32 %v4009, %v4195
        %v4260 = vmax.f32 %v4120, %v4196
        %v4261 = vmax.f32 %v4122, %v4197
        %v4262 = vmax.f32 %v4011, %v4198
        %v4263 = vmax.f32 %v4013, %v4199
        %v4264 = vmax.f32 %v4124, %v4200
        %v4265 = vmax.f32 %v4126, %v4201
        %v4266 = vmax.f32 %v4017, %v4202
        %v4267 = vmax.f32 %v4019, %v4203
        %v4268 = vmax.f32 %v4130, %v4204
        %v4269 = vmax.f32 %v4132, %v4205
        %v4270 = vmax.f32 %v4021, %v4206
        %v4271 = vmax.f32 %v4023, %v4207
        %v4272 = vmax.f32 %v4134, %v4208
        %v4273 = vmax.f32 %v4136, %v4209
        %v4274 = vmax.f32 %v4027, %v4210
        %v4275 = vmax.f32 %v4029, %v4211
        %v4276 = vmax.f32 %v4140, %v4212
        %v4277 = vmax.f32 %v4142, %v4213
        %v4278 = vmax.f32 %v4031, %v4214
        %v4279 = vmax.f32 %v4033, %v4215
        %v4280 = vmax.f32 %v4144, %v4216
        %v4281 = vmax.f32 %v4146, %v4217
        %v4282 = vmax.f32 %v4037, %v4218
        %v4283 = vmax.f32 %v4039, %v4219
        %v4284 = vmax.f32 %v4150, %v4220
        %v4285 = vmax.f32 %v4152, %v4221
        %v4286 = vmax.f32 %v4041, %v4222
        %v4287 = vmax.f32 %v4043, %v4223
        %v4288 = vmax.f32 %v4154, %v4224
        %v4289 = vmax.f32 %v4156, %v4225
        %v4290 = vmax.f32 %v4047, %v4226
        %v4291 = vmax.f32 %v4049, %v4227
        %v4292 = vmax.f32 %v4160, %v4228
        %v4293 = vmax.f32 %v4162, %v4229
        %v4294 = vmax.f32 %v4051, %v4230
        %v4295 = vmax.f32 %v4053, %v4231
        %v4296 = vmax.f32 %v4164, %v4232
        %v4297 = vmax.f32 %v4166, %v4233
        %v4298 = vmax.f32 %v4057, %v4234
        %v4299 = vmax.f32 %v4059, %v4235
        %v4300 = vmax.f32 %v4170, %v4236
        %v4301 = vmax.f32 %v4172, %v4237
        %v4302 = vmax.f32 %v4061, %v4238
        %v4303 = vmax.f32 %v4063, %v4239
        %v4304 = vmax.f32 %v4174, %v4240
        %v4305 = vmax.f32 %v4176, %v4241
        %v4306 = vld [vmem:[#allocation5 + $0x1100] sm:$0xff]
        %v4307 = vld [vmem:[#allocation5 + $0x1110] sm:$0xff]
        %v4308 = vld [vmem:[#allocation5 + $0x1120] sm:$0xff]
        %v4309 = vld [vmem:[#allocation5 + $0x1130] sm:$0xff]
        %v4310 = vld [vmem:[#allocation5 + $0x1140] sm:$0xff]
        %v4311 = vld [vmem:[#allocation5 + $0x1150] sm:$0xff]
        %v4312 = vld [vmem:[#allocation5 + $0x1160] sm:$0xff]
        %v4313 = vld [vmem:[#allocation5 + $0x1170] sm:$0xff]
        %v4314 = vld [vmem:[#allocation5 + $0x1180] sm:$0xff]
        %v4315 = vld [vmem:[#allocation5 + $0x1190] sm:$0xff]
        %v4316 = vld [vmem:[#allocation5 + $0x11a0] sm:$0xff]
        %v4317 = vld [vmem:[#allocation5 + $0x11b0] sm:$0xff]
        %v4318 = vld [vmem:[#allocation5 + $0x11c0] sm:$0xff]
        %v4319 = vld [vmem:[#allocation5 + $0x11d0] sm:$0xff]
        %v4320 = vld [vmem:[#allocation5 + $0x11e0] sm:$0xff]
        %v4321 = vld [vmem:[#allocation5 + $0x11f0] sm:$0xff]
        %v4322 = vld [vmem:[#allocation5 + $0x1200] sm:$0xff]
        %v4323 = vld [vmem:[#allocation5 + $0x1210] sm:$0xff]
        %v4324 = vld [vmem:[#allocation5 + $0x1220] sm:$0xff]
        %v4325 = vld [vmem:[#allocation5 + $0x1230] sm:$0xff]
        %v4326 = vld [vmem:[#allocation5 + $0x1240] sm:$0xff]
        %v4327 = vld [vmem:[#allocation5 + $0x1250] sm:$0xff]
        %v4328 = vld [vmem:[#allocation5 + $0x1260] sm:$0xff]
        %v4329 = vld [vmem:[#allocation5 + $0x1270] sm:$0xff]
        %v4330 = vld [vmem:[#allocation5 + $0x1280] sm:$0xff]
        %v4331 = vld [vmem:[#allocation5 + $0x1290] sm:$0xff]
        %v4332 = vld [vmem:[#allocation5 + $0x12a0] sm:$0xff]
        %v4333 = vld [vmem:[#allocation5 + $0x12b0] sm:$0xff]
        %v4334 = vld [vmem:[#allocation5 + $0x12c0] sm:$0xff]
        %v4335 = vld [vmem:[#allocation5 + $0x12d0] sm:$0xff]
        %v4336 = vld [vmem:[#allocation5 + $0x12e0] sm:$0xff]
        %v4337 = vld [vmem:[#allocation5 + $0x12f0] sm:$0xff]
        %v4338 = vld [vmem:[#allocation5 + $0x1300] sm:$0xff]
        %v4339 = vld [vmem:[#allocation5 + $0x1310] sm:$0xff]
        %v4340 = vld [vmem:[#allocation5 + $0x1320] sm:$0xff]
        %v4341 = vld [vmem:[#allocation5 + $0x1330] sm:$0xff]
        %v4342 = vld [vmem:[#allocation5 + $0x1340] sm:$0xff]
        %v4343 = vld [vmem:[#allocation5 + $0x1350] sm:$0xff]
        %v4344 = vld [vmem:[#allocation5 + $0x1360] sm:$0xff]
        %v4345 = vld [vmem:[#allocation5 + $0x1370] sm:$0xff]
        %v4346 = vld [vmem:[#allocation5 + $0x1380] sm:$0xff]
        %v4347 = vld [vmem:[#allocation5 + $0x1390] sm:$0xff]
        %v4348 = vld [vmem:[#allocation5 + $0x13a0] sm:$0xff]
        %v4349 = vld [vmem:[#allocation5 + $0x13b0] sm:$0xff]
        %v4350 = vld [vmem:[#allocation5 + $0x13c0] sm:$0xff]
        %v4351 = vld [vmem:[#allocation5 + $0x13d0] sm:$0xff]
        %v4352 = vld [vmem:[#allocation5 + $0x13e0] sm:$0xff]
        %v4353 = vld [vmem:[#allocation5 + $0x13f0] sm:$0xff]
        %v4354 = vld [vmem:[#allocation5 + $0x1400] sm:$0xff]
        %v4355 = vld [vmem:[#allocation5 + $0x1410] sm:$0xff]
        %v4356 = vld [vmem:[#allocation5 + $0x1420] sm:$0xff]
        %v4357 = vld [vmem:[#allocation5 + $0x1430] sm:$0xff]
        %v4358 = vld [vmem:[#allocation5 + $0x1440] sm:$0xff]
        %v4359 = vld [vmem:[#allocation5 + $0x1450] sm:$0xff]
        %v4360 = vld [vmem:[#allocation5 + $0x1460] sm:$0xff]
        %v4361 = vld [vmem:[#allocation5 + $0x1470] sm:$0xff]
        %v4362 = vld [vmem:[#allocation5 + $0x1480] sm:$0xff]
        %v4363 = vld [vmem:[#allocation5 + $0x1490] sm:$0xff]
        %v4364 = vld [vmem:[#allocation5 + $0x14a0] sm:$0xff]
        %v4365 = vld [vmem:[#allocation5 + $0x14b0] sm:$0xff]
        %v4366 = vld [vmem:[#allocation5 + $0x14c0] sm:$0xff]
        %v4367 = vld [vmem:[#allocation5 + $0x14d0] sm:$0xff]
        %v4368 = vld [vmem:[#allocation5 + $0x14e0] sm:$0xff]
        %v4369 = vld [vmem:[#allocation5 + $0x14f0] sm:$0xff]
        %s4370 = scalar_lea.vmem [#allocation7], 35
        %v4371 = vld [vmem:[%s4370] ss:$8 sm:$0x3]
        %v4372 = vpack.c.bf16 %v4246, %v4242
        %v4373 = vpack.c.bf16 %v4247, %v4243
        %v4374 = vpack.c.bf16 %v4248, %v4244
        %v4375 = vpack.c.bf16 %v4249, %v4245
        %v4376 = vpack.c.bf16 %v4254, %v4250
        %v4377 = vpack.c.bf16 %v4255, %v4251
        %v4378 = vpack.c.bf16 %v4256, %v4252
        %v4379 = vpack.c.bf16 %v4257, %v4253
        %v4380 = vpack.c.bf16 %v4262, %v4258
        %v4381 = vpack.c.bf16 %v4263, %v4259
        %v4382 = vpack.c.bf16 %v4264, %v4260
        %v4383 = vpack.c.bf16 %v4265, %v4261
        %v4384 = vpack.c.bf16 %v4270, %v4266
        %v4385 = vpack.c.bf16 %v4271, %v4267
        %v4386 = vpack.c.bf16 %v4272, %v4268
        %v4387 = vpack.c.bf16 %v4273, %v4269
        %v4388 = vpack.c.bf16 %v4278, %v4274
        %v4389 = vpack.c.bf16 %v4279, %v4275
        %v4390 = vpack.c.bf16 %v4280, %v4276
        %v4391 = vpack.c.bf16 %v4281, %v4277
        %v4392 = vpack.c.bf16 %v4286, %v4282
        %v4393 = vpack.c.bf16 %v4287, %v4283
        %v4394 = vpack.c.bf16 %v4288, %v4284
        %v4395 = vpack.c.bf16 %v4289, %v4285
        %v4396 = vpack.c.bf16 %v4294, %v4290
        %v4397 = vpack.c.bf16 %v4295, %v4291
        %v4398 = vpack.c.bf16 %v4296, %v4292
        %v4399 = vpack.c.bf16 %v4297, %v4293
        %v4400 = vpack.c.bf16 %v4302, %v4298
        %v4401 = vpack.c.bf16 %v4303, %v4299
        %v4402 = vpack.c.bf16 %v4304, %v4300
        %v4403 = vpack.c.bf16 %v4305, %v4301
        %v4405 = vlaneseq
        %v4406 = vshrl.u32 %v4405, 7
        %v4407 = vsub.s32 0, %v4406
        %v4408 = vrot.slane %v4371, %v4407
        %v4409 = vlaneseq
        %v4410 = vshrl.u32 %v4409, 7
        %v4411 = vsub.s32 1, %v4410
        %v4412 = vrot.slane %v4371, %v4411
        %v4479 = vunpack.c.l.b16 %v4306
        %v4480 = vunpack.c.h.b16 %v4306
        %v4481 = vunpack.c.l.b16 %v4307
        %v4482 = vunpack.c.h.b16 %v4307
        %v4483 = vunpack.c.l.b16 %v4308
        %v4484 = vunpack.c.h.b16 %v4308
        %v4485 = vunpack.c.l.b16 %v4309
        %v4486 = vunpack.c.h.b16 %v4309
        %v4487 = vunpack.c.l.b16 %v4310
        %v4488 = vunpack.c.h.b16 %v4310
        %v4489 = vunpack.c.l.b16 %v4311
        %v4490 = vunpack.c.h.b16 %v4311
        %v4491 = vunpack.c.l.b16 %v4312
        %v4492 = vunpack.c.h.b16 %v4312
        %v4493 = vunpack.c.l.b16 %v4313
        %v4494 = vunpack.c.h.b16 %v4313
        %v4495 = vunpack.c.l.b16 %v4314
        %v4496 = vunpack.c.h.b16 %v4314
        %v4497 = vunpack.c.l.b16 %v4315
        %v4498 = vunpack.c.h.b16 %v4315
        %v4499 = vunpack.c.l.b16 %v4316
        %v4500 = vunpack.c.h.b16 %v4316
        %v4501 = vunpack.c.l.b16 %v4317
        %v4502 = vunpack.c.h.b16 %v4317
        %v4503 = vunpack.c.l.b16 %v4318
        %v4504 = vunpack.c.h.b16 %v4318
        %v4505 = vunpack.c.l.b16 %v4319
        %v4506 = vunpack.c.h.b16 %v4319
        %v4507 = vunpack.c.l.b16 %v4320
        %v4508 = vunpack.c.h.b16 %v4320
        %v4509 = vunpack.c.l.b16 %v4321
        %v4510 = vunpack.c.h.b16 %v4321
        %v4511 = vunpack.c.l.b16 %v4322
        %v4512 = vunpack.c.h.b16 %v4322
        %v4513 = vunpack.c.l.b16 %v4323
        %v4514 = vunpack.c.h.b16 %v4323
        %v4515 = vunpack.c.l.b16 %v4324
        %v4516 = vunpack.c.h.b16 %v4324
        %v4517 = vunpack.c.l.b16 %v4325
        %v4518 = vunpack.c.h.b16 %v4325
        %v4519 = vunpack.c.l.b16 %v4326
        %v4520 = vunpack.c.h.b16 %v4326
        %v4521 = vunpack.c.l.b16 %v4327
        %v4522 = vunpack.c.h.b16 %v4327
        %v4523 = vunpack.c.l.b16 %v4328
        %v4524 = vunpack.c.h.b16 %v4328
        %v4525 = vunpack.c.l.b16 %v4329
        %v4526 = vunpack.c.h.b16 %v4329
        %v4527 = vunpack.c.l.b16 %v4330
        %v4528 = vunpack.c.h.b16 %v4330
        %v4529 = vunpack.c.l.b16 %v4331
        %v4530 = vunpack.c.h.b16 %v4331
        %v4531 = vunpack.c.l.b16 %v4332
        %v4532 = vunpack.c.h.b16 %v4332
        %v4533 = vunpack.c.l.b16 %v4333
        %v4534 = vunpack.c.h.b16 %v4333
        %v4535 = vunpack.c.l.b16 %v4334
        %v4536 = vunpack.c.h.b16 %v4334
        %v4537 = vunpack.c.l.b16 %v4335
        %v4538 = vunpack.c.h.b16 %v4335
        %v4539 = vunpack.c.l.b16 %v4336
        %v4540 = vunpack.c.h.b16 %v4336
        %v4541 = vunpack.c.l.b16 %v4337
        %v4542 = vunpack.c.h.b16 %v4337
        %v4543 = vunpack.c.l.b16 %v4338
        %v4544 = vunpack.c.h.b16 %v4338
        %v4545 = vunpack.c.l.b16 %v4339
        %v4546 = vunpack.c.h.b16 %v4339
        %v4547 = vunpack.c.l.b16 %v4340
        %v4548 = vunpack.c.h.b16 %v4340
        %v4549 = vunpack.c.l.b16 %v4341
        %v4550 = vunpack.c.h.b16 %v4341
        %v4551 = vunpack.c.l.b16 %v4342
        %v4552 = vunpack.c.h.b16 %v4342
        %v4553 = vunpack.c.l.b16 %v4343
        %v4554 = vunpack.c.h.b16 %v4343
        %v4555 = vunpack.c.l.b16 %v4344
        %v4556 = vunpack.c.h.b16 %v4344
        %v4557 = vunpack.c.l.b16 %v4345
        %v4558 = vunpack.c.h.b16 %v4345
        %v4559 = vunpack.c.l.b16 %v4346
        %v4560 = vunpack.c.h.b16 %v4346
        %v4561 = vunpack.c.l.b16 %v4347
        %v4562 = vunpack.c.h.b16 %v4347
        %v4563 = vunpack.c.l.b16 %v4348
        %v4564 = vunpack.c.h.b16 %v4348
        %v4565 = vunpack.c.l.b16 %v4349
        %v4566 = vunpack.c.h.b16 %v4349
        %v4567 = vunpack.c.l.b16 %v4350
        %v4568 = vunpack.c.h.b16 %v4350
        %v4569 = vunpack.c.l.b16 %v4351
        %v4570 = vunpack.c.h.b16 %v4351
        %v4571 = vunpack.c.l.b16 %v4352
        %v4572 = vunpack.c.h.b16 %v4352
        %v4573 = vunpack.c.l.b16 %v4353
        %v4574 = vunpack.c.h.b16 %v4353
        %v4575 = vunpack.c.l.b16 %v4354
        %v4576 = vunpack.c.h.b16 %v4354
        %v4577 = vunpack.c.l.b16 %v4355
        %v4578 = vunpack.c.h.b16 %v4355
        %v4579 = vunpack.c.l.b16 %v4356
        %v4580 = vunpack.c.h.b16 %v4356
        %v4581 = vunpack.c.l.b16 %v4357
        %v4582 = vunpack.c.h.b16 %v4357
        %v4583 = vunpack.c.l.b16 %v4358
        %v4584 = vunpack.c.h.b16 %v4358
        %v4585 = vunpack.c.l.b16 %v4359
        %v4586 = vunpack.c.h.b16 %v4359
        %v4587 = vunpack.c.l.b16 %v4360
        %v4588 = vunpack.c.h.b16 %v4360
        %v4589 = vunpack.c.l.b16 %v4361
        %v4590 = vunpack.c.h.b16 %v4361
        %v4591 = vunpack.c.l.b16 %v4362
        %v4592 = vunpack.c.h.b16 %v4362
        %v4593 = vunpack.c.l.b16 %v4363
        %v4594 = vunpack.c.h.b16 %v4363
        %v4595 = vunpack.c.l.b16 %v4364
        %v4596 = vunpack.c.h.b16 %v4364
        %v4597 = vunpack.c.l.b16 %v4365
        %v4598 = vunpack.c.h.b16 %v4365
        %v4599 = vunpack.c.l.b16 %v4366
        %v4600 = vunpack.c.h.b16 %v4366
        %v4601 = vunpack.c.l.b16 %v4367
        %v4602 = vunpack.c.h.b16 %v4367
        %v4603 = vunpack.c.l.b16 %v4368
        %v4604 = vunpack.c.h.b16 %v4368
        %v4605 = vunpack.c.l.b16 %v4369
        %v4606 = vunpack.c.h.b16 %v4369
        %v4607 = vpack.c.b16 %v4481, %v4479
        %v4608 = vpack.c.b16 %v4482, %v4480
        %v4609 = vpack.c.b16 %v4485, %v4483
        %v4610 = vpack.c.b16 %v4486, %v4484
        %v4611 = vpack.c.b16 %v4489, %v4487
        %v4612 = vpack.c.b16 %v4490, %v4488
        %v4613 = vpack.c.b16 %v4493, %v4491
        %v4614 = vpack.c.b16 %v4494, %v4492
        %v4615 = vpack.c.b16 %v4497, %v4495
        %v4616 = vpack.c.b16 %v4498, %v4496
        %v4617 = vpack.c.b16 %v4501, %v4499
        %v4618 = vpack.c.b16 %v4502, %v4500
        %v4619 = vpack.c.b16 %v4505, %v4503
        %v4620 = vpack.c.b16 %v4506, %v4504
        %v4621 = vpack.c.b16 %v4509, %v4507
        %v4622 = vpack.c.b16 %v4510, %v4508
        %v4623 = vpack.c.b16 %v4513, %v4511
        %v4624 = vpack.c.b16 %v4514, %v4512
        %v4625 = vpack.c.b16 %v4517, %v4515
        %v4626 = vpack.c.b16 %v4518, %v4516
        %v4627 = vpack.c.b16 %v4521, %v4519
        %v4628 = vpack.c.b16 %v4522, %v4520
        %v4629 = vpack.c.b16 %v4525, %v4523
        %v4630 = vpack.c.b16 %v4526, %v4524
        %v4631 = vpack.c.b16 %v4529, %v4527
        %v4632 = vpack.c.b16 %v4530, %v4528
        %v4633 = vpack.c.b16 %v4533, %v4531
        %v4634 = vpack.c.b16 %v4534, %v4532
        %v4635 = vpack.c.b16 %v4537, %v4535
        %v4636 = vpack.c.b16 %v4538, %v4536
        %v4637 = vpack.c.b16 %v4541, %v4539
        %v4638 = vpack.c.b16 %v4542, %v4540
        %v4639 = vpack.c.b16 %v4545, %v4543
        %v4640 = vpack.c.b16 %v4546, %v4544
        %v4641 = vpack.c.b16 %v4549, %v4547
        %v4642 = vpack.c.b16 %v4550, %v4548
        %v4643 = vpack.c.b16 %v4553, %v4551
        %v4644 = vpack.c.b16 %v4554, %v4552
        %v4645 = vpack.c.b16 %v4557, %v4555
        %v4646 = vpack.c.b16 %v4558, %v4556
        %v4647 = vpack.c.b16 %v4561, %v4559
        %v4648 = vpack.c.b16 %v4562, %v4560
        %v4649 = vpack.c.b16 %v4565, %v4563
        %v4650 = vpack.c.b16 %v4566, %v4564
        %v4651 = vpack.c.b16 %v4569, %v4567
        %v4652 = vpack.c.b16 %v4570, %v4568
        %v4653 = vpack.c.b16 %v4573, %v4571
        %v4654 = vpack.c.b16 %v4574, %v4572
        %v4655 = vpack.c.b16 %v4577, %v4575
        %v4656 = vpack.c.b16 %v4578, %v4576
        %v4657 = vpack.c.b16 %v4581, %v4579
        %v4658 = vpack.c.b16 %v4582, %v4580
        %v4659 = vpack.c.b16 %v4585, %v4583
        %v4660 = vpack.c.b16 %v4586, %v4584
        %v4661 = vpack.c.b16 %v4589, %v4587
        %v4662 = vpack.c.b16 %v4590, %v4588
        %v4663 = vpack.c.b16 %v4593, %v4591
        %v4664 = vpack.c.b16 %v4594, %v4592
        %v4665 = vpack.c.b16 %v4597, %v4595
        %v4666 = vpack.c.b16 %v4598, %v4596
        %v4667 = vpack.c.b16 %v4601, %v4599
        %v4668 = vpack.c.b16 %v4602, %v4600
        %v4669 = vpack.c.b16 %v4605, %v4603
        %v4670 = vpack.c.b16 %v4606, %v4604
        %4735 = vmatprep.subr.bf16.mxu0 %v4608
        %4736 = vmatpush1.bf16.msra.mxu0 %v4607
        %4737 = vmatprep.subr.bf16.mxu0 %v4610
        %4738 = vmatpush1.bf16.msra.mxu0 %v4609
        %4739 = vmatprep.subr.bf16.mxu0 %v4612
        %4740 = vmatpush1.bf16.msra.mxu0 %v4611
        %4741 = vmatprep.subr.bf16.mxu0 %v4614
        %4742 = vmatpush1.bf16.msra.mxu0 %v4613
        %4743 = vmatprep.subr.bf16.mxu0 %v4616
        %4744 = vmatpush1.bf16.msra.mxu0 %v4615
        %4745 = vmatprep.subr.bf16.mxu0 %v4618
        %4746 = vmatpush1.bf16.msra.mxu0 %v4617
        %4747 = vmatprep.subr.bf16.mxu0 %v4620
        %4748 = vmatpush1.bf16.msra.mxu0 %v4619
        %4749 = vmatprep.subr.bf16.mxu0 %v4622
        %4750 = vmatpush1.bf16.msra.mxu0 %v4621
        %4751 = vmatprep.subr.bf16.mxu0 %v4624
        %4752 = vmatpush1.bf16.msra.mxu0 %v4623
        %4753 = vmatprep.subr.bf16.mxu0 %v4626
        %4754 = vmatpush1.bf16.msra.mxu0 %v4625
        %4755 = vmatprep.subr.bf16.mxu0 %v4628
        %4756 = vmatpush1.bf16.msra.mxu0 %v4627
        %4757 = vmatprep.subr.bf16.mxu0 %v4630
        %4758 = vmatpush1.bf16.msra.mxu0 %v4629
        %4759 = vmatprep.subr.bf16.mxu0 %v4632
        %4760 = vmatpush1.bf16.msra.mxu0 %v4631
        %4761 = vmatprep.subr.bf16.mxu0 %v4634
        %4762 = vmatpush1.bf16.msra.mxu0 %v4633
        %4763 = vmatprep.subr.bf16.mxu0 %v4636
        %4764 = vmatpush1.bf16.msra.mxu0 %v4635
        %4765 = vmatprep.subr.bf16.mxu0 %v4638
        %4766 = vmatpush1.bf16.msra.mxu0 %v4637
        %4767 = vmatprep.mubr.bf16.mxu0 %v4373
        %4768 = vmatmul.mubr.bf16.gmra.mrb[0].mxu0 %v4372
        %v4769 = vpop.f32.mrb[0].mxu0
        %v4770 = vadd.f32 %v4408, %v4769
        %v4771 = vpop.f32.mrb[0].mxu0
        %v4772 = vadd.f32 %v4412, %v4771
        %v4773 = vpop.f32.mrb[0].mxu0
        %v4774 = vadd.f32 %v4408, %v4773
        %v4775 = vpop.f32.mrb[0].mxu0
        %v4776 = vadd.f32 %v4412, %v4775
        %4777 = vmatprep.mubr.bf16.mxu0 %v4377
        %4778 = vmatmul.mubr.bf16.gmra.mrb[0].mxu0 %v4376
        %v4779 = vpop.f32.mrb[0].mxu0
        %v4780 = vadd.f32 %v4408, %v4779
        %v4781 = vpop.f32.mrb[0].mxu0
        %v4782 = vadd.f32 %v4412, %v4781
        %v4783 = vpop.f32.mrb[0].mxu0
        %v4784 = vadd.f32 %v4408, %v4783
        %v4785 = vpop.f32.mrb[0].mxu0
        %v4786 = vadd.f32 %v4412, %v4785
        %4787 = vmatprep.mubr.bf16.mxu0 %v4381
        %4788 = vmatmul.mubr.bf16.gmra.mrb[0].mxu0 %v4380
        %v4789 = vpop.f32.mrb[0].mxu0
        %v4790 = vadd.f32 %v4408, %v4789
        %v4791 = vpop.f32.mrb[0].mxu0
        %v4792 = vadd.f32 %v4412, %v4791
        %v4793 = vpop.f32.mrb[0].mxu0
        %v4794 = vadd.f32 %v4408, %v4793
        %v4795 = vpop.f32.mrb[0].mxu0
        %v4796 = vadd.f32 %v4412, %v4795
        %4797 = vmatprep.mubr.bf16.mxu0 %v4385
        %4798 = vmatmul.mubr.bf16.gmra.mrb[0].mxu0 %v4384
        %v4799 = vpop.f32.mrb[0].mxu0
        %v4800 = vadd.f32 %v4408, %v4799
        %v4801 = vpop.f32.mrb[0].mxu0
        %v4802 = vadd.f32 %v4412, %v4801
        %v4803 = vpop.f32.mrb[0].mxu0
        %v4804 = vadd.f32 %v4408, %v4803
        %v4805 = vpop.f32.mrb[0].mxu0
        %v4806 = vadd.f32 %v4412, %v4805
        %4807 = vmatprep.mubr.bf16.mxu0 %v4389
        %4808 = vmatmul.mubr.bf16.gmra.mrb[0].mxu0 %v4388
        %v4809 = vpop.f32.mrb[0].mxu0
        %v4810 = vadd.f32 %v4408, %v4809
        %v4811 = vpop.f32.mrb[0].mxu0
        %v4812 = vadd.f32 %v4412, %v4811
        %v4813 = vpop.f32.mrb[0].mxu0
        %v4814 = vadd.f32 %v4408, %v4813
        %v4815 = vpop.f32.mrb[0].mxu0
        %v4816 = vadd.f32 %v4412, %v4815
        %4817 = vmatprep.mubr.bf16.mxu0 %v4393
        %4818 = vmatmul.mubr.bf16.gmra.mrb[0].mxu0 %v4392
        %v4819 = vpop.f32.mrb[0].mxu0
        %v4820 = vadd.f32 %v4408, %v4819
        %v4821 = vpop.f32.mrb[0].mxu0
        %v4822 = vadd.f32 %v4412, %v4821
        %v4823 = vpop.f32.mrb[0].mxu0
        %v4824 = vadd.f32 %v4408, %v4823
        %v4825 = vpop.f32.mrb[0].mxu0
        %v4826 = vadd.f32 %v4412, %v4825
        %4827 = vmatprep.mubr.bf16.mxu0 %v4397
        %4828 = vmatmul.mubr.bf16.gmra.mrb[0].mxu0 %v4396
        %v4829 = vpop.f32.mrb[0].mxu0
        %v4830 = vadd.f32 %v4408, %v4829
        %v4831 = vpop.f32.mrb[0].mxu0
        %v4832 = vadd.f32 %v4412, %v4831
        %v4833 = vpop.f32.mrb[0].mxu0
        %v4834 = vadd.f32 %v4408, %v4833
        %v4835 = vpop.f32.mrb[0].mxu0
        %v4836 = vadd.f32 %v4412, %v4835
        %4837 = vmatprep.mubr.bf16.mxu0 %v4401
        %4838 = vmatmul.mubr.bf16.gmra.mrb[0].mxu0 %v4400
        %v4839 = vpop.f32.mrb[0].mxu0
        %v4840 = vadd.f32 %v4408, %v4839
        %v4841 = vpop.f32.mrb[0].mxu0
        %v4842 = vadd.f32 %v4412, %v4841
        %v4843 = vpop.f32.mrb[0].mxu0
        %v4844 = vadd.f32 %v4408, %v4843
        %v4845 = vpop.f32.mrb[0].mxu0
        %v4846 = vadd.f32 %v4412, %v4845
        %4847 = vdwg.mxu0
        %4848 = vmatprep.subr.bf16.mxu0 %v4640
        %4849 = vmatpush1.bf16.msra.mxu0 %v4639
        %4850 = vmatprep.subr.bf16.mxu0 %v4642
        %4851 = vmatpush1.bf16.msra.mxu0 %v4641
        %4852 = vmatprep.subr.bf16.mxu0 %v4644
        %4853 = vmatpush1.bf16.msra.mxu0 %v4643
        %4854 = vmatprep.subr.bf16.mxu0 %v4646
        %4855 = vmatpush1.bf16.msra.mxu0 %v4645
        %4856 = vmatprep.subr.bf16.mxu0 %v4648
        %4857 = vmatpush1.bf16.msra.mxu0 %v4647
        %4858 = vmatprep.subr.bf16.mxu0 %v4650
        %4859 = vmatpush1.bf16.msra.mxu0 %v4649
        %4860 = vmatprep.subr.bf16.mxu0 %v4652
        %4861 = vmatpush1.bf16.msra.mxu0 %v4651
        %4862 = vmatprep.subr.bf16.mxu0 %v4654
        %4863 = vmatpush1.bf16.msra.mxu0 %v4653
        %4864 = vmatprep.subr.bf16.mxu0 %v4656
        %4865 = vmatpush1.bf16.msra.mxu0 %v4655
        %4866 = vmatprep.subr.bf16.mxu0 %v4658
        %4867 = vmatpush1.bf16.msra.mxu0 %v4657
        %4868 = vmatprep.subr.bf16.mxu0 %v4660
        %4869 = vmatpush1.bf16.msra.mxu0 %v4659
        %4870 = vmatprep.subr.bf16.mxu0 %v4662
        %4871 = vmatpush1.bf16.msra.mxu0 %v4661
        %4872 = vmatprep.subr.bf16.mxu0 %v4664
        %4873 = vmatpush1.bf16.msra.mxu0 %v4663
        %4874 = vmatprep.subr.bf16.mxu0 %v4666
        %4875 = vmatpush1.bf16.msra.mxu0 %v4665
        %4876 = vmatprep.subr.bf16.mxu0 %v4668
        %4877 = vmatpush1.bf16.msra.mxu0 %v4667
        %4878 = vmatprep.subr.bf16.mxu0 %v4670
        %4879 = vmatpush1.bf16.msra.mxu0 %v4669
        %4880 = vmatprep.mubr.bf16.mxu0 %v4375
        %4881 = vmatmul.mubr.bf16.gmra.mrb[0].mxu0 %v4374
        %v4882 = vpop.f32.mrb[0].mxu0
        %v4883 = vadd.f32 %v4770, %v4882
        %v4884 = vpop.f32.mrb[0].mxu0
        %v4885 = vadd.f32 %v4772, %v4884
        %v4886 = vpop.f32.mrb[0].mxu0
        %v4887 = vadd.f32 %v4774, %v4886
        %v4888 = vpop.f32.mrb[0].mxu0
        %v4889 = vadd.f32 %v4776, %v4888
        %4890 = vmatprep.mubr.bf16.mxu0 %v4379
        %4891 = vmatmul.mubr.bf16.gmra.mrb[0].mxu0 %v4378
        %v4892 = vpop.f32.mrb[0].mxu0
        %v4893 = vadd.f32 %v4780, %v4892
        %v4894 = vpop.f32.mrb[0].mxu0
        %v4895 = vadd.f32 %v4782, %v4894
        %v4896 = vpop.f32.mrb[0].mxu0
        %v4897 = vadd.f32 %v4784, %v4896
        %v4898 = vpop.f32.mrb[0].mxu0
        %v4899 = vadd.f32 %v4786, %v4898
        %4900 = vmatprep.mubr.bf16.mxu0 %v4383
        %4901 = vmatmul.mubr.bf16.gmra.mrb[0].mxu0 %v4382
        %v4902 = vpop.f32.mrb[0].mxu0
        %v4903 = vadd.f32 %v4790, %v4902
        %v4904 = vpop.f32.mrb[0].mxu0
        %v4905 = vadd.f32 %v4792, %v4904
        %v4906 = vpop.f32.mrb[0].mxu0
        %v4907 = vadd.f32 %v4794, %v4906
        %v4908 = vpop.f32.mrb[0].mxu0
        %v4909 = vadd.f32 %v4796, %v4908
        %4910 = vmatprep.mubr.bf16.mxu0 %v4387
        %4911 = vmatmul.mubr.bf16.gmra.mrb[0].mxu0 %v4386
        %v4912 = vpop.f32.mrb[0].mxu0
        %v4913 = vadd.f32 %v4800, %v4912
        %v4914 = vpop.f32.mrb[0].mxu0
        %v4915 = vadd.f32 %v4802, %v4914
        %v4916 = vpop.f32.mrb[0].mxu0
        %v4917 = vadd.f32 %v4804, %v4916
        %v4918 = vpop.f32.mrb[0].mxu0
        %v4919 = vadd.f32 %v4806, %v4918
        %4920 = vmatprep.mubr.bf16.mxu0 %v4391
        %4921 = vmatmul.mubr.bf16.gmra.mrb[0].mxu0 %v4390
        %v4922 = vpop.f32.mrb[0].mxu0
        %v4923 = vadd.f32 %v4810, %v4922
        %v4924 = vpop.f32.mrb[0].mxu0
        %v4925 = vadd.f32 %v4812, %v4924
        %v4926 = vpop.f32.mrb[0].mxu0
        %v4927 = vadd.f32 %v4814, %v4926
        %v4928 = vpop.f32.mrb[0].mxu0
        %v4929 = vadd.f32 %v4816, %v4928
        %4930 = vmatprep.mubr.bf16.mxu0 %v4395
        %4931 = vmatmul.mubr.bf16.gmra.mrb[0].mxu0 %v4394
        %v4932 = vpop.f32.mrb[0].mxu0
        %v4933 = vadd.f32 %v4820, %v4932
        %v4934 = vpop.f32.mrb[0].mxu0
        %v4935 = vadd.f32 %v4822, %v4934
        %v4936 = vpop.f32.mrb[0].mxu0
        %v4937 = vadd.f32 %v4824, %v4936
        %v4938 = vpop.f32.mrb[0].mxu0
        %v4939 = vadd.f32 %v4826, %v4938
        %4940 = vmatprep.mubr.bf16.mxu0 %v4399
        %4941 = vmatmul.mubr.bf16.gmra.mrb[0].mxu0 %v4398
        %v4942 = vpop.f32.mrb[0].mxu0
        %v4943 = vadd.f32 %v4830, %v4942
        %v4944 = vpop.f32.mrb[0].mxu0
        %v4945 = vadd.f32 %v4832, %v4944
        %v4946 = vpop.f32.mrb[0].mxu0
        %v4947 = vadd.f32 %v4834, %v4946
        %v4948 = vpop.f32.mrb[0].mxu0
        %v4949 = vadd.f32 %v4836, %v4948
        %4950 = vmatprep.mubr.bf16.mxu0 %v4403
        %4951 = vmatmul.mubr.bf16.gmra.mrb[0].mxu0 %v4402
        %v4952 = vpop.f32.mrb[0].mxu0
        %v4953 = vadd.f32 %v4840, %v4952
        %v4954 = vpop.f32.mrb[0].mxu0
        %v4955 = vadd.f32 %v4842, %v4954
        %v4956 = vpop.f32.mrb[0].mxu0
        %v4957 = vadd.f32 %v4844, %v4956
        %v4958 = vpop.f32.mrb[0].mxu0
        %v4959 = vadd.f32 %v4846, %v4958
        %4960 = vdwg.mxu0
        %4961 = vst [vmem:[%s218] sm:$0xff] %v4883
        %4962 = vst [vmem:[%s218 + $0x8] sm:$0xff] %v4885
        %4963 = vst [vmem:[%s218 + $0x10] sm:$0xff] %v4887
        %4964 = vst [vmem:[%s218 + $0x18] sm:$0xff] %v4889
        %4965 = vst [vmem:[%s218 + $0x20] sm:$0xff] %v4893
        %4966 = vst [vmem:[%s218 + $0x28] sm:$0xff] %v4895
        %4967 = vst [vmem:[%s218 + $0x30] sm:$0xff] %v4897
        %4968 = vst [vmem:[%s218 + $0x38] sm:$0xff] %v4899
        %4969 = vst [vmem:[%s218 + $0x40] sm:$0xff] %v4903
        %4970 = vst [vmem:[%s218 + $0x48] sm:$0xff] %v4905
        %4971 = vst [vmem:[%s218 + $0x50] sm:$0xff] %v4907
        %4972 = vst [vmem:[%s218 + $0x58] sm:$0xff] %v4909
        %4973 = vst [vmem:[%s218 + $0x60] sm:$0xff] %v4913
        %4974 = vst [vmem:[%s218 + $0x68] sm:$0xff] %v4915
        %4975 = vst [vmem:[%s218 + $0x70] sm:$0xff] %v4917
        %4976 = vst [vmem:[%s218 + $0x78] sm:$0xff] %v4919
        %4977 = vst [vmem:[%s218 + $0x80] sm:$0xff] %v4923
        %4978 = vst [vmem:[%s218 + $0x88] sm:$0xff] %v4925
        %4979 = vst [vmem:[%s218 + $0x90] sm:$0xff] %v4927
        %4980 = vst [vmem:[%s218 + $0x98] sm:$0xff] %v4929
        %4981 = vst [vmem:[%s218 + $0xa0] sm:$0xff] %v4933
        %4982 = vst [vmem:[%s218 + $0xa8] sm:$0xff] %v4935
        %4983 = vst [vmem:[%s218 + $0xb0] sm:$0xff] %v4937
        %4984 = vst [vmem:[%s218 + $0xb8] sm:$0xff] %v4939
        %4985 = vst [vmem:[%s218 + $0xc0] sm:$0xff] %v4943
        %4986 = vst [vmem:[%s218 + $0xc8] sm:$0xff] %v4945
        %4987 = vst [vmem:[%s218 + $0xd0] sm:$0xff] %v4947
        %4988 = vst [vmem:[%s218 + $0xd8] sm:$0xff] %v4949
        %4989 = vst [vmem:[%s218 + $0xe0] sm:$0xff] %v4953
        %4990 = vst [vmem:[%s218 + $0xe8] sm:$0xff] %v4955
        %4991 = vst [vmem:[%s218 + $0xf0] sm:$0xff] %v4957
        %4992 = vst [vmem:[%s218 + $0xf8] sm:$0xff] %v4959
        %s4993 = sand.u32 %s97, 1
        %s4994 = scalar_lea.sflag [#allocation4], %s4993
        %s4995 = sand.u32 %s97, 1
        %s4996 = smul.addr %s4995, 256
        %s4997 = scalar_lea.vmem [#allocation8], %s4996
        // Predicated region
        $region45: #{tpu_custom_call.1} parent=31 // pred_check
          %p4998 = pneg %p107
        $region46: #{tpu_custom_call.1} parent=31 // pred_check_branch
          %5000 = sbr.rel (%p4998) target = $region48
        $region47: #{tpu_custom_call.1} parent=31 // pred_region
          %s5001 = smul.u32 16, %s21
          %s5003 = ssub.s32 4096, 4096
          %5004 = vsyncadd %s4994, %s5003
          %s5005 = smul.addr %s5001, 2
          %s5006 = smul.addr %s5005, 128
          %s5007 = scalar_lea.hbm %s3, %s5006
          %s5008 = sshll.u32 %s4997, 4
          %s5009 = int_to_ptr.vmem [resolvable:$true] %s5008
          %5014 = dma.vmem_to_hbm [thread:$0]  %s5009, 4096, %s5007, %s4994, 256, 256, 16
        $region48: #{tpu_custom_call.1} parent=31 // pred_fallthru
          _
      $region32: #{tpu_custom_call.1} parent=5 // pred_fallthru
        _
      %p5015 = scmp.le.s32.totalorder 2, %s16
      // Predicated region
      $region49: #{tpu_custom_call.1} parent=5 // pred_check
        %p5016 = pneg %p5015
      $region50: #{tpu_custom_call.1} parent=5 // pred_check_branch
        %5018 = sbr.rel (%p5016) target = $region52
      $region51: #{tpu_custom_call.1} parent=5 // pred_region
        %s5019 = ssub.s32 %s16, 2
        // Predicated region
        $region53: #{tpu_custom_call.1} parent=51 // pred_check
          %p5020 = pneg %p113
        $region54: #{tpu_custom_call.1} parent=51 // pred_check_branch
          %5022 = sbr.rel (%p5020) target = $region56
        $region55: #{tpu_custom_call.1} parent=51 // pred_region
          %s5023 = sand.u32 %s98, 1
          %s5024 = scalar_lea.sflag [#allocation4], %s5023
          %s5025 = sand.u32 %s98, 1
          %s5026 = smul.addr %s5025, 256
          %s5027 = scalar_lea.vmem [#allocation8], %s5026
          %5028 = dma.done %s5024, 4096
        $region56: #{tpu_custom_call.1} parent=51 // pred_fallthru
          _
      $region52: #{tpu_custom_call.1} parent=5 // pred_fallthru
        _
    $region6: #{tpu_custom_call.1} parent=1 // loop_footer
      %s20 = sadd.s32 1, %s16
    $region7: #{tpu_custom_call.1} parent=1 // loop_footer_branch
      %15 = sbr.rel target = $region3
    $region8: #{tpu_custom_call.1} parent=1 // loop_exit
      _
    %5029 = vsyncpa [#allocation3], 1
    %s5030 = scalar_lea.sflag [#allocation3], 1
    %5031 = vsyncpa %s5030, 1
    %5032 = vsyncpa [#allocation6], 1
    %5033 = vsyncpa [#allocation4], 1
    %s5034 = scalar_lea.sflag [#allocation4], 1
    %5035 = vsyncpa %s5034, 1

</llo_original>
